<compile_context>
chip_gen: v7x
topology: tpu7x:2x2x1
jax: 0.10.0
libtpu: 0.0.40
codegen_flags: <defaults>
</compile_context>

<pallas_src>
import jax
import jax.numpy as jnp
from jax import lax
from jax.experimental import pallas as pl
from jax.experimental.pallas import tpu as pltpu

# ----------------------------- model dimensions ------------------------------
N = 2            # batch
C = 4            # input channels
H = W = 16       # spatial
K = 3            # conv kernel size
F = 32           # feature_extractor output dim (stand-in for ResNet50Fc's 2048)
BOTTLENECK = 256 # CLS bottleneck dim == AdversarialNetwork input dim
NUM_CLASSES = 8  # len(source_classes)
D_HIDDEN = 1024  # AdversarialNetwork hidden width
HW = H * W

# ---------------------------- TPU alignment padding ---------------------------
CKK = C * K * K  # 36
CKK_PAD = 128    # im2col contraction dim -> one full lane width
F_PAD = 128      # feature dim -> one full lane width
M_PAD = 8        # batch rows 2 -> one full sublane (extra rows are zero)

OUT_LANES = 128                  # single lane-dense packed output tile
_Y0, _YS0, _D0 = 0, NUM_CLASSES, 2 * NUM_CLASSES   # lane offsets in packed out
SMALL_ROWS = 8                   # packed small-param buffer = one (8,1024) tile
# rows: 0=conv_b 1=bn_b 2=fc_b(+d_b3 @lane 8) 3=d_b1 4=d_b2 5=d_w3^T 6=scale1 7=scale2


def _weights_to_bf16(w):
    """Dequant-storage -> MXU dtype.  bf16 storage: no-op.  int8 storage: widen
    via f32 (sitofp) then narrow to bf16 -- MXU always sees bf16 x bf16."""
    if w.dtype == jnp.bfloat16:
        return w
    return w.astype(jnp.float32).astype(jnp.bfloat16)


# --------------------------------- kernel ------------------------------------
def totalnet_kernel(
    patches_ref,        # (N*HW, CKK_PAD) bf16
    conv_w_ref,         # (CKK_PAD, F_PAD) bf16
    bn_w_ref,           # (F_PAD, BOTTLENECK) f32
    fc_w_ref,           # (BOTTLENECK, NUM_CLASSES) f32
    d_w1_hbm,           # (BOTTLENECK, D_HIDDEN) int8|bf16 in HBM (manual DMA)
    d_w2_hbm,           # (D_HIDDEN, D_HIDDEN)   int8|bf16 in HBM (manual DMA)
    small_ref,          # (SMALL_ROWS, D_HIDDEN) f32 packed biases/d_w3/scales
    out_ref,            # (M_PAD, OUT_LANES) f32 packed [logits | softmax | d]
    w1_vmem, w2_vmem, dma_sems,   # scratch: weight buffers + DMA semaphores
):
    # Kick off the discriminator-weight DMAs immediately so the fetch overlaps
    # the feature-extractor / classifier compute below.
    cp1 = pltpu.make_async_copy(d_w1_hbm, w1_vmem, dma_sems.at[0])
    cp2 = pltpu.make_async_copy(d_w2_hbm, w2_vmem, dma_sems.at[1])
    cp1.start()
    cp2.start()

    # ---- unpack the single small-parameter tile (static slices, tiny)
    conv_b = small_ref[0:1, 0:F_PAD]
    bn_b   = small_ref[1:2, 0:BOTTLENECK]
    fc_b   = small_ref[2:3, 0:NUM_CLASSES]
    d_b3   = small_ref[2:3, NUM_CLASSES:NUM_CLASSES + 1]
    d_b1   = small_ref[3:4, :]
    d_b2   = small_ref[4:5, :]
    d_w3t  = small_ref[5:6, :]
    s1     = small_ref[6:7, :]
    s2     = small_ref[7:8, :]

    # ---- feature_extractor: conv3x3 (im2col, bf16 x bf16 -> f32 MXU) + ReLU
    conv = jnp.dot(patches_ref[...], conv_w_ref[...],
                   preferred_element_type=jnp.float32) + conv_b
    conv = jnp.maximum(conv, 0.0)                                # (N*HW, F_PAD)

    # Global average pool folded into an MXU matmul against a pooling matrix
    # built from iota (no extra input DMA).  Rows >= N are all-zero, which also
    # pads the batch dim to M_PAD.
    rows = lax.broadcasted_iota(jnp.int32, (M_PAD, N * HW), 0)
    cols = lax.broadcasted_iota(jnp.int32, (M_PAD, N * HW), 1)
    pool_mask = (cols >= rows * HW) & (cols < (rows + 1) * HW)
    pool = jnp.where(pool_mask, jnp.float32(1.0 / HW), jnp.float32(0.0))
    f = jnp.dot(pool, conv, preferred_element_type=jnp.float32)  # (M_PAD, F_PAD)
    # NOTE: padded batch rows N..M_PAD-1 carry bias-only values through the
    # rest of the kernel (exp/sigmoid included).  They are sliced off in the
    # wrapper and must never be included in any reduction across rows/lanes.

    # ---- classifier (CLS): bottleneck -> ReLU -> fc -> softmax
    bn = jnp.dot(f, bn_w_ref[...], preferred_element_type=jnp.float32) + bn_b  # "_"
    h = jnp.maximum(bn, 0.0)                                                    # "__"
    logits = jnp.dot(h, fc_w_ref[...],
                     preferred_element_type=jnp.float32) + fc_b                 # y
    m = jnp.max(logits, axis=-1, keepdims=True)
    e = jnp.exp(logits - m)
    y_sm = e / jnp.sum(e, axis=-1, keepdims=True)   # exact divide (off DMA path)

    # ---- domain_discriminator: GRL identity in fwd; Dropout = identity (eval)
    # Weights arrive int8 (v5e/v6e) or bf16 (v7x); MXU matmuls are bf16 x bf16,
    # per-output-channel dequant scale applied to the f32 accumulate.
    cp1.wait()
    h1 = jnp.maximum(
        jnp.dot(bn.astype(jnp.bfloat16), _weights_to_bf16(w1_vmem[...]),
                preferred_element_type=jnp.float32) * s1 + d_b1, 0.0)
    cp2.wait()
    h2 = jnp.maximum(
        jnp.dot(h1.astype(jnp.bfloat16), _weights_to_bf16(w2_vmem[...]),
                preferred_element_type=jnp.float32) * s2 + d_b2, 0.0)
    # (M_PAD, 1024) x (1024, 1): VPU multiply + lane reduction instead of a
    # 1-output-lane MXU matmul.
    d_logit = jnp.sum(h2 * d_w3t, axis=-1, keepdims=True) + d_b3
    d = pl.reciprocal(1.0 + jnp.exp(-d_logit), approx=True)

    # ---- single lane-dense packed output tile -> one writeback DMA
    out_ref[...] = jnp.zeros((M_PAD, OUT_LANES), jnp.float32)
    out_ref[:, _Y0:_Y0 + NUM_CLASSES] = logits
    out_ref[:, _YS0:_YS0 + NUM_CLASSES] = y_sm
    out_ref[:, _D0:_D0 + 1] = d


# --------------------------------- glue ---------------------------------------
def im2col(x):
    """x: (N, C, H, W) NCHW, pad=1, stride=1 -> (N*H*W, C*K*K); C major, (kh,kw) minor."""
    xp = jnp.pad(x, ((0, 0), (0, 0), (1, 1), (1, 1)))
    cols = []
    for dh in range(K):
        for dw in range(K):
            cols.append(xp[:, :, dh:dh + H, dw:dw + W])    # (N, C, H, W)
    p = jnp.stack(cols, axis=2)                             # (N, C, K*K, H, W)
    p = p.transpose(0, 3, 4, 1, 2).reshape(N * H * W, C * K * K)
    return p


def init_params(key):
    ks = jax.random.split(key, 6)

    def lin(k, i, o, scale=0.05):
        return scale * jax.random.normal(k, (i, o), jnp.float32)

    conv_w = 0.1 * jax.random.normal(ks[0], (F, C, K, K), jnp.float32)  # torch OIHW
    return dict(
        conv_w=conv_w.reshape(F, C * K * K).T,                  # (C*K*K, F)
        conv_b=jnp.full((1, F), 0.01, jnp.float32),
        bn_w=lin(ks[1], F, BOTTLENECK),
        bn_b=jnp.zeros((1, BOTTLENECK), jnp.float32),
        fc_w=lin(ks[2], BOTTLENECK, NUM_CLASSES),
        fc_b=jnp.zeros((1, NUM_CLASSES), jnp.float32),
        d_w1=lin(ks[3], BOTTLENECK, D_HIDDEN),
        d_b1=jnp.zeros((1, D_HIDDEN), jnp.float32),
        d_w2=lin(ks[4], D_HIDDEN, D_HIDDEN),
        d_b2=jnp.zeros((1, D_HIDDEN), jnp.float32),
        d_w3=lin(ks[5], D_HIDDEN, 1),
        d_b3=jnp.zeros((1, 1), jnp.float32),
    )


def _discriminator_weight_dtype():
    """int8 storage on v5e/v6e (halves the exposed weight DMA; MXU still sees
    bf16), bf16 on v7x (DMA already hidden) / unknown devices."""
    try:
        kind = jax.devices()[0].device_kind.lower()
    except Exception:
        return jnp.bfloat16
    if any(t in kind for t in ("v7", "7x", "ironwood")):
        return jnp.bfloat16
    return jnp.int8


def _quantize_weight(w, dtype):
    """Returns (storage_weight, per-output-channel f32 scale)."""
    if dtype == jnp.int8:
        scale = jnp.maximum(jnp.max(jnp.abs(w), axis=0, keepdims=True), 1e-12) / 127.0
        q = jnp.clip(jnp.round(w / scale), -127.0, 127.0).astype(jnp.int8)
        return q, scale.astype(jnp.float32)
    return w.astype(jnp.bfloat16), jnp.ones((1, w.shape[1]), jnp.float32)


def prepare_params(p, disc_dtype):
    """One-time (hoisted) parameter preprocessing: pads, casts, quantization,
    and packing of all small vectors into a single (8, 1024) f32 tile."""
    conv_w = jnp.pad(p["conv_w"],
                     ((0, CKK_PAD - CKK), (0, F_PAD - F))).astype(jnp.bfloat16)
    bn_w = jnp.pad(p["bn_w"], ((0, F_PAD - F), (0, 0)))
    d_w1, s1 = _quantize_weight(p["d_w1"], disc_dtype)
    d_w2, s2 = _quantize_weight(p["d_w2"], disc_dtype)

    small = jnp.zeros((SMALL_ROWS, D_HIDDEN), jnp.float32)
    small = small.at[0, :F].set(p["conv_b"][0])          # padded feature lanes stay 0
    small = small.at[1, :BOTTLENECK].set(p["bn_b"][0])
    small = small.at[2, :NUM_CLASSES].set(p["fc_b"][0])
    small = small.at[2, NUM_CLASSES].set(p["d_b3"][0, 0])
    small = small.at[3, :].set(p["d_b1"][0])
    small = small.at[4, :].set(p["d_b2"][0])
    small = small.at[5, :].set(p["d_w3"][:, 0])
    small = small.at[6, :].set(s1[0])
    small = small.at[7, :].set(s2[0])

    return dict(conv_w=conv_w, bn_w=bn_w, fc_w=p["fc_w"],
                d_w1=d_w1, d_w2=d_w2, small=small)


@jax.jit
def totalnet_forward(x, prep):
    # Per-call work is only the per-input im2col + bf16 cast / lane pad.
    patches = jnp.pad(im2col(x).astype(jnp.bfloat16),
                      ((0, 0), (0, CKK_PAD - CKK)))
    disc_dtype = prep["d_w1"].dtype

    vmem = pl.BlockSpec(memory_space=pltpu.MemorySpace.VMEM)
    hbm = pl.BlockSpec(memory_space=pl.ANY)   # manual DMA inside the kernel

    packed = pl.pallas_call(
        totalnet_kernel,
        out_shape=jax.ShapeDtypeStruct((M_PAD, OUT_LANES), jnp.float32),
        in_specs=[vmem, vmem, vmem, vmem, hbm, hbm, vmem],
        out_specs=vmem,
        scratch_shapes=[pltpu.VMEM((BOTTLENECK, D_HIDDEN), disc_dtype),
                        pltpu.VMEM((D_HIDDEN, D_HIDDEN), disc_dtype),
                        pltpu.SemaphoreType.DMA((2,))],
        compiler_params=pltpu.CompilerParams(
            vmem_limit_bytes=16 * 1024 * 1024),   # v7x-legal; working set << 16 MiB
    )(patches, prep["conv_w"], prep["bn_w"], prep["fc_w"],
      prep["d_w1"], prep["d_w2"], prep["small"])

    y = packed[:N, _Y0:_Y0 + NUM_CLASSES]
    y_ = packed[:N, _YS0:_YS0 + NUM_CLASSES]
    d = packed[:N, _D0:_D0 + 1]
    # TODO(synk): `d_` is undefined in the original PyTorch forward; return d twice.
    return y, y_, d, d


# ---------------------------- pure-JAX reference ------------------------------
def totalnet_ref(x, p, prep):
    # Mirror the kernel's bf16 patch/conv rounding and its (quantized or bf16)
    # discriminator weights so the comparison checks the kernel, not the quant.
    patches = im2col(x).astype(jnp.bfloat16).astype(jnp.float32)
    conv_w = p["conv_w"].astype(jnp.bfloat16).astype(jnp.float32)
    conv = jnp.maximum(patches @ conv_w + p["conv_b"], 0.0)
    f = conv.reshape(N, HW, F).mean(axis=1)
    bn = f @ p["bn_w"] + p["bn_b"]
    h = jnp.maximum(bn, 0.0)
    logits = h @ p["fc_w"] + p["fc_b"]
    y_sm = jax.nn.softmax(logits, axis=-1)
    s1 = prep["small"][6:7, :]
    s2 = prep["small"][7:8, :]
    w1 = prep["d_w1"].astype(jnp.float32) * s1
    w2 = prep["d_w2"].astype(jnp.float32) * s2
    h1 = jnp.maximum(bn @ w1 + p["d_b1"], 0.0)
    h2 = jnp.maximum(h1 @ w2 + p["d_b2"], 0.0)
    d = jax.nn.sigmoid(h2 @ p["d_w3"] + p["d_b3"])
    return logits, y_sm, d, d


# ----------------------------------- main -------------------------------------
if __name__ == "__main__":
    key = jax.random.PRNGKey(0)
    kx, kp = jax.random.split(key)
    x = jax.random.normal(kx, (N, C, H, W), jnp.float32)   # NCHW, like PyTorch
    raw = init_params(kp)

    # Hoisted: all parameter preprocessing happens exactly once, outside the
    # jitted per-call forward.
    disc_dtype = _discriminator_weight_dtype()
    prep = prepare_params(raw, disc_dtype)

    y, y_, d, d_ = totalnet_forward(x, prep)
    jax.block_until_ready((y, y_, d, d_))

    ry, ry_, rd, _rd = totalnet_ref(x, raw, prep)
    assert y.shape == (N, NUM_CLASSES) and y_.shape == (N, NUM_CLASSES) and d.shape == (N, 1)
    assert jnp.allclose(y, ry, atol=1e-3, rtol=1e-3)
    assert jnp.allclose(y_, ry_, atol=1e-3, rtol=1e-3)
    # discriminator uses bf16 activations (+ int8 weight storage on v5e/v6e) and
    # an EUP approx reciprocal in the sigmoid.
    assert jnp.allclose(d, rd, atol=1e-2, rtol=1e-2)

    print("KERNEL_OK")
</pallas_src>

<mosaic_0001>
module attributes {stable_mosaic.version = 11 : i64} {
  func.func @totalnet_kernel(%arg0: memref<512x128xbf16, #tpu.memory_space<vmem>>, %arg1: memref<128x128xbf16, #tpu.memory_space<vmem>>, %arg2: memref<128x256xf32, #tpu.memory_space<vmem>>, %arg3: memref<256x8xf32, #tpu.memory_space<vmem>>, %arg4: memref<256x1024xi8, #tpu.memory_space<any>>, %arg5: memref<1024x1024xi8, #tpu.memory_space<any>>, %arg6: memref<8x1024xf32, #tpu.memory_space<vmem>>, %arg7: memref<8x128xf32, #tpu.memory_space<vmem>>, %arg8: memref<256x1024xi8, #tpu.memory_space<vmem>>, %arg9: memref<1024x1024xi8, #tpu.memory_space<vmem>>, %arg10: memref<2x!tpu.dma_semaphore, #tpu.memory_space<semaphore_mem>>) attributes {dimension_semantics = [], scalar_prefetch = 0 : i64, scratch_operands = 3 : i64, tpu.core_type = #tpu.core_type<tc>} {
    %c0_i32 = arith.constant 0 : i32
    %0 = tpu.memref_slice %arg10[%c0_i32] : memref<2x!tpu.dma_semaphore, #tpu.memory_space<semaphore_mem>> -> memref<1x!tpu.dma_semaphore, #tpu.memory_space<semaphore_mem>>
    %1 = tpu.memref_squeeze %0 : memref<1x!tpu.dma_semaphore, #tpu.memory_space<semaphore_mem>> -> memref<!tpu.dma_semaphore, #tpu.memory_space<semaphore_mem>>
    tpu.enqueue_dma source(%arg4 : memref<256x1024xi8, #tpu.memory_space<any>>) target(%arg8 : memref<256x1024xi8, #tpu.memory_space<vmem>>) target_semaphore(%1 : memref<!tpu.dma_semaphore, #tpu.memory_space<semaphore_mem>>)
    %c1_i32 = arith.constant 1 : i32
    %2 = tpu.memref_slice %arg10[%c1_i32] : memref<2x!tpu.dma_semaphore, #tpu.memory_space<semaphore_mem>> -> memref<1x!tpu.dma_semaphore, #tpu.memory_space<semaphore_mem>>
    %3 = tpu.memref_squeeze %2 : memref<1x!tpu.dma_semaphore, #tpu.memory_space<semaphore_mem>> -> memref<!tpu.dma_semaphore, #tpu.memory_space<semaphore_mem>>
    tpu.enqueue_dma source(%arg5 : memref<1024x1024xi8, #tpu.memory_space<any>>) target(%arg9 : memref<1024x1024xi8, #tpu.memory_space<vmem>>) target_semaphore(%3 : memref<!tpu.dma_semaphore, #tpu.memory_space<semaphore_mem>>)
    %c0 = arith.constant 0 : index
    %c0_0 = arith.constant 0 : index
    %4 = vector.load %arg6[%c0, %c0_0] : memref<8x1024xf32, #tpu.memory_space<vmem>>, vector<1x128xf32>
    %c1 = arith.constant 1 : index
    %c0_1 = arith.constant 0 : index
    %5 = vector.load %arg6[%c1, %c0_1] : memref<8x1024xf32, #tpu.memory_space<vmem>>, vector<1x256xf32>
    %c2 = arith.constant 2 : index
    %c0_2 = arith.constant 0 : index
    %6 = vector.load %arg6[%c2, %c0_2] : memref<8x1024xf32, #tpu.memory_space<vmem>>, vector<1x8xf32>
    %c2_3 = arith.constant 2 : index
    %c8 = arith.constant 8 : index
    %7 = vector.load %arg6[%c2_3, %c8] : memref<8x1024xf32, #tpu.memory_space<vmem>>, vector<1x1xf32>
    %c3 = arith.constant 3 : index
    %c0_4 = arith.constant 0 : index
    %8 = vector.load %arg6[%c3, %c0_4] : memref<8x1024xf32, #tpu.memory_space<vmem>>, vector<1x1024xf32>
    %c4 = arith.constant 4 : index
    %c0_5 = arith.constant 0 : index
    %9 = vector.load %arg6[%c4, %c0_5] : memref<8x1024xf32, #tpu.memory_space<vmem>>, vector<1x1024xf32>
    %c5 = arith.constant 5 : index
    %c0_6 = arith.constant 0 : index
    %10 = vector.load %arg6[%c5, %c0_6] : memref<8x1024xf32, #tpu.memory_space<vmem>>, vector<1x1024xf32>
    %c6 = arith.constant 6 : index
    %c0_7 = arith.constant 0 : index
    %11 = vector.load %arg6[%c6, %c0_7] : memref<8x1024xf32, #tpu.memory_space<vmem>>, vector<1x1024xf32>
    %c7 = arith.constant 7 : index
    %c0_8 = arith.constant 0 : index
    %12 = vector.load %arg6[%c7, %c0_8] : memref<8x1024xf32, #tpu.memory_space<vmem>>, vector<1x1024xf32>
    %c0_9 = arith.constant 0 : index
    %c0_10 = arith.constant 0 : index
    %13 = vector.load %arg0[%c0_9, %c0_10] : memref<512x128xbf16, #tpu.memory_space<vmem>>, vector<512x128xbf16>
    %c0_11 = arith.constant 0 : index
    %c0_12 = arith.constant 0 : index
    %14 = vector.load %arg1[%c0_11, %c0_12] : memref<128x128xbf16, #tpu.memory_space<vmem>>, vector<128x128xbf16>
    %cst = arith.constant dense<0.000000e+00> : vector<512x128xf32>
    %15 = tpu.matmul %13, %14, %cst {dimension_numbers = #tpu.dot_dimension_numbers<[1], [0], [0], [1], [0, 0, 1, 1], [], []>} : vector<512x128xbf16>, vector<128x128xbf16>, vector<512x128xf32> -> vector<512x128xf32>
    %16 = vector.broadcast %4 : vector<1x128xf32> to vector<512x128xf32>
    %17 = arith.addf %15, %16 : vector<512x128xf32>
    %cst_13 = arith.constant 0.000000e+00 : f32
    %18 = vector.broadcast %cst_13 : f32 to vector<512x128xf32>
    %19 = arith.maximumf %17, %18 : vector<512x128xf32>
    %20 = tpu.iota {dimensions = array<i32: 0>} : vector<8x512xi32>
    %21 = tpu.iota {dimensions = array<i32: 1>} : vector<8x512xi32>
    %c256_i32 = arith.constant 256 : i32
    %22 = vector.broadcast %c256_i32 : i32 to vector<8x512xi32>
    %23 = arith.muli %20, %22 : vector<8x512xi32>
    %24 = arith.cmpi sge, %21, %23 : vector<8x512xi32>
    %c1_i32_14 = arith.constant 1 : i32
    %25 = vector.broadcast %c1_i32_14 : i32 to vector<8x512xi32>
    %26 = arith.addi %20, %25 : vector<8x512xi32>
    %c256_i32_15 = arith.constant 256 : i32
    %27 = vector.broadcast %c256_i32_15 : i32 to vector<8x512xi32>
    %28 = arith.muli %26, %27 : vector<8x512xi32>
    %29 = arith.cmpi slt, %21, %28 : vector<8x512xi32>
    %30 = arith.andi %24, %29 : vector<8x512xi1>
    %cst_16 = arith.constant 3.906250e-03 : f32
    %cst_17 = arith.constant 0.000000e+00 : f32
    %31 = vector.broadcast %cst_16 : f32 to vector<8x512xf32>
    %32 = vector.broadcast %cst_17 : f32 to vector<8x512xf32>
    %33 = arith.select %30, %31, %32 : vector<8x512xi1>, vector<8x512xf32>
    %cst_18 = arith.constant dense<0.000000e+00> : vector<8x128xf32>
    %34 = tpu.matmul %33, %19, %cst_18 {dimension_numbers = #tpu.dot_dimension_numbers<[1], [0], [0], [1], [0, 0, 1, 1], [], []>} : vector<8x512xf32>, vector<512x128xf32>, vector<8x128xf32> -> vector<8x128xf32>
    %c0_19 = arith.constant 0 : index
    %c0_20 = arith.constant 0 : index
    %35 = vector.load %arg2[%c0_19, %c0_20] : memref<128x256xf32, #tpu.memory_space<vmem>>, vector<128x256xf32>
    %cst_21 = arith.constant dense<0.000000e+00> : vector<8x256xf32>
    %36 = tpu.matmul %34, %35, %cst_21 {dimension_numbers = #tpu.dot_dimension_numbers<[1], [0], [0], [1], [0, 0, 1, 1], [], []>} : vector<8x128xf32>, vector<128x256xf32>, vector<8x256xf32> -> vector<8x256xf32>
    %37 = vector.broadcast %5 : vector<1x256xf32> to vector<8x256xf32>
    %38 = arith.addf %36, %37 : vector<8x256xf32>
    %cst_22 = arith.constant 0.000000e+00 : f32
    %39 = vector.broadcast %cst_22 : f32 to vector<8x256xf32>
    %40 = arith.maximumf %38, %39 : vector<8x256xf32>
    %c0_23 = arith.constant 0 : index
    %c0_24 = arith.constant 0 : index
    %41 = vector.load %arg3[%c0_23, %c0_24] : memref<256x8xf32, #tpu.memory_space<vmem>>, vector<256x8xf32>
    %cst_25 = arith.constant dense<0.000000e+00> : vector<8x8xf32>
    %42 = tpu.matmul %40, %41, %cst_25 {dimension_numbers = #tpu.dot_dimension_numbers<[1], [0], [0], [1], [0, 0, 1, 1], [], []>} : vector<8x256xf32>, vector<256x8xf32>, vector<8x8xf32> -> vector<8x8xf32>
    %43 = vector.broadcast %6 : vector<1x8xf32> to vector<8x8xf32>
    %44 = arith.addf %42, %43 : vector<8x8xf32>
    %cst_26 = arith.constant dense<0xFF800000> : vector<8xf32>
    %45 = vector.multi_reduction <maximumf>, %44, %cst_26 [1] : vector<8x8xf32> to vector<8xf32>
    %46 = vector.shape_cast %45 : vector<8xf32> to vector<8x1xf32>
    %47 = vector.broadcast %46 : vector<8x1xf32> to vector<8x8xf32>
    %48 = arith.subf %44, %47 : vector<8x8xf32>
    %49 = math.exp %48 : vector<8x8xf32>
    %cst_27 = arith.constant dense<0.000000e+00> : vector<8xf32>
    %50 = vector.multi_reduction <add>, %49, %cst_27 [1] : vector<8x8xf32> to vector<8xf32>
    %51 = vector.shape_cast %50 : vector<8xf32> to vector<8x1xf32>
    %52 = vector.broadcast %51 : vector<8x1xf32> to vector<8x8xf32>
    %53 = arith.divf %49, %52 : vector<8x8xf32>
    %c0_i32_28 = arith.constant 0 : i32
    %54 = tpu.memref_slice %arg10[%c0_i32_28] : memref<2x!tpu.dma_semaphore, #tpu.memory_space<semaphore_mem>> -> memref<1x!tpu.dma_semaphore, #tpu.memory_space<semaphore_mem>>
    %55 = tpu.memref_squeeze %54 : memref<1x!tpu.dma_semaphore, #tpu.memory_space<semaphore_mem>> -> memref<!tpu.dma_semaphore, #tpu.memory_space<semaphore_mem>>
    tpu.wait_dma2 semaphore(%55 : memref<!tpu.dma_semaphore, #tpu.memory_space<semaphore_mem>>) src(%arg4 : memref<256x1024xi8, #tpu.memory_space<any>>) dst(%arg8 : memref<256x1024xi8, #tpu.memory_space<vmem>>)
    %56 = arith.truncf %38 : vector<8x256xf32> to vector<8x256xbf16>
    %c0_29 = arith.constant 0 : index
    %c0_30 = arith.constant 0 : index
    %57 = vector.load %arg8[%c0_29, %c0_30] : memref<256x1024xi8, #tpu.memory_space<vmem>>, vector<256x1024xi8>
    %58 = arith.sitofp %57 : vector<256x1024xi8> to vector<256x1024xf32>
    %59 = arith.truncf %58 : vector<256x1024xf32> to vector<256x1024xbf16>
    %cst_31 = arith.constant dense<0.000000e+00> : vector<8x1024xf32>
    %60 = tpu.matmul %56, %59, %cst_31 {dimension_numbers = #tpu.dot_dimension_numbers<[1], [0], [0], [1], [0, 0, 1, 1], [], []>} : vector<8x256xbf16>, vector<256x1024xbf16>, vector<8x1024xf32> -> vector<8x1024xf32>
    %61 = vector.broadcast %11 : vector<1x1024xf32> to vector<8x1024xf32>
    %62 = arith.mulf %60, %61 : vector<8x1024xf32>
    %63 = vector.broadcast %8 : vector<1x1024xf32> to vector<8x1024xf32>
    %64 = arith.addf %62, %63 : vector<8x1024xf32>
    %cst_32 = arith.constant 0.000000e+00 : f32
    %65 = vector.broadcast %cst_32 : f32 to vector<8x1024xf32>
    %66 = arith.maximumf %64, %65 : vector<8x1024xf32>
    %c1_i32_33 = arith.constant 1 : i32
    %67 = tpu.memref_slice %arg10[%c1_i32_33] : memref<2x!tpu.dma_semaphore, #tpu.memory_space<semaphore_mem>> -> memref<1x!tpu.dma_semaphore, #tpu.memory_space<semaphore_mem>>
    %68 = tpu.memref_squeeze %67 : memref<1x!tpu.dma_semaphore, #tpu.memory_space<semaphore_mem>> -> memref<!tpu.dma_semaphore, #tpu.memory_space<semaphore_mem>>
    tpu.wait_dma2 semaphore(%68 : memref<!tpu.dma_semaphore, #tpu.memory_space<semaphore_mem>>) src(%arg5 : memref<1024x1024xi8, #tpu.memory_space<any>>) dst(%arg9 : memref<1024x1024xi8, #tpu.memory_space<vmem>>)
    %69 = arith.truncf %66 : vector<8x1024xf32> to vector<8x1024xbf16>
    %c0_34 = arith.constant 0 : index
    %c0_35 = arith.constant 0 : index
    %70 = vector.load %arg9[%c0_34, %c0_35] : memref<1024x1024xi8, #tpu.memory_space<vmem>>, vector<1024x1024xi8>
    %71 = arith.sitofp %70 : vector<1024x1024xi8> to vector<1024x1024xf32>
    %72 = arith.truncf %71 : vector<1024x1024xf32> to vector<1024x1024xbf16>
    %cst_36 = arith.constant dense<0.000000e+00> : vector<8x1024xf32>
    %73 = tpu.matmul %69, %72, %cst_36 {dimension_numbers = #tpu.dot_dimension_numbers<[1], [0], [0], [1], [0, 0, 1, 1], [], []>} : vector<8x1024xbf16>, vector<1024x1024xbf16>, vector<8x1024xf32> -> vector<8x1024xf32>
    %74 = vector.broadcast %12 : vector<1x1024xf32> to vector<8x1024xf32>
    %75 = arith.mulf %73, %74 : vector<8x1024xf32>
    %76 = vector.broadcast %9 : vector<1x1024xf32> to vector<8x1024xf32>
    %77 = arith.addf %75, %76 : vector<8x1024xf32>
    %cst_37 = arith.constant 0.000000e+00 : f32
    %78 = vector.broadcast %cst_37 : f32 to vector<8x1024xf32>
    %79 = arith.maximumf %77, %78 : vector<8x1024xf32>
    %80 = vector.broadcast %10 : vector<1x1024xf32> to vector<8x1024xf32>
    %81 = arith.mulf %79, %80 : vector<8x1024xf32>
    %cst_38 = arith.constant dense<0.000000e+00> : vector<8xf32>
    %82 = vector.multi_reduction <add>, %81, %cst_38 [1] : vector<8x1024xf32> to vector<8xf32>
    %83 = vector.shape_cast %82 : vector<8xf32> to vector<8x1xf32>
    %84 = vector.broadcast %7 : vector<1x1xf32> to vector<8x1xf32>
    %85 = arith.addf %83, %84 : vector<8x1xf32>
    %cst_39 = arith.constant 0.000000e+00 : f32
    %86 = vector.broadcast %cst_39 : f32 to vector<8x1xf32>
    %87 = arith.subf %86, %85 : vector<8x1xf32>
    %88 = math.exp %87 : vector<8x1xf32>
    %cst_40 = arith.constant 1.000000e+00 : f32
    %89 = vector.broadcast %cst_40 : f32 to vector<8x1xf32>
    %90 = arith.addf %89, %88 : vector<8x1xf32>
    %91 = tpu.reciprocal %90 {approx = true} : vector<8x1xf32> -> vector<8x1xf32>
    %cst_41 = arith.constant 0.000000e+00 : f32
    %92 = vector.broadcast %cst_41 : f32 to vector<8x128xf32>
    %c0_42 = arith.constant 0 : index
    %c0_43 = arith.constant 0 : index
    %93 = vector.load %arg7[%c0_42, %c0_43] : memref<8x128xf32, #tpu.memory_space<vmem>>, vector<8x128xf32>
    tpu.vector_store %arg7[%c0_42, %c0_43], %92 {strides = array<i32>} : memref<8x128xf32, #tpu.memory_space<vmem>>, vector<8x128xf32>,
    %c0_44 = arith.constant 0 : index
    %c0_45 = arith.constant 0 : index
    %94 = vector.load %arg7[%c0_44, %c0_45] : memref<8x128xf32, #tpu.memory_space<vmem>>, vector<8x8xf32>
    tpu.vector_store %arg7[%c0_44, %c0_45], %44 {strides = array<i32>} : memref<8x128xf32, #tpu.memory_space<vmem>>, vector<8x8xf32>,
    %c0_46 = arith.constant 0 : index
    %c8_47 = arith.constant 8 : index
    %95 = vector.load %arg7[%c0_46, %c8_47] : memref<8x128xf32, #tpu.memory_space<vmem>>, vector<8x8xf32>
    tpu.vector_store %arg7[%c0_46, %c8_47], %53 {strides = array<i32>} : memref<8x128xf32, #tpu.memory_space<vmem>>, vector<8x8xf32>,
    %c0_48 = arith.constant 0 : index
    %c16 = arith.constant 16 : index
    %96 = vector.load %arg7[%c0_48, %c16] : memref<8x128xf32, #tpu.memory_space<vmem>>, vector<8x1xf32>
    tpu.vector_store %arg7[%c0_48, %c16], %91 {strides = array<i32>} : memref<8x128xf32, #tpu.memory_space<vmem>>, vector<8x1xf32>,
    return
  }
}

</mosaic_0001>

<llo_original>
// kernel: totalnet_forward.1
$region0: #{totalnet_forward.1}
  #allocation0 [shape = 'u32[]', space=smem, size = 0x4, offset = 0x4, fixed_abs, tag = 'smem constant byte address 0x4 - core index']
  #allocation1 [shape = 'u32[144,128]{1,0:T(1,128)}', space=vmem, size = 0x12000, scoped, tag = 'internal scratch']
  #allocation2 [shape = 's8[256,1024]{1,0:T(32,128)(4,1)}', space=vmem, size = 0x40000, scoped, tag = 'scratch operand']
  #allocation3 [shape = 's8[1024,1024]{1,0:T(32,128)(4,1)}', space=vmem, size = 0x100000, scoped, tag = 'scratch operand']
  #allocation4 [shape = 's32[2]{0}', space=sflag, size = 0x8, scoped, tag = 'scratch operand']
  #allocation5 [shape = 's32[]', space=sflag, size = 0x4, offset = 0, fixed_abs, tag = 'sflag constant byte address 0x0 - dummy sync flag']
  #allocation6 [shape = 's32[]', space=sflag, size = 0x4, offset = 0, fixed_abs, tag = 'sflag constant byte address 0x0 - dummy sync flag']
  %s0 = inlined_call_operand.vmem [shape: bf16[512,128], index: 0, kind: input, shape index: {}]
  %s1 = inlined_call_operand.vmem [shape: bf16[128,128], index: 1, kind: input, shape index: {}]
  %s2 = inlined_call_operand.vmem [shape: f32[128,256], index: 2, kind: input, shape index: {}]
  %s3 = inlined_call_operand.vmem [shape: f32[256,8], index: 3, kind: input, shape index: {}]
  %s4 = inlined_call_operand.vmem [shape: s8[256,1024], index: 4, kind: input, shape index: {}]
  %s5 = inlined_call_operand.vmem [shape: s8[1024,1024], index: 5, kind: input, shape index: {}]
  %s6 = inlined_call_operand.vmem [shape: f32[8,1024], index: 6, kind: input, shape index: {}]
  %s7 = inlined_call_operand.vmem [shape: f32[8,128], index: 7, kind: output, shape index: {}]
  %s8 = sld [smem:[#allocation0]]
  $region98: #{totalnet_forward.1} parent=0
    _
  %s10 = ssub.s32 1, %s8
  %s11 = scalar_select 0, %s10, %s8
  // Predicated region
  $region2: #{totalnet_forward.1} parent=0 // pred_check
    _
  $region3: #{totalnet_forward.1} parent=0 // pred_check_branch
    %13 = sbr.rel (0) target = $region5
  $region4: #{totalnet_forward.1} parent=0 // pred_region
    _
  $region5: #{totalnet_forward.1} parent=0 // pred_fallthru
    _
  // Predicated region
  $region6: #{totalnet_forward.1} parent=0 // pred_check
    _
  $region7: #{totalnet_forward.1} parent=0 // pred_check_branch
    %15 = sbr.rel (0) target = $region9
  $region8: #{totalnet_forward.1} parent=0 // pred_region
    _
  $region9: #{totalnet_forward.1} parent=0 // pred_fallthru
    _
  // Predicated region
  $region10: #{totalnet_forward.1} parent=0 // pred_check
    _
  $region11: #{totalnet_forward.1} parent=0 // pred_check_branch
    %17 = sbr.rel (0) target = $region13
  $region12: #{totalnet_forward.1} parent=0 // pred_region
    _
  $region13: #{totalnet_forward.1} parent=0 // pred_fallthru
    _
  // Predicated region
  $region14: #{totalnet_forward.1} parent=0 // pred_check
    _
  $region15: #{totalnet_forward.1} parent=0 // pred_check_branch
    %19 = sbr.rel (0) target = $region17
  $region16: #{totalnet_forward.1} parent=0 // pred_region
    _
  $region17: #{totalnet_forward.1} parent=0 // pred_fallthru
    _
  // Predicated region
  $region18: #{totalnet_forward.1} parent=0 // pred_check
    _
  $region19: #{totalnet_forward.1} parent=0 // pred_check_branch
    %21 = sbr.rel (0) target = $region21
  $region20: #{totalnet_forward.1} parent=0 // pred_region
    _
  $region21: #{totalnet_forward.1} parent=0 // pred_fallthru
    _
  %p24 = scmp.lt.u32.totalorder 512, 8
  %p25 = pneg %p24
  // Predicated region
  $region22: #{totalnet_forward.1} parent=0 // pred_check
    _
  $region23: #{totalnet_forward.1} parent=0 // pred_check_branch
    %27 = sbr.rel (%p24) target = $region25
  $region24: #{totalnet_forward.1} parent=0 // pred_region
    %s42 = sand.u32 512, 7
    %p43 = scmp.eq.s32.totalorder %s42, 0
    // Predicated region
    $region37: #{totalnet_forward.1} parent=24 // pred_check
      %p44 = pneg %p43
    $region38: #{totalnet_forward.1} parent=24 // pred_check_branch
      %46 = sbr.rel (%p44) target = $region40
    $region39: #{totalnet_forward.1} parent=24 // pred_region
      loop: start=0, step=1, limit=1
      $region41: #{totalnet_forward.1} parent=39 // loop_pre_header
        _
      $region42: #{totalnet_forward.1} parent=39 // loop_header
        %s48 = sphi 0, %s52
        %p49 = scmp.ge.s32.totalorder %s48, 1
        %s53 = sphi %s4, %s4
        %s54 = sphi [#allocation2], [#allocation2]
      $region43: #{totalnet_forward.1} parent=39 // loop_header_branch
        %51 = sbr.rel (%p49) target = $region47
      $region44: #{totalnet_forward.1} parent=39 // loop_body
        %v55 = vld [vmem:[%s53] sm:$0xff]
        %56 = vst [vmem:[%s54] sm:$0xff] %v55
        %v57 = vld [vmem:[%s53 + $0x8] sm:$0xff]
        %58 = vst [vmem:[%s54 + $0x8] sm:$0xff] %v57
        %v59 = vld [vmem:[%s53 + $0x10] sm:$0xff]
        %60 = vst [vmem:[%s54 + $0x10] sm:$0xff] %v59
        %v61 = vld [vmem:[%s53 + $0x18] sm:$0xff]
        %62 = vst [vmem:[%s54 + $0x18] sm:$0xff] %v61
        %v63 = vld [vmem:[%s53 + $0x20] sm:$0xff]
        %64 = vst [vmem:[%s54 + $0x20] sm:$0xff] %v63
        %v65 = vld [vmem:[%s53 + $0x28] sm:$0xff]
        %66 = vst [vmem:[%s54 + $0x28] sm:$0xff] %v65
        %v67 = vld [vmem:[%s53 + $0x30] sm:$0xff]
        %68 = vst [vmem:[%s54 + $0x30] sm:$0xff] %v67
        %v69 = vld [vmem:[%s53 + $0x38] sm:$0xff]
        %70 = vst [vmem:[%s54 + $0x38] sm:$0xff] %v69
        %v71 = vld [vmem:[%s53 + $0x40] sm:$0xff]
        %72 = vst [vmem:[%s54 + $0x40] sm:$0xff] %v71
        %v73 = vld [vmem:[%s53 + $0x48] sm:$0xff]
        %74 = vst [vmem:[%s54 + $0x48] sm:$0xff] %v73
        %v75 = vld [vmem:[%s53 + $0x50] sm:$0xff]
        %76 = vst [vmem:[%s54 + $0x50] sm:$0xff] %v75
        %v77 = vld [vmem:[%s53 + $0x58] sm:$0xff]
        %78 = vst [vmem:[%s54 + $0x58] sm:$0xff] %v77
        %v79 = vld [vmem:[%s53 + $0x60] sm:$0xff]
        %80 = vst [vmem:[%s54 + $0x60] sm:$0xff] %v79
        %v81 = vld [vmem:[%s53 + $0x68] sm:$0xff]
        %82 = vst [vmem:[%s54 + $0x68] sm:$0xff] %v81
        %v83 = vld [vmem:[%s53 + $0x70] sm:$0xff]
        %84 = vst [vmem:[%s54 + $0x70] sm:$0xff] %v83
        %v85 = vld [vmem:[%s53 + $0x78] sm:$0xff]
        %86 = vst [vmem:[%s54 + $0x78] sm:$0xff] %v85
        %v87 = vld [vmem:[%s53 + $0x80] sm:$0xff]
        %88 = vst [vmem:[%s54 + $0x80] sm:$0xff] %v87
        %v89 = vld [vmem:[%s53 + $0x88] sm:$0xff]
        %90 = vst [vmem:[%s54 + $0x88] sm:$0xff] %v89
        %v91 = vld [vmem:[%s53 + $0x90] sm:$0xff]
        %92 = vst [vmem:[%s54 + $0x90] sm:$0xff] %v91
        %v93 = vld [vmem:[%s53 + $0x98] sm:$0xff]
        %94 = vst [vmem:[%s54 + $0x98] sm:$0xff] %v93
        %v95 = vld [vmem:[%s53 + $0xa0] sm:$0xff]
        %96 = vst [vmem:[%s54 + $0xa0] sm:$0xff] %v95
        %v97 = vld [vmem:[%s53 + $0xa8] sm:$0xff]
        %98 = vst [vmem:[%s54 + $0xa8] sm:$0xff] %v97
        %v99 = vld [vmem:[%s53 + $0xb0] sm:$0xff]
        %100 = vst [vmem:[%s54 + $0xb0] sm:$0xff] %v99
        %v101 = vld [vmem:[%s53 + $0xb8] sm:$0xff]
        %102 = vst [vmem:[%s54 + $0xb8] sm:$0xff] %v101
        %v103 = vld [vmem:[%s53 + $0xc0] sm:$0xff]
        %104 = vst [vmem:[%s54 + $0xc0] sm:$0xff] %v103
        %v105 = vld [vmem:[%s53 + $0xc8] sm:$0xff]
        %106 = vst [vmem:[%s54 + $0xc8] sm:$0xff] %v105
        %v107 = vld [vmem:[%s53 + $0xd0] sm:$0xff]
        %108 = vst [vmem:[%s54 + $0xd0] sm:$0xff] %v107
        %v109 = vld [vmem:[%s53 + $0xd8] sm:$0xff]
        %110 = vst [vmem:[%s54 + $0xd8] sm:$0xff] %v109
        %v111 = vld [vmem:[%s53 + $0xe0] sm:$0xff]
        %112 = vst [vmem:[%s54 + $0xe0] sm:$0xff] %v111
        %v113 = vld [vmem:[%s53 + $0xe8] sm:$0xff]
        %114 = vst [vmem:[%s54 + $0xe8] sm:$0xff] %v113
        %v115 = vld [vmem:[%s53 + $0xf0] sm:$0xff]
        %116 = vst [vmem:[%s54 + $0xf0] sm:$0xff] %v115
        %v117 = vld [vmem:[%s53 + $0xf8] sm:$0xff]
        %118 = vst [vmem:[%s54 + $0xf8] sm:$0xff] %v117
        %v119 = vld [vmem:[%s53 + $0x100] sm:$0xff]
        %120 = vst [vmem:[%s54 + $0x100] sm:$0xff] %v119
        %v121 = vld [vmem:[%s53 + $0x108] sm:$0xff]
        %122 = vst [vmem:[%s54 + $0x108] sm:$0xff] %v121
        %v123 = vld [vmem:[%s53 + $0x110] sm:$0xff]
        %124 = vst [vmem:[%s54 + $0x110] sm:$0xff] %v123
        %v125 = vld [vmem:[%s53 + $0x118] sm:$0xff]
        %126 = vst [vmem:[%s54 + $0x118] sm:$0xff] %v125
        %v127 = vld [vmem:[%s53 + $0x120] sm:$0xff]
        %128 = vst [vmem:[%s54 + $0x120] sm:$0xff] %v127
        %v129 = vld [vmem:[%s53 + $0x128] sm:$0xff]
        %130 = vst [vmem:[%s54 + $0x128] sm:$0xff] %v129
        %v131 = vld [vmem:[%s53 + $0x130] sm:$0xff]
        %132 = vst [vmem:[%s54 + $0x130] sm:$0xff] %v131
        %v133 = vld [vmem:[%s53 + $0x138] sm:$0xff]
        %134 = vst [vmem:[%s54 + $0x138] sm:$0xff] %v133
        %v135 = vld [vmem:[%s53 + $0x140] sm:$0xff]
        %136 = vst [vmem:[%s54 + $0x140] sm:$0xff] %v135
        %v137 = vld [vmem:[%s53 + $0x148] sm:$0xff]
        %138 = vst [vmem:[%s54 + $0x148] sm:$0xff] %v137
        %v139 = vld [vmem:[%s53 + $0x150] sm:$0xff]
        %140 = vst [vmem:[%s54 + $0x150] sm:$0xff] %v139
        %v141 = vld [vmem:[%s53 + $0x158] sm:$0xff]
        %142 = vst [vmem:[%s54 + $0x158] sm:$0xff] %v141
        %v143 = vld [vmem:[%s53 + $0x160] sm:$0xff]
        %144 = vst [vmem:[%s54 + $0x160] sm:$0xff] %v143
        %v145 = vld [vmem:[%s53 + $0x168] sm:$0xff]
        %146 = vst [vmem:[%s54 + $0x168] sm:$0xff] %v145
        %v147 = vld [vmem:[%s53 + $0x170] sm:$0xff]
        %148 = vst [vmem:[%s54 + $0x170] sm:$0xff] %v147
        %v149 = vld [vmem:[%s53 + $0x178] sm:$0xff]
        %150 = vst [vmem:[%s54 + $0x178] sm:$0xff] %v149
        %v151 = vld [vmem:[%s53 + $0x180] sm:$0xff]
        %152 = vst [vmem:[%s54 + $0x180] sm:$0xff] %v151
        %v153 = vld [vmem:[%s53 + $0x188] sm:$0xff]
        %154 = vst [vmem:[%s54 + $0x188] sm:$0xff] %v153
        %v155 = vld [vmem:[%s53 + $0x190] sm:$0xff]
        %156 = vst [vmem:[%s54 + $0x190] sm:$0xff] %v155
        %v157 = vld [vmem:[%s53 + $0x198] sm:$0xff]
        %158 = vst [vmem:[%s54 + $0x198] sm:$0xff] %v157
        %v159 = vld [vmem:[%s53 + $0x1a0] sm:$0xff]
        %160 = vst [vmem:[%s54 + $0x1a0] sm:$0xff] %v159
        %v161 = vld [vmem:[%s53 + $0x1a8] sm:$0xff]
        %162 = vst [vmem:[%s54 + $0x1a8] sm:$0xff] %v161
        %v163 = vld [vmem:[%s53 + $0x1b0] sm:$0xff]
        %164 = vst [vmem:[%s54 + $0x1b0] sm:$0xff] %v163
        %v165 = vld [vmem:[%s53 + $0x1b8] sm:$0xff]
        %166 = vst [vmem:[%s54 + $0x1b8] sm:$0xff] %v165
        %v167 = vld [vmem:[%s53 + $0x1c0] sm:$0xff]
        %168 = vst [vmem:[%s54 + $0x1c0] sm:$0xff] %v167
        %v169 = vld [vmem:[%s53 + $0x1c8] sm:$0xff]
        %170 = vst [vmem:[%s54 + $0x1c8] sm:$0xff] %v169
        %v171 = vld [vmem:[%s53 + $0x1d0] sm:$0xff]
        %172 = vst [vmem:[%s54 + $0x1d0] sm:$0xff] %v171
        %v173 = vld [vmem:[%s53 + $0x1d8] sm:$0xff]
        %174 = vst [vmem:[%s54 + $0x1d8] sm:$0xff] %v173
        %v175 = vld [vmem:[%s53 + $0x1e0] sm:$0xff]
        %176 = vst [vmem:[%s54 + $0x1e0] sm:$0xff] %v175
        %v177 = vld [vmem:[%s53 + $0x1e8] sm:$0xff]
        %178 = vst [vmem:[%s54 + $0x1e8] sm:$0xff] %v177
        %v179 = vld [vmem:[%s53 + $0x1f0] sm:$0xff]
        %180 = vst [vmem:[%s54 + $0x1f0] sm:$0xff] %v179
        %v181 = vld [vmem:[%s53 + $0x1f8] sm:$0xff]
        %182 = vst [vmem:[%s54 + $0x1f8] sm:$0xff] %v181
      $region45: #{totalnet_forward.1} parent=39 // loop_footer
        %s52 = sadd.s32 1, %s48
      $region46: #{totalnet_forward.1} parent=39 // loop_footer_branch
        %47 = sbr.rel target = $region42
      $region47: #{totalnet_forward.1} parent=39 // loop_exit
        _
    $region40: #{totalnet_forward.1} parent=24 // pred_fallthru
      _
    %p183 = pneg %p43
    // Predicated region
    $region48: #{totalnet_forward.1} parent=24 // pred_check
      _
    $region49: #{totalnet_forward.1} parent=24 // pred_check_branch
      %185 = sbr.rel (%p43) target = $region51
    $region50: #{totalnet_forward.1} parent=24 // pred_region
      %s186 = sand.u32 512, 7
    $region51: #{totalnet_forward.1} parent=24 // pred_fallthru
      _
  $region25: #{totalnet_forward.1} parent=0 // pred_fallthru
    _
  // Predicated region
  $region26: #{totalnet_forward.1} parent=0 // pred_check
    %p28 = pneg %p24
  $region27: #{totalnet_forward.1} parent=0 // pred_check_branch
    %30 = sbr.rel (%p28) target = $region29
  $region28: #{totalnet_forward.1} parent=0 // pred_region
    %s31 = sshllo.u32 0, 512
    loop: start=0, step=1, limit=1
    $region30: #{totalnet_forward.1} parent=28 // loop_pre_header
      _
    $region31: #{totalnet_forward.1} parent=28 // loop_header
      %s33 = sphi 0, %s37
      %p34 = scmp.ge.s32.totalorder %s33, 1
      %s38 = sphi %s4, %s4
      %s39 = sphi [#allocation2], [#allocation2]
    $region32: #{totalnet_forward.1} parent=28 // loop_header_branch
      %36 = sbr.rel (%p34) target = $region36
    $region33: #{totalnet_forward.1} parent=28 // loop_body
      %v40 = vld [vmem:[%s38] sm:%s31]
      %41 = vst [vmem:[%s39] sm:%s31] %v40
    $region34: #{totalnet_forward.1} parent=28 // loop_footer
      %s37 = sadd.s32 1, %s33
    $region35: #{totalnet_forward.1} parent=28 // loop_footer_branch
      %32 = sbr.rel target = $region31
    $region36: #{totalnet_forward.1} parent=28 // loop_exit
      _
  $region29: #{totalnet_forward.1} parent=0 // pred_fallthru
    _
  // Predicated region
  $region52: #{totalnet_forward.1} parent=0 // pred_check
    _
  $region53: #{totalnet_forward.1} parent=0 // pred_check_branch
    %189 = sbr.rel (0) target = $region55
  $region54: #{totalnet_forward.1} parent=0 // pred_region
    %190 = vsyncadd [#allocation4], 8192
  $region55: #{totalnet_forward.1} parent=0 // pred_fallthru
    _
  %s191 = scalar_lea.sflag [#allocation4], 1
  %p193 = scmp.lt.u32.totalorder 2048, 8
  %p194 = pneg %p193
  // Predicated region
  $region56: #{totalnet_forward.1} parent=0 // pred_check
    _
  $region57: #{totalnet_forward.1} parent=0 // pred_check_branch
    %196 = sbr.rel (%p193) target = $region59
  $region58: #{totalnet_forward.1} parent=0 // pred_region
    %s211 = sand.u32 2048, 7
    %p212 = scmp.eq.s32.totalorder %s211, 0
    // Predicated region
    $region71: #{totalnet_forward.1} parent=58 // pred_check
      %p213 = pneg %p212
    $region72: #{totalnet_forward.1} parent=58 // pred_check_branch
      %215 = sbr.rel (%p213) target = $region74
    $region73: #{totalnet_forward.1} parent=58 // pred_region
      loop: start=0, step=1, limit=1
      $region75: #{totalnet_forward.1} parent=73 // loop_pre_header
        _
      $region76: #{totalnet_forward.1} parent=73 // loop_header
        %s217 = sphi 0, %s221
        %p218 = scmp.ge.s32.totalorder %s217, 1
        %s222 = sphi %s5, %s5
        %s223 = sphi [#allocation3], [#allocation3]
      $region77: #{totalnet_forward.1} parent=73 // loop_header_branch
        %220 = sbr.rel (%p218) target = $region81
      $region78: #{totalnet_forward.1} parent=73 // loop_body
        %v224 = vld [vmem:[%s222] sm:$0xff]
        %225 = vst [vmem:[%s223] sm:$0xff] %v224
        %v226 = vld [vmem:[%s222 + $0x8] sm:$0xff]
        %227 = vst [vmem:[%s223 + $0x8] sm:$0xff] %v226
        %v228 = vld [vmem:[%s222 + $0x10] sm:$0xff]
        %229 = vst [vmem:[%s223 + $0x10] sm:$0xff] %v228
        %v230 = vld [vmem:[%s222 + $0x18] sm:$0xff]
        %231 = vst [vmem:[%s223 + $0x18] sm:$0xff] %v230
        %v232 = vld [vmem:[%s222 + $0x20] sm:$0xff]
        %233 = vst [vmem:[%s223 + $0x20] sm:$0xff] %v232
        %v234 = vld [vmem:[%s222 + $0x28] sm:$0xff]
        %235 = vst [vmem:[%s223 + $0x28] sm:$0xff] %v234
        %v236 = vld [vmem:[%s222 + $0x30] sm:$0xff]
        %237 = vst [vmem:[%s223 + $0x30] sm:$0xff] %v236
        %v238 = vld [vmem:[%s222 + $0x38] sm:$0xff]
        %239 = vst [vmem:[%s223 + $0x38] sm:$0xff] %v238
        %v240 = vld [vmem:[%s222 + $0x40] sm:$0xff]
        %241 = vst [vmem:[%s223 + $0x40] sm:$0xff] %v240
        %v242 = vld [vmem:[%s222 + $0x48] sm:$0xff]
        %243 = vst [vmem:[%s223 + $0x48] sm:$0xff] %v242
        %v244 = vld [vmem:[%s222 + $0x50] sm:$0xff]
        %245 = vst [vmem:[%s223 + $0x50] sm:$0xff] %v244
        %v246 = vld [vmem:[%s222 + $0x58] sm:$0xff]
        %247 = vst [vmem:[%s223 + $0x58] sm:$0xff] %v246
        %v248 = vld [vmem:[%s222 + $0x60] sm:$0xff]
        %249 = vst [vmem:[%s223 + $0x60] sm:$0xff] %v248
        %v250 = vld [vmem:[%s222 + $0x68] sm:$0xff]
        %251 = vst [vmem:[%s223 + $0x68] sm:$0xff] %v250
        %v252 = vld [vmem:[%s222 + $0x70] sm:$0xff]
        %253 = vst [vmem:[%s223 + $0x70] sm:$0xff] %v252
        %v254 = vld [vmem:[%s222 + $0x78] sm:$0xff]
        %255 = vst [vmem:[%s223 + $0x78] sm:$0xff] %v254
        %v256 = vld [vmem:[%s222 + $0x80] sm:$0xff]
        %257 = vst [vmem:[%s223 + $0x80] sm:$0xff] %v256
        %v258 = vld [vmem:[%s222 + $0x88] sm:$0xff]
        %259 = vst [vmem:[%s223 + $0x88] sm:$0xff] %v258
        %v260 = vld [vmem:[%s222 + $0x90] sm:$0xff]
        %261 = vst [vmem:[%s223 + $0x90] sm:$0xff] %v260
        %v262 = vld [vmem:[%s222 + $0x98] sm:$0xff]
        %263 = vst [vmem:[%s223 + $0x98] sm:$0xff] %v262
        %v264 = vld [vmem:[%s222 + $0xa0] sm:$0xff]
        %265 = vst [vmem:[%s223 + $0xa0] sm:$0xff] %v264
        %v266 = vld [vmem:[%s222 + $0xa8] sm:$0xff]
        %267 = vst [vmem:[%s223 + $0xa8] sm:$0xff] %v266
        %v268 = vld [vmem:[%s222 + $0xb0] sm:$0xff]
        %269 = vst [vmem:[%s223 + $0xb0] sm:$0xff] %v268
        %v270 = vld [vmem:[%s222 + $0xb8] sm:$0xff]
        %271 = vst [vmem:[%s223 + $0xb8] sm:$0xff] %v270
        %v272 = vld [vmem:[%s222 + $0xc0] sm:$0xff]
        %273 = vst [vmem:[%s223 + $0xc0] sm:$0xff] %v272
        %v274 = vld [vmem:[%s222 + $0xc8] sm:$0xff]
        %275 = vst [vmem:[%s223 + $0xc8] sm:$0xff] %v274
        %v276 = vld [vmem:[%s222 + $0xd0] sm:$0xff]
        %277 = vst [vmem:[%s223 + $0xd0] sm:$0xff] %v276
        %v278 = vld [vmem:[%s222 + $0xd8] sm:$0xff]
        %279 = vst [vmem:[%s223 + $0xd8] sm:$0xff] %v278
        %v280 = vld [vmem:[%s222 + $0xe0] sm:$0xff]
        %281 = vst [vmem:[%s223 + $0xe0] sm:$0xff] %v280
        %v282 = vld [vmem:[%s222 + $0xe8] sm:$0xff]
        %283 = vst [vmem:[%s223 + $0xe8] sm:$0xff] %v282
        %v284 = vld [vmem:[%s222 + $0xf0] sm:$0xff]
        %285 = vst [vmem:[%s223 + $0xf0] sm:$0xff] %v284
        %v286 = vld [vmem:[%s222 + $0xf8] sm:$0xff]
        %287 = vst [vmem:[%s223 + $0xf8] sm:$0xff] %v286
        %v288 = vld [vmem:[%s222 + $0x100] sm:$0xff]
        %289 = vst [vmem:[%s223 + $0x100] sm:$0xff] %v288
        %v290 = vld [vmem:[%s222 + $0x108] sm:$0xff]
        %291 = vst [vmem:[%s223 + $0x108] sm:$0xff] %v290
        %v292 = vld [vmem:[%s222 + $0x110] sm:$0xff]
        %293 = vst [vmem:[%s223 + $0x110] sm:$0xff] %v292
        %v294 = vld [vmem:[%s222 + $0x118] sm:$0xff]
        %295 = vst [vmem:[%s223 + $0x118] sm:$0xff] %v294
        %v296 = vld [vmem:[%s222 + $0x120] sm:$0xff]
        %297 = vst [vmem:[%s223 + $0x120] sm:$0xff] %v296
        %v298 = vld [vmem:[%s222 + $0x128] sm:$0xff]
        %299 = vst [vmem:[%s223 + $0x128] sm:$0xff] %v298
        %v300 = vld [vmem:[%s222 + $0x130] sm:$0xff]
        %301 = vst [vmem:[%s223 + $0x130] sm:$0xff] %v300
        %v302 = vld [vmem:[%s222 + $0x138] sm:$0xff]
        %303 = vst [vmem:[%s223 + $0x138] sm:$0xff] %v302
        %v304 = vld [vmem:[%s222 + $0x140] sm:$0xff]
        %305 = vst [vmem:[%s223 + $0x140] sm:$0xff] %v304
        %v306 = vld [vmem:[%s222 + $0x148] sm:$0xff]
        %307 = vst [vmem:[%s223 + $0x148] sm:$0xff] %v306
        %v308 = vld [vmem:[%s222 + $0x150] sm:$0xff]
        %309 = vst [vmem:[%s223 + $0x150] sm:$0xff] %v308
        %v310 = vld [vmem:[%s222 + $0x158] sm:$0xff]
        %311 = vst [vmem:[%s223 + $0x158] sm:$0xff] %v310
        %v312 = vld [vmem:[%s222 + $0x160] sm:$0xff]
        %313 = vst [vmem:[%s223 + $0x160] sm:$0xff] %v312
        %v314 = vld [vmem:[%s222 + $0x168] sm:$0xff]
        %315 = vst [vmem:[%s223 + $0x168] sm:$0xff] %v314
        %v316 = vld [vmem:[%s222 + $0x170] sm:$0xff]
        %317 = vst [vmem:[%s223 + $0x170] sm:$0xff] %v316
        %v318 = vld [vmem:[%s222 + $0x178] sm:$0xff]
        %319 = vst [vmem:[%s223 + $0x178] sm:$0xff] %v318
        %v320 = vld [vmem:[%s222 + $0x180] sm:$0xff]
        %321 = vst [vmem:[%s223 + $0x180] sm:$0xff] %v320
        %v322 = vld [vmem:[%s222 + $0x188] sm:$0xff]
        %323 = vst [vmem:[%s223 + $0x188] sm:$0xff] %v322
        %v324 = vld [vmem:[%s222 + $0x190] sm:$0xff]
        %325 = vst [vmem:[%s223 + $0x190] sm:$0xff] %v324
        %v326 = vld [vmem:[%s222 + $0x198] sm:$0xff]
        %327 = vst [vmem:[%s223 + $0x198] sm:$0xff] %v326
        %v328 = vld [vmem:[%s222 + $0x1a0] sm:$0xff]
        %329 = vst [vmem:[%s223 + $0x1a0] sm:$0xff] %v328
        %v330 = vld [vmem:[%s222 + $0x1a8] sm:$0xff]
        %331 = vst [vmem:[%s223 + $0x1a8] sm:$0xff] %v330
        %v332 = vld [vmem:[%s222 + $0x1b0] sm:$0xff]
        %333 = vst [vmem:[%s223 + $0x1b0] sm:$0xff] %v332
        %v334 = vld [vmem:[%s222 + $0x1b8] sm:$0xff]
        %335 = vst [vmem:[%s223 + $0x1b8] sm:$0xff] %v334
        %v336 = vld [vmem:[%s222 + $0x1c0] sm:$0xff]
        %337 = vst [vmem:[%s223 + $0x1c0] sm:$0xff] %v336
        %v338 = vld [vmem:[%s222 + $0x1c8] sm:$0xff]
        %339 = vst [vmem:[%s223 + $0x1c8] sm:$0xff] %v338
        %v340 = vld [vmem:[%s222 + $0x1d0] sm:$0xff]
        %341 = vst [vmem:[%s223 + $0x1d0] sm:$0xff] %v340
        %v342 = vld [vmem:[%s222 + $0x1d8] sm:$0xff]
        %343 = vst [vmem:[%s223 + $0x1d8] sm:$0xff] %v342
        %v344 = vld [vmem:[%s222 + $0x1e0] sm:$0xff]
        %345 = vst [vmem:[%s223 + $0x1e0] sm:$0xff] %v344
        %v346 = vld [vmem:[%s222 + $0x1e8] sm:$0xff]
        %347 = vst [vmem:[%s223 + $0x1e8] sm:$0xff] %v346
        %v348 = vld [vmem:[%s222 + $0x1f0] sm:$0xff]
        %349 = vst [vmem:[%s223 + $0x1f0] sm:$0xff] %v348
        %v350 = vld [vmem:[%s222 + $0x1f8] sm:$0xff]
        %351 = vst [vmem:[%s223 + $0x1f8] sm:$0xff] %v350
        %v352 = vld [vmem:[%s222 + $0x200] sm:$0xff]
        %353 = vst [vmem:[%s223 + $0x200] sm:$0xff] %v352
        %v354 = vld [vmem:[%s222 + $0x208] sm:$0xff]
        %355 = vst [vmem:[%s223 + $0x208] sm:$0xff] %v354
        %v356 = vld [vmem:[%s222 + $0x210] sm:$0xff]
        %357 = vst [vmem:[%s223 + $0x210] sm:$0xff] %v356
        %v358 = vld [vmem:[%s222 + $0x218] sm:$0xff]
        %359 = vst [vmem:[%s223 + $0x218] sm:$0xff] %v358
        %v360 = vld [vmem:[%s222 + $0x220] sm:$0xff]
        %361 = vst [vmem:[%s223 + $0x220] sm:$0xff] %v360
        %v362 = vld [vmem:[%s222 + $0x228] sm:$0xff]
        %363 = vst [vmem:[%s223 + $0x228] sm:$0xff] %v362
        %v364 = vld [vmem:[%s222 + $0x230] sm:$0xff]
        %365 = vst [vmem:[%s223 + $0x230] sm:$0xff] %v364
        %v366 = vld [vmem:[%s222 + $0x238] sm:$0xff]
        %367 = vst [vmem:[%s223 + $0x238] sm:$0xff] %v366
        %v368 = vld [vmem:[%s222 + $0x240] sm:$0xff]
        %369 = vst [vmem:[%s223 + $0x240] sm:$0xff] %v368
        %v370 = vld [vmem:[%s222 + $0x248] sm:$0xff]
        %371 = vst [vmem:[%s223 + $0x248] sm:$0xff] %v370
        %v372 = vld [vmem:[%s222 + $0x250] sm:$0xff]
        %373 = vst [vmem:[%s223 + $0x250] sm:$0xff] %v372
        %v374 = vld [vmem:[%s222 + $0x258] sm:$0xff]
        %375 = vst [vmem:[%s223 + $0x258] sm:$0xff] %v374
        %v376 = vld [vmem:[%s222 + $0x260] sm:$0xff]
        %377 = vst [vmem:[%s223 + $0x260] sm:$0xff] %v376
        %v378 = vld [vmem:[%s222 + $0x268] sm:$0xff]
        %379 = vst [vmem:[%s223 + $0x268] sm:$0xff] %v378
        %v380 = vld [vmem:[%s222 + $0x270] sm:$0xff]
        %381 = vst [vmem:[%s223 + $0x270] sm:$0xff] %v380
        %v382 = vld [vmem:[%s222 + $0x278] sm:$0xff]
        %383 = vst [vmem:[%s223 + $0x278] sm:$0xff] %v382
        %v384 = vld [vmem:[%s222 + $0x280] sm:$0xff]
        %385 = vst [vmem:[%s223 + $0x280] sm:$0xff] %v384
        %v386 = vld [vmem:[%s222 + $0x288] sm:$0xff]
        %387 = vst [vmem:[%s223 + $0x288] sm:$0xff] %v386
        %v388 = vld [vmem:[%s222 + $0x290] sm:$0xff]
        %389 = vst [vmem:[%s223 + $0x290] sm:$0xff] %v388
        %v390 = vld [vmem:[%s222 + $0x298] sm:$0xff]
        %391 = vst [vmem:[%s223 + $0x298] sm:$0xff] %v390
        %v392 = vld [vmem:[%s222 + $0x2a0] sm:$0xff]
        %393 = vst [vmem:[%s223 + $0x2a0] sm:$0xff] %v392
        %v394 = vld [vmem:[%s222 + $0x2a8] sm:$0xff]
        %395 = vst [vmem:[%s223 + $0x2a8] sm:$0xff] %v394
        %v396 = vld [vmem:[%s222 + $0x2b0] sm:$0xff]
        %397 = vst [vmem:[%s223 + $0x2b0] sm:$0xff] %v396
        %v398 = vld [vmem:[%s222 + $0x2b8] sm:$0xff]
        %399 = vst [vmem:[%s223 + $0x2b8] sm:$0xff] %v398
        %v400 = vld [vmem:[%s222 + $0x2c0] sm:$0xff]
        %401 = vst [vmem:[%s223 + $0x2c0] sm:$0xff] %v400
        %v402 = vld [vmem:[%s222 + $0x2c8] sm:$0xff]
        %403 = vst [vmem:[%s223 + $0x2c8] sm:$0xff] %v402
        %v404 = vld [vmem:[%s222 + $0x2d0] sm:$0xff]
        %405 = vst [vmem:[%s223 + $0x2d0] sm:$0xff] %v404
        %v406 = vld [vmem:[%s222 + $0x2d8] sm:$0xff]
        %407 = vst [vmem:[%s223 + $0x2d8] sm:$0xff] %v406
        %v408 = vld [vmem:[%s222 + $0x2e0] sm:$0xff]
        %409 = vst [vmem:[%s223 + $0x2e0] sm:$0xff] %v408
        %v410 = vld [vmem:[%s222 + $0x2e8] sm:$0xff]
        %411 = vst [vmem:[%s223 + $0x2e8] sm:$0xff] %v410
        %v412 = vld [vmem:[%s222 + $0x2f0] sm:$0xff]
        %413 = vst [vmem:[%s223 + $0x2f0] sm:$0xff] %v412
        %v414 = vld [vmem:[%s222 + $0x2f8] sm:$0xff]
        %415 = vst [vmem:[%s223 + $0x2f8] sm:$0xff] %v414
        %v416 = vld [vmem:[%s222 + $0x300] sm:$0xff]
        %417 = vst [vmem:[%s223 + $0x300] sm:$0xff] %v416
        %v418 = vld [vmem:[%s222 + $0x308] sm:$0xff]
        %419 = vst [vmem:[%s223 + $0x308] sm:$0xff] %v418
        %v420 = vld [vmem:[%s222 + $0x310] sm:$0xff]
        %421 = vst [vmem:[%s223 + $0x310] sm:$0xff] %v420
        %v422 = vld [vmem:[%s222 + $0x318] sm:$0xff]
        %423 = vst [vmem:[%s223 + $0x318] sm:$0xff] %v422
        %v424 = vld [vmem:[%s222 + $0x320] sm:$0xff]
        %425 = vst [vmem:[%s223 + $0x320] sm:$0xff] %v424
        %v426 = vld [vmem:[%s222 + $0x328] sm:$0xff]
        %427 = vst [vmem:[%s223 + $0x328] sm:$0xff] %v426
        %v428 = vld [vmem:[%s222 + $0x330] sm:$0xff]
        %429 = vst [vmem:[%s223 + $0x330] sm:$0xff] %v428
        %v430 = vld [vmem:[%s222 + $0x338] sm:$0xff]
        %431 = vst [vmem:[%s223 + $0x338] sm:$0xff] %v430
        %v432 = vld [vmem:[%s222 + $0x340] sm:$0xff]
        %433 = vst [vmem:[%s223 + $0x340] sm:$0xff] %v432
        %v434 = vld [vmem:[%s222 + $0x348] sm:$0xff]
        %435 = vst [vmem:[%s223 + $0x348] sm:$0xff] %v434
        %v436 = vld [vmem:[%s222 + $0x350] sm:$0xff]
        %437 = vst [vmem:[%s223 + $0x350] sm:$0xff] %v436
        %v438 = vld [vmem:[%s222 + $0x358] sm:$0xff]
        %439 = vst [vmem:[%s223 + $0x358] sm:$0xff] %v438
        %v440 = vld [vmem:[%s222 + $0x360] sm:$0xff]
        %441 = vst [vmem:[%s223 + $0x360] sm:$0xff] %v440
        %v442 = vld [vmem:[%s222 + $0x368] sm:$0xff]
        %443 = vst [vmem:[%s223 + $0x368] sm:$0xff] %v442
        %v444 = vld [vmem:[%s222 + $0x370] sm:$0xff]
        %445 = vst [vmem:[%s223 + $0x370] sm:$0xff] %v444
        %v446 = vld [vmem:[%s222 + $0x378] sm:$0xff]
        %447 = vst [vmem:[%s223 + $0x378] sm:$0xff] %v446
        %v448 = vld [vmem:[%s222 + $0x380] sm:$0xff]
        %449 = vst [vmem:[%s223 + $0x380] sm:$0xff] %v448
        %v450 = vld [vmem:[%s222 + $0x388] sm:$0xff]
        %451 = vst [vmem:[%s223 + $0x388] sm:$0xff] %v450
        %v452 = vld [vmem:[%s222 + $0x390] sm:$0xff]
        %453 = vst [vmem:[%s223 + $0x390] sm:$0xff] %v452
        %v454 = vld [vmem:[%s222 + $0x398] sm:$0xff]
        %455 = vst [vmem:[%s223 + $0x398] sm:$0xff] %v454
        %v456 = vld [vmem:[%s222 + $0x3a0] sm:$0xff]
        %457 = vst [vmem:[%s223 + $0x3a0] sm:$0xff] %v456
        %v458 = vld [vmem:[%s222 + $0x3a8] sm:$0xff]
        %459 = vst [vmem:[%s223 + $0x3a8] sm:$0xff] %v458
        %v460 = vld [vmem:[%s222 + $0x3b0] sm:$0xff]
        %461 = vst [vmem:[%s223 + $0x3b0] sm:$0xff] %v460
        %v462 = vld [vmem:[%s222 + $0x3b8] sm:$0xff]
        %463 = vst [vmem:[%s223 + $0x3b8] sm:$0xff] %v462
        %v464 = vld [vmem:[%s222 + $0x3c0] sm:$0xff]
        %465 = vst [vmem:[%s223 + $0x3c0] sm:$0xff] %v464
        %v466 = vld [vmem:[%s222 + $0x3c8] sm:$0xff]
        %467 = vst [vmem:[%s223 + $0x3c8] sm:$0xff] %v466
        %v468 = vld [vmem:[%s222 + $0x3d0] sm:$0xff]
        %469 = vst [vmem:[%s223 + $0x3d0] sm:$0xff] %v468
        %v470 = vld [vmem:[%s222 + $0x3d8] sm:$0xff]
        %471 = vst [vmem:[%s223 + $0x3d8] sm:$0xff] %v470
        %v472 = vld [vmem:[%s222 + $0x3e0] sm:$0xff]
        %473 = vst [vmem:[%s223 + $0x3e0] sm:$0xff] %v472
        %v474 = vld [vmem:[%s222 + $0x3e8] sm:$0xff]
        %475 = vst [vmem:[%s223 + $0x3e8] sm:$0xff] %v474
        %v476 = vld [vmem:[%s222 + $0x3f0] sm:$0xff]
        %477 = vst [vmem:[%s223 + $0x3f0] sm:$0xff] %v476
        %v478 = vld [vmem:[%s222 + $0x3f8] sm:$0xff]
        %479 = vst [vmem:[%s223 + $0x3f8] sm:$0xff] %v478
        %v480 = vld [vmem:[%s222 + $0x400] sm:$0xff]
        %481 = vst [vmem:[%s223 + $0x400] sm:$0xff] %v480
        %v482 = vld [vmem:[%s222 + $0x408] sm:$0xff]
        %483 = vst [vmem:[%s223 + $0x408] sm:$0xff] %v482
        %v484 = vld [vmem:[%s222 + $0x410] sm:$0xff]
        %485 = vst [vmem:[%s223 + $0x410] sm:$0xff] %v484
        %v486 = vld [vmem:[%s222 + $0x418] sm:$0xff]
        %487 = vst [vmem:[%s223 + $0x418] sm:$0xff] %v486
        %v488 = vld [vmem:[%s222 + $0x420] sm:$0xff]
        %489 = vst [vmem:[%s223 + $0x420] sm:$0xff] %v488
        %v490 = vld [vmem:[%s222 + $0x428] sm:$0xff]
        %491 = vst [vmem:[%s223 + $0x428] sm:$0xff] %v490
        %v492 = vld [vmem:[%s222 + $0x430] sm:$0xff]
        %493 = vst [vmem:[%s223 + $0x430] sm:$0xff] %v492
        %v494 = vld [vmem:[%s222 + $0x438] sm:$0xff]
        %495 = vst [vmem:[%s223 + $0x438] sm:$0xff] %v494
        %v496 = vld [vmem:[%s222 + $0x440] sm:$0xff]
        %497 = vst [vmem:[%s223 + $0x440] sm:$0xff] %v496
        %v498 = vld [vmem:[%s222 + $0x448] sm:$0xff]
        %499 = vst [vmem:[%s223 + $0x448] sm:$0xff] %v498
        %v500 = vld [vmem:[%s222 + $0x450] sm:$0xff]
        %501 = vst [vmem:[%s223 + $0x450] sm:$0xff] %v500
        %v502 = vld [vmem:[%s222 + $0x458] sm:$0xff]
        %503 = vst [vmem:[%s223 + $0x458] sm:$0xff] %v502
        %v504 = vld [vmem:[%s222 + $0x460] sm:$0xff]
        %505 = vst [vmem:[%s223 + $0x460] sm:$0xff] %v504
        %v506 = vld [vmem:[%s222 + $0x468] sm:$0xff]
        %507 = vst [vmem:[%s223 + $0x468] sm:$0xff] %v506
        %v508 = vld [vmem:[%s222 + $0x470] sm:$0xff]
        %509 = vst [vmem:[%s223 + $0x470] sm:$0xff] %v508
        %v510 = vld [vmem:[%s222 + $0x478] sm:$0xff]
        %511 = vst [vmem:[%s223 + $0x478] sm:$0xff] %v510
        %v512 = vld [vmem:[%s222 + $0x480] sm:$0xff]
        %513 = vst [vmem:[%s223 + $0x480] sm:$0xff] %v512
        %v514 = vld [vmem:[%s222 + $0x488] sm:$0xff]
        %515 = vst [vmem:[%s223 + $0x488] sm:$0xff] %v514
        %v516 = vld [vmem:[%s222 + $0x490] sm:$0xff]
        %517 = vst [vmem:[%s223 + $0x490] sm:$0xff] %v516
        %v518 = vld [vmem:[%s222 + $0x498] sm:$0xff]
        %519 = vst [vmem:[%s223 + $0x498] sm:$0xff] %v518
        %v520 = vld [vmem:[%s222 + $0x4a0] sm:$0xff]
        %521 = vst [vmem:[%s223 + $0x4a0] sm:$0xff] %v520
        %v522 = vld [vmem:[%s222 + $0x4a8] sm:$0xff]
        %523 = vst [vmem:[%s223 + $0x4a8] sm:$0xff] %v522
        %v524 = vld [vmem:[%s222 + $0x4b0] sm:$0xff]
        %525 = vst [vmem:[%s223 + $0x4b0] sm:$0xff] %v524
        %v526 = vld [vmem:[%s222 + $0x4b8] sm:$0xff]
        %527 = vst [vmem:[%s223 + $0x4b8] sm:$0xff] %v526
        %v528 = vld [vmem:[%s222 + $0x4c0] sm:$0xff]
        %529 = vst [vmem:[%s223 + $0x4c0] sm:$0xff] %v528
        %v530 = vld [vmem:[%s222 + $0x4c8] sm:$0xff]
        %531 = vst [vmem:[%s223 + $0x4c8] sm:$0xff] %v530
        %v532 = vld [vmem:[%s222 + $0x4d0] sm:$0xff]
        %533 = vst [vmem:[%s223 + $0x4d0] sm:$0xff] %v532
        %v534 = vld [vmem:[%s222 + $0x4d8] sm:$0xff]
        %535 = vst [vmem:[%s223 + $0x4d8] sm:$0xff] %v534
        %v536 = vld [vmem:[%s222 + $0x4e0] sm:$0xff]
        %537 = vst [vmem:[%s223 + $0x4e0] sm:$0xff] %v536
        %v538 = vld [vmem:[%s222 + $0x4e8] sm:$0xff]
        %539 = vst [vmem:[%s223 + $0x4e8] sm:$0xff] %v538
        %v540 = vld [vmem:[%s222 + $0x4f0] sm:$0xff]
        %541 = vst [vmem:[%s223 + $0x4f0] sm:$0xff] %v540
        %v542 = vld [vmem:[%s222 + $0x4f8] sm:$0xff]
        %543 = vst [vmem:[%s223 + $0x4f8] sm:$0xff] %v542
        %v544 = vld [vmem:[%s222 + $0x500] sm:$0xff]
        %545 = vst [vmem:[%s223 + $0x500] sm:$0xff] %v544
        %v546 = vld [vmem:[%s222 + $0x508] sm:$0xff]
        %547 = vst [vmem:[%s223 + $0x508] sm:$0xff] %v546
        %v548 = vld [vmem:[%s222 + $0x510] sm:$0xff]
        %549 = vst [vmem:[%s223 + $0x510] sm:$0xff] %v548
        %v550 = vld [vmem:[%s222 + $0x518] sm:$0xff]
        %551 = vst [vmem:[%s223 + $0x518] sm:$0xff] %v550
        %v552 = vld [vmem:[%s222 + $0x520] sm:$0xff]
        %553 = vst [vmem:[%s223 + $0x520] sm:$0xff] %v552
        %v554 = vld [vmem:[%s222 + $0x528] sm:$0xff]
        %555 = vst [vmem:[%s223 + $0x528] sm:$0xff] %v554
        %v556 = vld [vmem:[%s222 + $0x530] sm:$0xff]
        %557 = vst [vmem:[%s223 + $0x530] sm:$0xff] %v556
        %v558 = vld [vmem:[%s222 + $0x538] sm:$0xff]
        %559 = vst [vmem:[%s223 + $0x538] sm:$0xff] %v558
        %v560 = vld [vmem:[%s222 + $0x540] sm:$0xff]
        %561 = vst [vmem:[%s223 + $0x540] sm:$0xff] %v560
        %v562 = vld [vmem:[%s222 + $0x548] sm:$0xff]
        %563 = vst [vmem:[%s223 + $0x548] sm:$0xff] %v562
        %v564 = vld [vmem:[%s222 + $0x550] sm:$0xff]
        %565 = vst [vmem:[%s223 + $0x550] sm:$0xff] %v564
        %v566 = vld [vmem:[%s222 + $0x558] sm:$0xff]
        %567 = vst [vmem:[%s223 + $0x558] sm:$0xff] %v566
        %v568 = vld [vmem:[%s222 + $0x560] sm:$0xff]
        %569 = vst [vmem:[%s223 + $0x560] sm:$0xff] %v568
        %v570 = vld [vmem:[%s222 + $0x568] sm:$0xff]
        %571 = vst [vmem:[%s223 + $0x568] sm:$0xff] %v570
        %v572 = vld [vmem:[%s222 + $0x570] sm:$0xff]
        %573 = vst [vmem:[%s223 + $0x570] sm:$0xff] %v572
        %v574 = vld [vmem:[%s222 + $0x578] sm:$0xff]
        %575 = vst [vmem:[%s223 + $0x578] sm:$0xff] %v574
        %v576 = vld [vmem:[%s222 + $0x580] sm:$0xff]
        %577 = vst [vmem:[%s223 + $0x580] sm:$0xff] %v576
        %v578 = vld [vmem:[%s222 + $0x588] sm:$0xff]
        %579 = vst [vmem:[%s223 + $0x588] sm:$0xff] %v578
        %v580 = vld [vmem:[%s222 + $0x590] sm:$0xff]
        %581 = vst [vmem:[%s223 + $0x590] sm:$0xff] %v580
        %v582 = vld [vmem:[%s222 + $0x598] sm:$0xff]
        %583 = vst [vmem:[%s223 + $0x598] sm:$0xff] %v582
        %v584 = vld [vmem:[%s222 + $0x5a0] sm:$0xff]
        %585 = vst [vmem:[%s223 + $0x5a0] sm:$0xff] %v584
        %v586 = vld [vmem:[%s222 + $0x5a8] sm:$0xff]
        %587 = vst [vmem:[%s223 + $0x5a8] sm:$0xff] %v586
        %v588 = vld [vmem:[%s222 + $0x5b0] sm:$0xff]
        %589 = vst [vmem:[%s223 + $0x5b0] sm:$0xff] %v588
        %v590 = vld [vmem:[%s222 + $0x5b8] sm:$0xff]
        %591 = vst [vmem:[%s223 + $0x5b8] sm:$0xff] %v590
        %v592 = vld [vmem:[%s222 + $0x5c0] sm:$0xff]
        %593 = vst [vmem:[%s223 + $0x5c0] sm:$0xff] %v592
        %v594 = vld [vmem:[%s222 + $0x5c8] sm:$0xff]
        %595 = vst [vmem:[%s223 + $0x5c8] sm:$0xff] %v594
        %v596 = vld [vmem:[%s222 + $0x5d0] sm:$0xff]
        %597 = vst [vmem:[%s223 + $0x5d0] sm:$0xff] %v596
        %v598 = vld [vmem:[%s222 + $0x5d8] sm:$0xff]
        %599 = vst [vmem:[%s223 + $0x5d8] sm:$0xff] %v598
        %v600 = vld [vmem:[%s222 + $0x5e0] sm:$0xff]
        %601 = vst [vmem:[%s223 + $0x5e0] sm:$0xff] %v600
        %v602 = vld [vmem:[%s222 + $0x5e8] sm:$0xff]
        %603 = vst [vmem:[%s223 + $0x5e8] sm:$0xff] %v602
        %v604 = vld [vmem:[%s222 + $0x5f0] sm:$0xff]
        %605 = vst [vmem:[%s223 + $0x5f0] sm:$0xff] %v604
        %v606 = vld [vmem:[%s222 + $0x5f8] sm:$0xff]
        %607 = vst [vmem:[%s223 + $0x5f8] sm:$0xff] %v606
        %v608 = vld [vmem:[%s222 + $0x600] sm:$0xff]
        %609 = vst [vmem:[%s223 + $0x600] sm:$0xff] %v608
        %v610 = vld [vmem:[%s222 + $0x608] sm:$0xff]
        %611 = vst [vmem:[%s223 + $0x608] sm:$0xff] %v610
        %v612 = vld [vmem:[%s222 + $0x610] sm:$0xff]
        %613 = vst [vmem:[%s223 + $0x610] sm:$0xff] %v612
        %v614 = vld [vmem:[%s222 + $0x618] sm:$0xff]
        %615 = vst [vmem:[%s223 + $0x618] sm:$0xff] %v614
        %v616 = vld [vmem:[%s222 + $0x620] sm:$0xff]
        %617 = vst [vmem:[%s223 + $0x620] sm:$0xff] %v616
        %v618 = vld [vmem:[%s222 + $0x628] sm:$0xff]
        %619 = vst [vmem:[%s223 + $0x628] sm:$0xff] %v618
        %v620 = vld [vmem:[%s222 + $0x630] sm:$0xff]
        %621 = vst [vmem:[%s223 + $0x630] sm:$0xff] %v620
        %v622 = vld [vmem:[%s222 + $0x638] sm:$0xff]
        %623 = vst [vmem:[%s223 + $0x638] sm:$0xff] %v622
        %v624 = vld [vmem:[%s222 + $0x640] sm:$0xff]
        %625 = vst [vmem:[%s223 + $0x640] sm:$0xff] %v624
        %v626 = vld [vmem:[%s222 + $0x648] sm:$0xff]
        %627 = vst [vmem:[%s223 + $0x648] sm:$0xff] %v626
        %v628 = vld [vmem:[%s222 + $0x650] sm:$0xff]
        %629 = vst [vmem:[%s223 + $0x650] sm:$0xff] %v628
        %v630 = vld [vmem:[%s222 + $0x658] sm:$0xff]
        %631 = vst [vmem:[%s223 + $0x658] sm:$0xff] %v630
        %v632 = vld [vmem:[%s222 + $0x660] sm:$0xff]
        %633 = vst [vmem:[%s223 + $0x660] sm:$0xff] %v632
        %v634 = vld [vmem:[%s222 + $0x668] sm:$0xff]
        %635 = vst [vmem:[%s223 + $0x668] sm:$0xff] %v634
        %v636 = vld [vmem:[%s222 + $0x670] sm:$0xff]
        %637 = vst [vmem:[%s223 + $0x670] sm:$0xff] %v636
        %v638 = vld [vmem:[%s222 + $0x678] sm:$0xff]
        %639 = vst [vmem:[%s223 + $0x678] sm:$0xff] %v638
        %v640 = vld [vmem:[%s222 + $0x680] sm:$0xff]
        %641 = vst [vmem:[%s223 + $0x680] sm:$0xff] %v640
        %v642 = vld [vmem:[%s222 + $0x688] sm:$0xff]
        %643 = vst [vmem:[%s223 + $0x688] sm:$0xff] %v642
        %v644 = vld [vmem:[%s222 + $0x690] sm:$0xff]
        %645 = vst [vmem:[%s223 + $0x690] sm:$0xff] %v644
        %v646 = vld [vmem:[%s222 + $0x698] sm:$0xff]
        %647 = vst [vmem:[%s223 + $0x698] sm:$0xff] %v646
        %v648 = vld [vmem:[%s222 + $0x6a0] sm:$0xff]
        %649 = vst [vmem:[%s223 + $0x6a0] sm:$0xff] %v648
        %v650 = vld [vmem:[%s222 + $0x6a8] sm:$0xff]
        %651 = vst [vmem:[%s223 + $0x6a8] sm:$0xff] %v650
        %v652 = vld [vmem:[%s222 + $0x6b0] sm:$0xff]
        %653 = vst [vmem:[%s223 + $0x6b0] sm:$0xff] %v652
        %v654 = vld [vmem:[%s222 + $0x6b8] sm:$0xff]
        %655 = vst [vmem:[%s223 + $0x6b8] sm:$0xff] %v654
        %v656 = vld [vmem:[%s222 + $0x6c0] sm:$0xff]
        %657 = vst [vmem:[%s223 + $0x6c0] sm:$0xff] %v656
        %v658 = vld [vmem:[%s222 + $0x6c8] sm:$0xff]
        %659 = vst [vmem:[%s223 + $0x6c8] sm:$0xff] %v658
        %v660 = vld [vmem:[%s222 + $0x6d0] sm:$0xff]
        %661 = vst [vmem:[%s223 + $0x6d0] sm:$0xff] %v660
        %v662 = vld [vmem:[%s222 + $0x6d8] sm:$0xff]
        %663 = vst [vmem:[%s223 + $0x6d8] sm:$0xff] %v662
        %v664 = vld [vmem:[%s222 + $0x6e0] sm:$0xff]
        %665 = vst [vmem:[%s223 + $0x6e0] sm:$0xff] %v664
        %v666 = vld [vmem:[%s222 + $0x6e8] sm:$0xff]
        %667 = vst [vmem:[%s223 + $0x6e8] sm:$0xff] %v666
        %v668 = vld [vmem:[%s222 + $0x6f0] sm:$0xff]
        %669 = vst [vmem:[%s223 + $0x6f0] sm:$0xff] %v668
        %v670 = vld [vmem:[%s222 + $0x6f8] sm:$0xff]
        %671 = vst [vmem:[%s223 + $0x6f8] sm:$0xff] %v670
        %v672 = vld [vmem:[%s222 + $0x700] sm:$0xff]
        %673 = vst [vmem:[%s223 + $0x700] sm:$0xff] %v672
        %v674 = vld [vmem:[%s222 + $0x708] sm:$0xff]
        %675 = vst [vmem:[%s223 + $0x708] sm:$0xff] %v674
        %v676 = vld [vmem:[%s222 + $0x710] sm:$0xff]
        %677 = vst [vmem:[%s223 + $0x710] sm:$0xff] %v676
        %v678 = vld [vmem:[%s222 + $0x718] sm:$0xff]
        %679 = vst [vmem:[%s223 + $0x718] sm:$0xff] %v678
        %v680 = vld [vmem:[%s222 + $0x720] sm:$0xff]
        %681 = vst [vmem:[%s223 + $0x720] sm:$0xff] %v680
        %v682 = vld [vmem:[%s222 + $0x728] sm:$0xff]
        %683 = vst [vmem:[%s223 + $0x728] sm:$0xff] %v682
        %v684 = vld [vmem:[%s222 + $0x730] sm:$0xff]
        %685 = vst [vmem:[%s223 + $0x730] sm:$0xff] %v684
        %v686 = vld [vmem:[%s222 + $0x738] sm:$0xff]
        %687 = vst [vmem:[%s223 + $0x738] sm:$0xff] %v686
        %v688 = vld [vmem:[%s222 + $0x740] sm:$0xff]
        %689 = vst [vmem:[%s223 + $0x740] sm:$0xff] %v688
        %v690 = vld [vmem:[%s222 + $0x748] sm:$0xff]
        %691 = vst [vmem:[%s223 + $0x748] sm:$0xff] %v690
        %v692 = vld [vmem:[%s222 + $0x750] sm:$0xff]
        %693 = vst [vmem:[%s223 + $0x750] sm:$0xff] %v692
        %v694 = vld [vmem:[%s222 + $0x758] sm:$0xff]
        %695 = vst [vmem:[%s223 + $0x758] sm:$0xff] %v694
        %v696 = vld [vmem:[%s222 + $0x760] sm:$0xff]
        %697 = vst [vmem:[%s223 + $0x760] sm:$0xff] %v696
        %v698 = vld [vmem:[%s222 + $0x768] sm:$0xff]
        %699 = vst [vmem:[%s223 + $0x768] sm:$0xff] %v698
        %v700 = vld [vmem:[%s222 + $0x770] sm:$0xff]
        %701 = vst [vmem:[%s223 + $0x770] sm:$0xff] %v700
        %v702 = vld [vmem:[%s222 + $0x778] sm:$0xff]
        %703 = vst [vmem:[%s223 + $0x778] sm:$0xff] %v702
        %v704 = vld [vmem:[%s222 + $0x780] sm:$0xff]
        %705 = vst [vmem:[%s223 + $0x780] sm:$0xff] %v704
        %v706 = vld [vmem:[%s222 + $0x788] sm:$0xff]
        %707 = vst [vmem:[%s223 + $0x788] sm:$0xff] %v706
        %v708 = vld [vmem:[%s222 + $0x790] sm:$0xff]
        %709 = vst [vmem:[%s223 + $0x790] sm:$0xff] %v708
        %v710 = vld [vmem:[%s222 + $0x798] sm:$0xff]
        %711 = vst [vmem:[%s223 + $0x798] sm:$0xff] %v710
        %v712 = vld [vmem:[%s222 + $0x7a0] sm:$0xff]
        %713 = vst [vmem:[%s223 + $0x7a0] sm:$0xff] %v712
        %v714 = vld [vmem:[%s222 + $0x7a8] sm:$0xff]
        %715 = vst [vmem:[%s223 + $0x7a8] sm:$0xff] %v714
        %v716 = vld [vmem:[%s222 + $0x7b0] sm:$0xff]
        %717 = vst [vmem:[%s223 + $0x7b0] sm:$0xff] %v716
        %v718 = vld [vmem:[%s222 + $0x7b8] sm:$0xff]
        %719 = vst [vmem:[%s223 + $0x7b8] sm:$0xff] %v718
        %v720 = vld [vmem:[%s222 + $0x7c0] sm:$0xff]
        %721 = vst [vmem:[%s223 + $0x7c0] sm:$0xff] %v720
        %v722 = vld [vmem:[%s222 + $0x7c8] sm:$0xff]
        %723 = vst [vmem:[%s223 + $0x7c8] sm:$0xff] %v722
        %v724 = vld [vmem:[%s222 + $0x7d0] sm:$0xff]
        %725 = vst [vmem:[%s223 + $0x7d0] sm:$0xff] %v724
        %v726 = vld [vmem:[%s222 + $0x7d8] sm:$0xff]
        %727 = vst [vmem:[%s223 + $0x7d8] sm:$0xff] %v726
        %v728 = vld [vmem:[%s222 + $0x7e0] sm:$0xff]
        %729 = vst [vmem:[%s223 + $0x7e0] sm:$0xff] %v728
        %v730 = vld [vmem:[%s222 + $0x7e8] sm:$0xff]
        %731 = vst [vmem:[%s223 + $0x7e8] sm:$0xff] %v730
        %v732 = vld [vmem:[%s222 + $0x7f0] sm:$0xff]
        %733 = vst [vmem:[%s223 + $0x7f0] sm:$0xff] %v732
        %v734 = vld [vmem:[%s222 + $0x7f8] sm:$0xff]
        %735 = vst [vmem:[%s223 + $0x7f8] sm:$0xff] %v734
      $region79: #{totalnet_forward.1} parent=73 // loop_footer
        %s221 = sadd.s32 1, %s217
      $region80: #{totalnet_forward.1} parent=73 // loop_footer_branch
        %216 = sbr.rel target = $region76
      $region81: #{totalnet_forward.1} parent=73 // loop_exit
        _
    $region74: #{totalnet_forward.1} parent=58 // pred_fallthru
      _
    %p736 = pneg %p212
    // Predicated region
    $region82: #{totalnet_forward.1} parent=58 // pred_check
      _
    $region83: #{totalnet_forward.1} parent=58 // pred_check_branch
      %738 = sbr.rel (%p212) target = $region85
    $region84: #{totalnet_forward.1} parent=58 // pred_region
      %s739 = sand.u32 2048, 7
    $region85: #{totalnet_forward.1} parent=58 // pred_fallthru
      _
  $region59: #{totalnet_forward.1} parent=0 // pred_fallthru
    _
  // Predicated region
  $region60: #{totalnet_forward.1} parent=0 // pred_check
    %p197 = pneg %p193
  $region61: #{totalnet_forward.1} parent=0 // pred_check_branch
    %199 = sbr.rel (%p197) target = $region63
  $region62: #{totalnet_forward.1} parent=0 // pred_region
    %s200 = sshllo.u32 0, 2048
    loop: start=0, step=1, limit=1
    $region64: #{totalnet_forward.1} parent=62 // loop_pre_header
      _
    $region65: #{totalnet_forward.1} parent=62 // loop_header
      %s202 = sphi 0, %s206
      %p203 = scmp.ge.s32.totalorder %s202, 1
      %s207 = sphi %s5, %s5
      %s208 = sphi [#allocation3], [#allocation3]
    $region66: #{totalnet_forward.1} parent=62 // loop_header_branch
      %205 = sbr.rel (%p203) target = $region70
    $region67: #{totalnet_forward.1} parent=62 // loop_body
      %v209 = vld [vmem:[%s207] sm:%s200]
      %210 = vst [vmem:[%s208] sm:%s200] %v209
    $region68: #{totalnet_forward.1} parent=62 // loop_footer
      %s206 = sadd.s32 1, %s202
    $region69: #{totalnet_forward.1} parent=62 // loop_footer_branch
      %201 = sbr.rel target = $region65
    $region70: #{totalnet_forward.1} parent=62 // loop_exit
      _
  $region63: #{totalnet_forward.1} parent=0 // pred_fallthru
    _
  // Predicated region
  $region86: #{totalnet_forward.1} parent=0 // pred_check
    _
  $region87: #{totalnet_forward.1} parent=0 // pred_check_branch
    %742 = sbr.rel (0) target = $region89
  $region88: #{totalnet_forward.1} parent=0 // pred_region
    %743 = vsyncadd %s191, 32768
  $region89: #{totalnet_forward.1} parent=0 // pred_fallthru
    _
  %v744 = vld [vmem:[%s6] ss:$0 sm:$0xff]
  %s745 = scalar_lea.vmem %s6, 1
  %v746 = vld [vmem:[%s745] ss:$8 sm:$0x3]
  %v747 = vld [vmem:[%s6 + $0x2] ss:$0 sm:$0xff]
  %s748 = scalar_lea.vmem %s6, 3
  %v749 = vld [vmem:[%s748] ss:$8 sm:$0xf]
  %v750 = vld [vmem:[%s748] ss:$8 sm:$0xf0]
  %v751 = vor.u32 %v749, %v750
  %s752 = scalar_lea.vmem %s6, 4
  %v753 = vld [vmem:[%s752] ss:$8 sm:$0xf]
  %v754 = vld [vmem:[%s752] ss:$8 sm:$0xf0]
  %v755 = vor.u32 %v753, %v754
  %s756 = scalar_lea.vmem %s6, 5
  %v757 = vld [vmem:[%s756] ss:$8 sm:$0xf]
  %v758 = vld [vmem:[%s756] ss:$8 sm:$0xf0]
  %v759 = vor.u32 %v757, %v758
  %s760 = scalar_lea.vmem %s6, 6
  %v761 = vld [vmem:[%s760] ss:$8 sm:$0xf]
  %v762 = vld [vmem:[%s760] ss:$8 sm:$0xf0]
  %v763 = vor.u32 %v761, %v762
  %s764 = scalar_lea.vmem %s6, 7
  %v765 = vld [vmem:[%s764] ss:$8 sm:$0xf]
  %v766 = vld [vmem:[%s764] ss:$8 sm:$0xf0]
  %v767 = vor.u32 %v765, %v766
  %v768 = vld [vmem:[%s0] sm:$0xf]
  %v769 = vld [vmem:[%s0 + $0x4] sm:$0xf]
  %v770 = vld [vmem:[%s0 + $0x8] sm:$0xf]
  %v771 = vld [vmem:[%s0 + $0xc] sm:$0xf]
  %v772 = vld [vmem:[%s0 + $0x10] sm:$0xf]
  %v773 = vld [vmem:[%s0 + $0x14] sm:$0xf]
  %v774 = vld [vmem:[%s0 + $0x18] sm:$0xf]
  %v775 = vld [vmem:[%s0 + $0x1c] sm:$0xf]
  %v776 = vld [vmem:[%s0 + $0x20] sm:$0xf]
  %v777 = vld [vmem:[%s0 + $0x24] sm:$0xf]
  %v778 = vld [vmem:[%s0 + $0x28] sm:$0xf]
  %v779 = vld [vmem:[%s0 + $0x2c] sm:$0xf]
  %v780 = vld [vmem:[%s0 + $0x30] sm:$0xf]
  %v781 = vld [vmem:[%s0 + $0x34] sm:$0xf]
  %v782 = vld [vmem:[%s0 + $0x38] sm:$0xf]
  %v783 = vld [vmem:[%s0 + $0x3c] sm:$0xf]
  %v784 = vld [vmem:[%s0 + $0x40] sm:$0xf]
  %v785 = vld [vmem:[%s0 + $0x44] sm:$0xf]
  %v786 = vld [vmem:[%s0 + $0x48] sm:$0xf]
  %v787 = vld [vmem:[%s0 + $0x4c] sm:$0xf]
  %v788 = vld [vmem:[%s0 + $0x50] sm:$0xf]
  %v789 = vld [vmem:[%s0 + $0x54] sm:$0xf]
  %v790 = vld [vmem:[%s0 + $0x58] sm:$0xf]
  %v791 = vld [vmem:[%s0 + $0x5c] sm:$0xf]
  %v792 = vld [vmem:[%s0 + $0x60] sm:$0xf]
  %v793 = vld [vmem:[%s0 + $0x64] sm:$0xf]
  %v794 = vld [vmem:[%s0 + $0x68] sm:$0xf]
  %v795 = vld [vmem:[%s0 + $0x6c] sm:$0xf]
  %v796 = vld [vmem:[%s0 + $0x70] sm:$0xf]
  %v797 = vld [vmem:[%s0 + $0x74] sm:$0xf]
  %v798 = vld [vmem:[%s0 + $0x78] sm:$0xf]
  %v799 = vld [vmem:[%s0 + $0x7c] sm:$0xf]
  %v800 = vld [vmem:[%s0 + $0x80] sm:$0xf]
  %v801 = vld [vmem:[%s0 + $0x84] sm:$0xf]
  %v802 = vld [vmem:[%s0 + $0x88] sm:$0xf]
  %v803 = vld [vmem:[%s0 + $0x8c] sm:$0xf]
  %v804 = vld [vmem:[%s0 + $0x90] sm:$0xf]
  %v805 = vld [vmem:[%s0 + $0x94] sm:$0xf]
  %v806 = vld [vmem:[%s0 + $0x98] sm:$0xf]
  %v807 = vld [vmem:[%s0 + $0x9c] sm:$0xf]
  %v808 = vld [vmem:[%s0 + $0xa0] sm:$0xf]
  %v809 = vld [vmem:[%s0 + $0xa4] sm:$0xf]
  %v810 = vld [vmem:[%s0 + $0xa8] sm:$0xf]
  %v811 = vld [vmem:[%s0 + $0xac] sm:$0xf]
  %v812 = vld [vmem:[%s0 + $0xb0] sm:$0xf]
  %v813 = vld [vmem:[%s0 + $0xb4] sm:$0xf]
  %v814 = vld [vmem:[%s0 + $0xb8] sm:$0xf]
  %v815 = vld [vmem:[%s0 + $0xbc] sm:$0xf]
  %v816 = vld [vmem:[%s0 + $0xc0] sm:$0xf]
  %v817 = vld [vmem:[%s0 + $0xc4] sm:$0xf]
  %v818 = vld [vmem:[%s0 + $0xc8] sm:$0xf]
  %v819 = vld [vmem:[%s0 + $0xcc] sm:$0xf]
  %v820 = vld [vmem:[%s0 + $0xd0] sm:$0xf]
  %v821 = vld [vmem:[%s0 + $0xd4] sm:$0xf]
  %v822 = vld [vmem:[%s0 + $0xd8] sm:$0xf]
  %v823 = vld [vmem:[%s0 + $0xdc] sm:$0xf]
  %v824 = vld [vmem:[%s0 + $0xe0] sm:$0xf]
  %v825 = vld [vmem:[%s0 + $0xe4] sm:$0xf]
  %v826 = vld [vmem:[%s0 + $0xe8] sm:$0xf]
  %v827 = vld [vmem:[%s0 + $0xec] sm:$0xf]
  %v828 = vld [vmem:[%s0 + $0xf0] sm:$0xf]
  %v829 = vld [vmem:[%s0 + $0xf4] sm:$0xf]
  %v830 = vld [vmem:[%s0 + $0xf8] sm:$0xf]
  %v831 = vld [vmem:[%s0 + $0xfc] sm:$0xf]
  %v832 = vld [vmem:[%s1] sm:$0xf]
  %v833 = vld [vmem:[%s1 + $0x4] sm:$0xf]
  %v834 = vld [vmem:[%s1 + $0x8] sm:$0xf]
  %v835 = vld [vmem:[%s1 + $0xc] sm:$0xf]
  %v836 = vld [vmem:[%s1 + $0x10] sm:$0xf]
  %v837 = vld [vmem:[%s1 + $0x14] sm:$0xf]
  %v838 = vld [vmem:[%s1 + $0x18] sm:$0xf]
  %v839 = vld [vmem:[%s1 + $0x1c] sm:$0xf]
  %v840 = vld [vmem:[%s1 + $0x20] sm:$0xf]
  %v841 = vld [vmem:[%s1 + $0x24] sm:$0xf]
  %v842 = vld [vmem:[%s1 + $0x28] sm:$0xf]
  %v843 = vld [vmem:[%s1 + $0x2c] sm:$0xf]
  %v844 = vld [vmem:[%s1 + $0x30] sm:$0xf]
  %v845 = vld [vmem:[%s1 + $0x34] sm:$0xf]
  %v846 = vld [vmem:[%s1 + $0x38] sm:$0xf]
  %v847 = vld [vmem:[%s1 + $0x3c] sm:$0xf]
  %v912 = vunpack.c.l.b16 %v768
  %v913 = vunpack.c.l.b16 %v769
  %v914 = vunpack.c.l.b16 %v770
  %v915 = vunpack.c.l.b16 %v771
  %v916 = vunpack.c.l.b16 %v772
  %v917 = vunpack.c.l.b16 %v773
  %v918 = vunpack.c.l.b16 %v774
  %v919 = vunpack.c.l.b16 %v775
  %v920 = vunpack.c.l.b16 %v776
  %v921 = vunpack.c.l.b16 %v777
  %v922 = vunpack.c.l.b16 %v778
  %v923 = vunpack.c.l.b16 %v779
  %v924 = vunpack.c.l.b16 %v780
  %v925 = vunpack.c.l.b16 %v781
  %v926 = vunpack.c.l.b16 %v782
  %v927 = vunpack.c.l.b16 %v783
  %v928 = vunpack.c.l.b16 %v784
  %v929 = vunpack.c.l.b16 %v785
  %v930 = vunpack.c.l.b16 %v786
  %v931 = vunpack.c.l.b16 %v787
  %v932 = vunpack.c.l.b16 %v788
  %v933 = vunpack.c.l.b16 %v789
  %v934 = vunpack.c.l.b16 %v790
  %v935 = vunpack.c.l.b16 %v791
  %v936 = vunpack.c.l.b16 %v792
  %v937 = vunpack.c.l.b16 %v793
  %v938 = vunpack.c.l.b16 %v794
  %v939 = vunpack.c.l.b16 %v795
  %v940 = vunpack.c.l.b16 %v796
  %v941 = vunpack.c.l.b16 %v797
  %v942 = vunpack.c.l.b16 %v798
  %v943 = vunpack.c.l.b16 %v799
  %v944 = vunpack.c.l.b16 %v800
  %v945 = vunpack.c.l.b16 %v801
  %v946 = vunpack.c.l.b16 %v802
  %v947 = vunpack.c.l.b16 %v803
  %v948 = vunpack.c.l.b16 %v804
  %v949 = vunpack.c.l.b16 %v805
  %v950 = vunpack.c.l.b16 %v806
  %v951 = vunpack.c.l.b16 %v807
  %v952 = vunpack.c.l.b16 %v808
  %v953 = vunpack.c.l.b16 %v809
  %v954 = vunpack.c.l.b16 %v810
  %v955 = vunpack.c.l.b16 %v811
  %v956 = vunpack.c.l.b16 %v812
  %v957 = vunpack.c.l.b16 %v813
  %v958 = vunpack.c.l.b16 %v814
  %v959 = vunpack.c.l.b16 %v815
  %v960 = vunpack.c.l.b16 %v816
  %v961 = vunpack.c.l.b16 %v817
  %v962 = vunpack.c.l.b16 %v818
  %v963 = vunpack.c.l.b16 %v819
  %v964 = vunpack.c.l.b16 %v820
  %v965 = vunpack.c.l.b16 %v821
  %v966 = vunpack.c.l.b16 %v822
  %v967 = vunpack.c.l.b16 %v823
  %v968 = vunpack.c.l.b16 %v824
  %v969 = vunpack.c.l.b16 %v825
  %v970 = vunpack.c.l.b16 %v826
  %v971 = vunpack.c.l.b16 %v827
  %v972 = vunpack.c.l.b16 %v828
  %v973 = vunpack.c.l.b16 %v829
  %v974 = vunpack.c.l.b16 %v830
  %v975 = vunpack.c.l.b16 %v831
  %v976 = vpack.c.b16 %v913, %v912
  %v977 = vpack.c.b16 %v915, %v914
  %v978 = vpack.c.b16 %v917, %v916
  %v979 = vpack.c.b16 %v919, %v918
  %v980 = vpack.c.b16 %v921, %v920
  %v981 = vpack.c.b16 %v923, %v922
  %v982 = vpack.c.b16 %v925, %v924
  %v983 = vpack.c.b16 %v927, %v926
  %v984 = vpack.c.b16 %v929, %v928
  %v985 = vpack.c.b16 %v931, %v930
  %v986 = vpack.c.b16 %v933, %v932
  %v987 = vpack.c.b16 %v935, %v934
  %v988 = vpack.c.b16 %v937, %v936
  %v989 = vpack.c.b16 %v939, %v938
  %v990 = vpack.c.b16 %v941, %v940
  %v991 = vpack.c.b16 %v943, %v942
  %v992 = vpack.c.b16 %v945, %v944
  %v993 = vpack.c.b16 %v947, %v946
  %v994 = vpack.c.b16 %v949, %v948
  %v995 = vpack.c.b16 %v951, %v950
  %v996 = vpack.c.b16 %v953, %v952
  %v997 = vpack.c.b16 %v955, %v954
  %v998 = vpack.c.b16 %v957, %v956
  %v999 = vpack.c.b16 %v959, %v958
  %v1000 = vpack.c.b16 %v961, %v960
  %v1001 = vpack.c.b16 %v963, %v962
  %v1002 = vpack.c.b16 %v965, %v964
  %v1003 = vpack.c.b16 %v967, %v966
  %v1004 = vpack.c.b16 %v969, %v968
  %v1005 = vpack.c.b16 %v971, %v970
  %v1006 = vpack.c.b16 %v973, %v972
  %v1007 = vpack.c.b16 %v975, %v974
  %v1056 = vunpack.c.l.b16 %v832
  %v1057 = vunpack.c.l.b16 %v833
  %v1058 = vunpack.c.l.b16 %v834
  %v1059 = vunpack.c.l.b16 %v835
  %v1060 = vunpack.c.l.b16 %v836
  %v1061 = vunpack.c.l.b16 %v837
  %v1062 = vunpack.c.l.b16 %v838
  %v1063 = vunpack.c.l.b16 %v839
  %v1064 = vunpack.c.l.b16 %v840
  %v1065 = vunpack.c.l.b16 %v841
  %v1066 = vunpack.c.l.b16 %v842
  %v1067 = vunpack.c.l.b16 %v843
  %v1068 = vunpack.c.l.b16 %v844
  %v1069 = vunpack.c.l.b16 %v845
  %v1070 = vunpack.c.l.b16 %v846
  %v1071 = vunpack.c.l.b16 %v847
  %v1072 = vpack.c.b16 %v1057, %v1056
  %v1073 = vpack.c.b16 %v1059, %v1058
  %v1074 = vpack.c.b16 %v1061, %v1060
  %v1075 = vpack.c.b16 %v1063, %v1062
  %v1076 = vpack.c.b16 %v1065, %v1064
  %v1077 = vpack.c.b16 %v1067, %v1066
  %v1078 = vpack.c.b16 %v1069, %v1068
  %v1079 = vpack.c.b16 %v1071, %v1070
  %1088 = vmatprep.subr.bf16.mxu0 0
  %1089 = vmatpush1.bf16.msra.mxu0 %v1072
  %1090 = vmatprep.subr.bf16.mxu0 0
  %1091 = vmatpush1.bf16.msra.mxu0 %v1073
  %1092 = vmatprep.subr.bf16.mxu0 0
  %1093 = vmatpush1.bf16.msra.mxu0 %v1074
  %1094 = vmatprep.subr.bf16.mxu0 0
  %1095 = vmatpush1.bf16.msra.mxu0 %v1075
  %1096 = vmatprep.subr.bf16.mxu0 0
  %1097 = vmatpush1.bf16.msra.mxu0 %v1076
  %1098 = vmatprep.subr.bf16.mxu0 0
  %1099 = vmatpush1.bf16.msra.mxu0 %v1077
  %1100 = vmatprep.subr.bf16.mxu0 0
  %1101 = vmatpush1.bf16.msra.mxu0 %v1078
  %1102 = vmatprep.subr.bf16.mxu0 0
  %1103 = vmatpush1.bf16.msra.mxu0 %v1079
  %1104 = vmatprep.subr.bf16.mxu0 0
  %1105 = vmatpush1.bf16.msra.mxu0 0
  %1106 = vmatprep.subr.bf16.mxu0 0
  %1107 = vmatpush1.bf16.msra.mxu0 0
  %1108 = vmatprep.subr.bf16.mxu0 0
  %1109 = vmatpush1.bf16.msra.mxu0 0
  %1110 = vmatprep.subr.bf16.mxu0 0
  %1111 = vmatpush1.bf16.msra.mxu0 0
  %1112 = vmatprep.subr.bf16.mxu0 0
  %1113 = vmatpush1.bf16.msra.mxu0 0
  %1114 = vmatprep.subr.bf16.mxu0 0
  %1115 = vmatpush1.bf16.msra.mxu0 0
  %1116 = vmatprep.subr.bf16.mxu0 0
  %1117 = vmatpush1.bf16.msra.mxu0 0
  %1118 = vmatprep.subr.bf16.mxu0 0
  %1119 = vmatpush1.bf16.msra.mxu0 0
  %1120 = vmatprep.mubr.bf16.mxu0 0
  %1121 = vmatmul.mubr.bf16.gmra.mrb[0].mxu0 %v976
  %v1122 = vpop.f32.mrb[0].mxu0
  %v1123 = vadd.f32 %v744, %v1122
  %v1124 = vpop.f32.mrb[0].mxu0
  %v1125 = vpop.f32.mrb[0].mxu0
  %v1126 = vadd.f32 %v744, %v1125
  %v1127 = vpop.f32.mrb[0].mxu0
  %1128 = vmatprep.mubr.bf16.mxu0 0
  %1129 = vmatmul.mubr.bf16.gmra.mrb[0].mxu0 %v977
  %v1130 = vpop.f32.mrb[0].mxu0
  %v1131 = vadd.f32 %v744, %v1130
  %v1132 = vpop.f32.mrb[0].mxu0
  %v1133 = vpop.f32.mrb[0].mxu0
  %v1134 = vadd.f32 %v744, %v1133
  %v1135 = vpop.f32.mrb[0].mxu0
  %1136 = vmatprep.mubr.bf16.mxu0 0
  %1137 = vmatmul.mubr.bf16.gmra.mrb[0].mxu0 %v978
  %v1138 = vpop.f32.mrb[0].mxu0
  %v1139 = vadd.f32 %v744, %v1138
  %v1140 = vpop.f32.mrb[0].mxu0
  %v1141 = vpop.f32.mrb[0].mxu0
  %v1142 = vadd.f32 %v744, %v1141
  %v1143 = vpop.f32.mrb[0].mxu0
  %1144 = vmatprep.mubr.bf16.mxu0 0
  %1145 = vmatmul.mubr.bf16.gmra.mrb[0].mxu0 %v979
  %v1146 = vpop.f32.mrb[0].mxu0
  %v1147 = vadd.f32 %v744, %v1146
  %v1148 = vpop.f32.mrb[0].mxu0
  %v1149 = vpop.f32.mrb[0].mxu0
  %v1150 = vadd.f32 %v744, %v1149
  %v1151 = vpop.f32.mrb[0].mxu0
  %1152 = vmatprep.mubr.bf16.mxu0 0
  %1153 = vmatmul.mubr.bf16.gmra.mrb[0].mxu0 %v980
  %v1154 = vpop.f32.mrb[0].mxu0
  %v1155 = vadd.f32 %v744, %v1154
  %v1156 = vpop.f32.mrb[0].mxu0
  %v1157 = vpop.f32.mrb[0].mxu0
  %v1158 = vadd.f32 %v744, %v1157
  %v1159 = vpop.f32.mrb[0].mxu0
  %1160 = vmatprep.mubr.bf16.mxu0 0
  %1161 = vmatmul.mubr.bf16.gmra.mrb[0].mxu0 %v981
  %v1162 = vpop.f32.mrb[0].mxu0
  %v1163 = vadd.f32 %v744, %v1162
  %v1164 = vpop.f32.mrb[0].mxu0
  %v1165 = vpop.f32.mrb[0].mxu0
  %v1166 = vadd.f32 %v744, %v1165
  %v1167 = vpop.f32.mrb[0].mxu0
  %1168 = vmatprep.mubr.bf16.mxu0 0
  %1169 = vmatmul.mubr.bf16.gmra.mrb[0].mxu0 %v982
  %v1170 = vpop.f32.mrb[0].mxu0
  %v1171 = vadd.f32 %v744, %v1170
  %v1172 = vpop.f32.mrb[0].mxu0
  %v1173 = vpop.f32.mrb[0].mxu0
  %v1174 = vadd.f32 %v744, %v1173
  %v1175 = vpop.f32.mrb[0].mxu0
  %1176 = vmatprep.mubr.bf16.mxu0 0
  %1177 = vmatmul.mubr.bf16.gmra.mrb[0].mxu0 %v983
  %v1178 = vpop.f32.mrb[0].mxu0
  %v1179 = vadd.f32 %v744, %v1178
  %v1180 = vpop.f32.mrb[0].mxu0
  %v1181 = vpop.f32.mrb[0].mxu0
  %v1182 = vadd.f32 %v744, %v1181
  %v1183 = vpop.f32.mrb[0].mxu0
  %1184 = vmatprep.mubr.bf16.mxu0 0
  %1185 = vmatmul.mubr.bf16.gmra.mrb[0].mxu0 %v984
  %v1186 = vpop.f32.mrb[0].mxu0
  %v1187 = vadd.f32 %v744, %v1186
  %v1188 = vpop.f32.mrb[0].mxu0
  %v1189 = vpop.f32.mrb[0].mxu0
  %v1190 = vadd.f32 %v744, %v1189
  %v1191 = vpop.f32.mrb[0].mxu0
  %1192 = vmatprep.mubr.bf16.mxu0 0
  %1193 = vmatmul.mubr.bf16.gmra.mrb[0].mxu0 %v985
  %v1194 = vpop.f32.mrb[0].mxu0
  %v1195 = vadd.f32 %v744, %v1194
  %v1196 = vpop.f32.mrb[0].mxu0
  %v1197 = vpop.f32.mrb[0].mxu0
  %v1198 = vadd.f32 %v744, %v1197
  %v1199 = vpop.f32.mrb[0].mxu0
  %1200 = vmatprep.mubr.bf16.mxu0 0
  %1201 = vmatmul.mubr.bf16.gmra.mrb[0].mxu0 %v986
  %v1202 = vpop.f32.mrb[0].mxu0
  %v1203 = vadd.f32 %v744, %v1202
  %v1204 = vpop.f32.mrb[0].mxu0
  %v1205 = vpop.f32.mrb[0].mxu0
  %v1206 = vadd.f32 %v744, %v1205
  %v1207 = vpop.f32.mrb[0].mxu0
  %1208 = vmatprep.mubr.bf16.mxu0 0
  %1209 = vmatmul.mubr.bf16.gmra.mrb[0].mxu0 %v987
  %v1210 = vpop.f32.mrb[0].mxu0
  %v1211 = vadd.f32 %v744, %v1210
  %v1212 = vpop.f32.mrb[0].mxu0
  %v1213 = vpop.f32.mrb[0].mxu0
  %v1214 = vadd.f32 %v744, %v1213
  %v1215 = vpop.f32.mrb[0].mxu0
  %1216 = vmatprep.mubr.bf16.mxu0 0
  %1217 = vmatmul.mubr.bf16.gmra.mrb[0].mxu0 %v988
  %v1218 = vpop.f32.mrb[0].mxu0
  %v1219 = vadd.f32 %v744, %v1218
  %v1220 = vpop.f32.mrb[0].mxu0
  %v1221 = vpop.f32.mrb[0].mxu0
  %v1222 = vadd.f32 %v744, %v1221
  %v1223 = vpop.f32.mrb[0].mxu0
  %1224 = vmatprep.mubr.bf16.mxu0 0
  %1225 = vmatmul.mubr.bf16.gmra.mrb[0].mxu0 %v989
  %v1226 = vpop.f32.mrb[0].mxu0
  %v1227 = vadd.f32 %v744, %v1226
  %v1228 = vpop.f32.mrb[0].mxu0
  %v1229 = vpop.f32.mrb[0].mxu0
  %v1230 = vadd.f32 %v744, %v1229
  %v1231 = vpop.f32.mrb[0].mxu0
  %1232 = vmatprep.mubr.bf16.mxu0 0
  %1233 = vmatmul.mubr.bf16.gmra.mrb[0].mxu0 %v990
  %v1234 = vpop.f32.mrb[0].mxu0
  %v1235 = vadd.f32 %v744, %v1234
  %v1236 = vpop.f32.mrb[0].mxu0
  %v1237 = vpop.f32.mrb[0].mxu0
  %v1238 = vadd.f32 %v744, %v1237
  %v1239 = vpop.f32.mrb[0].mxu0
  %1240 = vmatprep.mubr.bf16.mxu0 0
  %1241 = vmatmul.mubr.bf16.gmra.mrb[0].mxu0 %v991
  %v1242 = vpop.f32.mrb[0].mxu0
  %v1243 = vadd.f32 %v744, %v1242
  %v1244 = vpop.f32.mrb[0].mxu0
  %v1245 = vpop.f32.mrb[0].mxu0
  %v1246 = vadd.f32 %v744, %v1245
  %v1247 = vpop.f32.mrb[0].mxu0
  %1248 = vmatprep.mubr.bf16.mxu0 0
  %1249 = vmatmul.mubr.bf16.gmra.mrb[0].mxu0 %v992
  %v1250 = vpop.f32.mrb[0].mxu0
  %v1251 = vadd.f32 %v744, %v1250
  %v1252 = vpop.f32.mrb[0].mxu0
  %v1253 = vpop.f32.mrb[0].mxu0
  %v1254 = vadd.f32 %v744, %v1253
  %v1255 = vpop.f32.mrb[0].mxu0
  %1256 = vmatprep.mubr.bf16.mxu0 0
  %1257 = vmatmul.mubr.bf16.gmra.mrb[0].mxu0 %v993
  %v1258 = vpop.f32.mrb[0].mxu0
  %v1259 = vadd.f32 %v744, %v1258
  %v1260 = vpop.f32.mrb[0].mxu0
  %v1261 = vpop.f32.mrb[0].mxu0
  %v1262 = vadd.f32 %v744, %v1261
  %v1263 = vpop.f32.mrb[0].mxu0
  %1264 = vmatprep.mubr.bf16.mxu0 0
  %1265 = vmatmul.mubr.bf16.gmra.mrb[0].mxu0 %v994
  %v1266 = vpop.f32.mrb[0].mxu0
  %v1267 = vadd.f32 %v744, %v1266
  %v1268 = vpop.f32.mrb[0].mxu0
  %v1269 = vpop.f32.mrb[0].mxu0
  %v1270 = vadd.f32 %v744, %v1269
  %v1271 = vpop.f32.mrb[0].mxu0
  %1272 = vmatprep.mubr.bf16.mxu0 0
  %1273 = vmatmul.mubr.bf16.gmra.mrb[0].mxu0 %v995
  %v1274 = vpop.f32.mrb[0].mxu0
  %v1275 = vadd.f32 %v744, %v1274
  %v1276 = vpop.f32.mrb[0].mxu0
  %v1277 = vpop.f32.mrb[0].mxu0
  %v1278 = vadd.f32 %v744, %v1277
  %v1279 = vpop.f32.mrb[0].mxu0
  %1280 = vmatprep.mubr.bf16.mxu0 0
  %1281 = vmatmul.mubr.bf16.gmra.mrb[0].mxu0 %v996
  %v1282 = vpop.f32.mrb[0].mxu0
  %v1283 = vadd.f32 %v744, %v1282
  %v1284 = vpop.f32.mrb[0].mxu0
  %v1285 = vpop.f32.mrb[0].mxu0
  %v1286 = vadd.f32 %v744, %v1285
  %v1287 = vpop.f32.mrb[0].mxu0
  %1288 = vmatprep.mubr.bf16.mxu0 0
  %1289 = vmatmul.mubr.bf16.gmra.mrb[0].mxu0 %v997
  %v1290 = vpop.f32.mrb[0].mxu0
  %v1291 = vadd.f32 %v744, %v1290
  %v1292 = vpop.f32.mrb[0].mxu0
  %v1293 = vpop.f32.mrb[0].mxu0
  %v1294 = vadd.f32 %v744, %v1293
  %v1295 = vpop.f32.mrb[0].mxu0
  %1296 = vmatprep.mubr.bf16.mxu0 0
  %1297 = vmatmul.mubr.bf16.gmra.mrb[0].mxu0 %v998
  %v1298 = vpop.f32.mrb[0].mxu0
  %v1299 = vadd.f32 %v744, %v1298
  %v1300 = vpop.f32.mrb[0].mxu0
  %v1301 = vpop.f32.mrb[0].mxu0
  %v1302 = vadd.f32 %v744, %v1301
  %v1303 = vpop.f32.mrb[0].mxu0
  %1304 = vmatprep.mubr.bf16.mxu0 0
  %1305 = vmatmul.mubr.bf16.gmra.mrb[0].mxu0 %v999
  %v1306 = vpop.f32.mrb[0].mxu0
  %v1307 = vadd.f32 %v744, %v1306
  %v1308 = vpop.f32.mrb[0].mxu0
  %v1309 = vpop.f32.mrb[0].mxu0
  %v1310 = vadd.f32 %v744, %v1309
  %v1311 = vpop.f32.mrb[0].mxu0
  %1312 = vmatprep.mubr.bf16.mxu0 0
  %1313 = vmatmul.mubr.bf16.gmra.mrb[0].mxu0 %v1000
  %v1314 = vpop.f32.mrb[0].mxu0
  %v1315 = vadd.f32 %v744, %v1314
  %v1316 = vpop.f32.mrb[0].mxu0
  %v1317 = vpop.f32.mrb[0].mxu0
  %v1318 = vadd.f32 %v744, %v1317
  %v1319 = vpop.f32.mrb[0].mxu0
  %1320 = vmatprep.mubr.bf16.mxu0 0
  %1321 = vmatmul.mubr.bf16.gmra.mrb[0].mxu0 %v1001
  %v1322 = vpop.f32.mrb[0].mxu0
  %v1323 = vadd.f32 %v744, %v1322
  %v1324 = vpop.f32.mrb[0].mxu0
  %v1325 = vpop.f32.mrb[0].mxu0
  %v1326 = vadd.f32 %v744, %v1325
  %v1327 = vpop.f32.mrb[0].mxu0
  %1328 = vmatprep.mubr.bf16.mxu0 0
  %1329 = vmatmul.mubr.bf16.gmra.mrb[0].mxu0 %v1002
  %v1330 = vpop.f32.mrb[0].mxu0
  %v1331 = vadd.f32 %v744, %v1330
  %v1332 = vpop.f32.mrb[0].mxu0
  %v1333 = vpop.f32.mrb[0].mxu0
  %v1334 = vadd.f32 %v744, %v1333
  %v1335 = vpop.f32.mrb[0].mxu0
  %1336 = vmatprep.mubr.bf16.mxu0 0
  %1337 = vmatmul.mubr.bf16.gmra.mrb[0].mxu0 %v1003
  %v1338 = vpop.f32.mrb[0].mxu0
  %v1339 = vadd.f32 %v744, %v1338
  %v1340 = vpop.f32.mrb[0].mxu0
  %v1341 = vpop.f32.mrb[0].mxu0
  %v1342 = vadd.f32 %v744, %v1341
  %v1343 = vpop.f32.mrb[0].mxu0
  %1344 = vmatprep.mubr.bf16.mxu0 0
  %1345 = vmatmul.mubr.bf16.gmra.mrb[0].mxu0 %v1004
  %v1346 = vpop.f32.mrb[0].mxu0
  %v1347 = vadd.f32 %v744, %v1346
  %v1348 = vpop.f32.mrb[0].mxu0
  %v1349 = vpop.f32.mrb[0].mxu0
  %v1350 = vadd.f32 %v744, %v1349
  %v1351 = vpop.f32.mrb[0].mxu0
  %1352 = vmatprep.mubr.bf16.mxu0 0
  %1353 = vmatmul.mubr.bf16.gmra.mrb[0].mxu0 %v1005
  %v1354 = vpop.f32.mrb[0].mxu0
  %v1355 = vadd.f32 %v744, %v1354
  %v1356 = vpop.f32.mrb[0].mxu0
  %v1357 = vpop.f32.mrb[0].mxu0
  %v1358 = vadd.f32 %v744, %v1357
  %v1359 = vpop.f32.mrb[0].mxu0
  %1360 = vmatprep.mubr.bf16.mxu0 0
  %1361 = vmatmul.mubr.bf16.gmra.mrb[0].mxu0 %v1006
  %v1362 = vpop.f32.mrb[0].mxu0
  %v1363 = vadd.f32 %v744, %v1362
  %v1364 = vpop.f32.mrb[0].mxu0
  %v1365 = vpop.f32.mrb[0].mxu0
  %v1366 = vadd.f32 %v744, %v1365
  %v1367 = vpop.f32.mrb[0].mxu0
  %1368 = vmatprep.mubr.bf16.mxu0 0
  %1369 = vmatmul.mubr.bf16.gmra.mrb[0].mxu0 %v1007
  %v1370 = vpop.f32.mrb[0].mxu0
  %v1371 = vadd.f32 %v744, %v1370
  %v1372 = vpop.f32.mrb[0].mxu0
  %v1373 = vpop.f32.mrb[0].mxu0
  %v1374 = vadd.f32 %v744, %v1373
  %v1375 = vpop.f32.mrb[0].mxu0
  %1376 = vdwg.mxu0
  %v1377 = vmax.f32 %v1123, 0.0
  %v1378 = vmax.f32 %v1126, 0.0
  %v1379 = vmax.f32 %v1131, 0.0
  %v1380 = vmax.f32 %v1134, 0.0
  %v1381 = vmax.f32 %v1139, 0.0
  %v1382 = vmax.f32 %v1142, 0.0
  %v1383 = vmax.f32 %v1147, 0.0
  %v1384 = vmax.f32 %v1150, 0.0
  %v1385 = vmax.f32 %v1155, 0.0
  %v1386 = vmax.f32 %v1158, 0.0
  %v1387 = vmax.f32 %v1163, 0.0
  %v1388 = vmax.f32 %v1166, 0.0
  %v1389 = vmax.f32 %v1171, 0.0
  %v1390 = vmax.f32 %v1174, 0.0
  %v1391 = vmax.f32 %v1179, 0.0
  %v1392 = vmax.f32 %v1182, 0.0
  %v1393 = vmax.f32 %v1187, 0.0
  %v1394 = vmax.f32 %v1190, 0.0
  %v1395 = vmax.f32 %v1195, 0.0
  %v1396 = vmax.f32 %v1198, 0.0
  %v1397 = vmax.f32 %v1203, 0.0
  %v1398 = vmax.f32 %v1206, 0.0
  %v1399 = vmax.f32 %v1211, 0.0
  %v1400 = vmax.f32 %v1214, 0.0
  %v1401 = vmax.f32 %v1219, 0.0
  %v1402 = vmax.f32 %v1222, 0.0
  %v1403 = vmax.f32 %v1227, 0.0
  %v1404 = vmax.f32 %v1230, 0.0
  %v1405 = vmax.f32 %v1235, 0.0
  %v1406 = vmax.f32 %v1238, 0.0
  %v1407 = vmax.f32 %v1243, 0.0
  %v1408 = vmax.f32 %v1246, 0.0
  %v1409 = vmax.f32 %v1251, 0.0
  %v1410 = vmax.f32 %v1254, 0.0
  %v1411 = vmax.f32 %v1259, 0.0
  %v1412 = vmax.f32 %v1262, 0.0
  %v1413 = vmax.f32 %v1267, 0.0
  %v1414 = vmax.f32 %v1270, 0.0
  %v1415 = vmax.f32 %v1275, 0.0
  %v1416 = vmax.f32 %v1278, 0.0
  %v1417 = vmax.f32 %v1283, 0.0
  %v1418 = vmax.f32 %v1286, 0.0
  %v1419 = vmax.f32 %v1291, 0.0
  %v1420 = vmax.f32 %v1294, 0.0
  %v1421 = vmax.f32 %v1299, 0.0
  %v1422 = vmax.f32 %v1302, 0.0
  %v1423 = vmax.f32 %v1307, 0.0
  %v1424 = vmax.f32 %v1310, 0.0
  %v1425 = vmax.f32 %v1315, 0.0
  %v1426 = vmax.f32 %v1318, 0.0
  %v1427 = vmax.f32 %v1323, 0.0
  %v1428 = vmax.f32 %v1326, 0.0
  %v1429 = vmax.f32 %v1331, 0.0
  %v1430 = vmax.f32 %v1334, 0.0
  %v1431 = vmax.f32 %v1339, 0.0
  %v1432 = vmax.f32 %v1342, 0.0
  %v1433 = vmax.f32 %v1347, 0.0
  %v1434 = vmax.f32 %v1350, 0.0
  %v1435 = vmax.f32 %v1355, 0.0
  %v1436 = vmax.f32 %v1358, 0.0
  %v1437 = vmax.f32 %v1363, 0.0
  %v1438 = vmax.f32 %v1366, 0.0
  %v1439 = vmax.f32 %v1371, 0.0
  %v1440 = vmax.f32 %v1374, 0.0
  %v1441 = vlaneseq
  %v1442 = vshrl.u32 %v1441, 7
  %v1443 = vlaneseq
  %v1444 = vand.u32 %v1443, 127
  %v1445 = vadd.s32 %v1444, 128
  %v1446 = vadd.s32 %v1444, 256
  %v1447 = vadd.s32 %v1444, 384
  %v1448 = vmul.u32 %v1442, 256
  %vm1449 = vcmp.ge.s32.totalorder %v1444, %v1448
  %vm1450 = vcmp.ge.s32.totalorder %v1445, %v1448
  %vm1451 = vcmp.ge.s32.totalorder %v1446, %v1448
  %vm1452 = vcmp.ge.s32.totalorder %v1447, %v1448
  %v1453 = vadd.s32 %v1442, 1
  %v1454 = vmul.u32 %v1453, 256
  %vm1455 = vcmp.lt.s32.totalorder %v1444, %v1454
  %vm1456 = vcmp.lt.s32.totalorder %v1445, %v1454
  %vm1457 = vcmp.lt.s32.totalorder %v1446, %v1454
  %vm1458 = vcmp.lt.s32.totalorder %v1447, %v1454
  %vm1459 = vmand %vm1449, %vm1455
  %vm1460 = vmand %vm1450, %vm1456
  %vm1461 = vmand %vm1451, %vm1457
  %vm1462 = vmand %vm1452, %vm1458
  %v1463 = vsel %vm1459, 0.00390625, 0.0
  %v1464 = vsel %vm1460, 0.00390625, 0.0
  %v1465 = vsel %vm1461, 0.00390625, 0.0
  %v1466 = vsel %vm1462, 0.00390625, 0.0
  %1467 = vmatprep.subr.mxu0 0.0
  %1468 = vmatpush1.msra.mxu0 %v1377
  %1469 = vmatprep.subr.mxu0 0.0
  %1470 = vmatpush1.msra.mxu0 %v1378
  %1471 = vmatprep.subr.mxu0 0.0
  %1472 = vmatpush1.msra.mxu0 %v1379
  %1473 = vmatprep.subr.mxu0 0.0
  %1474 = vmatpush1.msra.mxu0 %v1380
  %1475 = vmatprep.subr.mxu0 0.0
  %1476 = vmatpush1.msra.mxu0 %v1381
  %1477 = vmatprep.subr.mxu0 0.0
  %1478 = vmatpush1.msra.mxu0 %v1382
  %1479 = vmatprep.subr.mxu0 0.0
  %1480 = vmatpush1.msra.mxu0 %v1383
  %1481 = vmatprep.subr.mxu0 0.0
  %1482 = vmatpush1.msra.mxu0 %v1384
  %1483 = vmatprep.subr.mxu0 0.0
  %1484 = vmatpush1.msra.mxu0 %v1385
  %1485 = vmatprep.subr.mxu0 0.0
  %1486 = vmatpush1.msra.mxu0 %v1386
  %1487 = vmatprep.subr.mxu0 0.0
  %1488 = vmatpush1.msra.mxu0 %v1387
  %1489 = vmatprep.subr.mxu0 0.0
  %1490 = vmatpush1.msra.mxu0 %v1388
  %1491 = vmatprep.subr.mxu0 0.0
  %1492 = vmatpush1.msra.mxu0 %v1389
  %1493 = vmatprep.subr.mxu0 0.0
  %1494 = vmatpush1.msra.mxu0 %v1390
  %1495 = vmatprep.subr.mxu0 0.0
  %1496 = vmatpush1.msra.mxu0 %v1391
  %1497 = vmatprep.subr.mxu0 0.0
  %1498 = vmatpush1.msra.mxu0 %v1392
  %1499 = vmatprep.subr.mxu0 0.0
  %1500 = vmatpush1.msra.mxu0 %v1393
  %1501 = vmatprep.subr.mxu0 0.0
  %1502 = vmatpush1.msra.mxu0 %v1394
  %1503 = vmatprep.subr.mxu0 0.0
  %1504 = vmatpush1.msra.mxu0 %v1395
  %1505 = vmatprep.subr.mxu0 0.0
  %1506 = vmatpush1.msra.mxu0 %v1396
  %1507 = vmatprep.subr.mxu0 0.0
  %1508 = vmatpush1.msra.mxu0 %v1397
  %1509 = vmatprep.subr.mxu0 0.0
  %1510 = vmatpush1.msra.mxu0 %v1398
  %1511 = vmatprep.subr.mxu0 0.0
  %1512 = vmatpush1.msra.mxu0 %v1399
  %1513 = vmatprep.subr.mxu0 0.0
  %1514 = vmatpush1.msra.mxu0 %v1400
  %1515 = vmatprep.subr.mxu0 0.0
  %1516 = vmatpush1.msra.mxu0 %v1401
  %1517 = vmatprep.subr.mxu0 0.0
  %1518 = vmatpush1.msra.mxu0 %v1402
  %1519 = vmatprep.subr.mxu0 0.0
  %1520 = vmatpush1.msra.mxu0 %v1403
  %1521 = vmatprep.subr.mxu0 0.0
  %1522 = vmatpush1.msra.mxu0 %v1404
  %1523 = vmatprep.subr.mxu0 0.0
  %1524 = vmatpush1.msra.mxu0 %v1405
  %1525 = vmatprep.subr.mxu0 0.0
  %1526 = vmatpush1.msra.mxu0 %v1406
  %1527 = vmatprep.subr.mxu0 0.0
  %1528 = vmatpush1.msra.mxu0 %v1407
  %1529 = vmatprep.subr.mxu0 0.0
  %1530 = vmatpush1.msra.mxu0 %v1408
  %1531 = vmatprep.mubr.f32.mxu0 %v1464
  %1532 = vmatmul.mubr.f32.gmra.mrb[0].mxu0 %v1463
  %v1533 = vpop.f32.mrb[0].mxu0
  %v1534 = vadd.f32 0.0, %v1533
  %v1535 = vpop.f32.mrb[0].mxu0
  %1536 = vdwg.mxu0
  %1537 = vmatprep.subr.mxu0 0.0
  %1538 = vmatpush1.msra.mxu0 %v1409
  %1539 = vmatprep.subr.mxu0 0.0
  %1540 = vmatpush1.msra.mxu0 %v1410
  %1541 = vmatprep.subr.mxu0 0.0
  %1542 = vmatpush1.msra.mxu0 %v1411
  %1543 = vmatprep.subr.mxu0 0.0
  %1544 = vmatpush1.msra.mxu0 %v1412
  %1545 = vmatprep.subr.mxu0 0.0
  %1546 = vmatpush1.msra.mxu0 %v1413
  %1547 = vmatprep.subr.mxu0 0.0
  %1548 = vmatpush1.msra.mxu0 %v1414
  %1549 = vmatprep.subr.mxu0 0.0
  %1550 = vmatpush1.msra.mxu0 %v1415
  %1551 = vmatprep.subr.mxu0 0.0
  %1552 = vmatpush1.msra.mxu0 %v1416
  %1553 = vmatprep.subr.mxu0 0.0
  %1554 = vmatpush1.msra.mxu0 %v1417
  %1555 = vmatprep.subr.mxu0 0.0
  %1556 = vmatpush1.msra.mxu0 %v1418
  %1557 = vmatprep.subr.mxu0 0.0
  %1558 = vmatpush1.msra.mxu0 %v1419
  %1559 = vmatprep.subr.mxu0 0.0
  %1560 = vmatpush1.msra.mxu0 %v1420
  %1561 = vmatprep.subr.mxu0 0.0
  %1562 = vmatpush1.msra.mxu0 %v1421
  %1563 = vmatprep.subr.mxu0 0.0
  %1564 = vmatpush1.msra.mxu0 %v1422
  %1565 = vmatprep.subr.mxu0 0.0
  %1566 = vmatpush1.msra.mxu0 %v1423
  %1567 = vmatprep.subr.mxu0 0.0
  %1568 = vmatpush1.msra.mxu0 %v1424
  %1569 = vmatprep.subr.mxu0 0.0
  %1570 = vmatpush1.msra.mxu0 %v1425
  %1571 = vmatprep.subr.mxu0 0.0
  %1572 = vmatpush1.msra.mxu0 %v1426
  %1573 = vmatprep.subr.mxu0 0.0
  %1574 = vmatpush1.msra.mxu0 %v1427
  %1575 = vmatprep.subr.mxu0 0.0
  %1576 = vmatpush1.msra.mxu0 %v1428
  %1577 = vmatprep.subr.mxu0 0.0
  %1578 = vmatpush1.msra.mxu0 %v1429
  %1579 = vmatprep.subr.mxu0 0.0
  %1580 = vmatpush1.msra.mxu0 %v1430
  %1581 = vmatprep.subr.mxu0 0.0
  %1582 = vmatpush1.msra.mxu0 %v1431
  %1583 = vmatprep.subr.mxu0 0.0
  %1584 = vmatpush1.msra.mxu0 %v1432
  %1585 = vmatprep.subr.mxu0 0.0
  %1586 = vmatpush1.msra.mxu0 %v1433
  %1587 = vmatprep.subr.mxu0 0.0
  %1588 = vmatpush1.msra.mxu0 %v1434
  %1589 = vmatprep.subr.mxu0 0.0
  %1590 = vmatpush1.msra.mxu0 %v1435
  %1591 = vmatprep.subr.mxu0 0.0
  %1592 = vmatpush1.msra.mxu0 %v1436
  %1593 = vmatprep.subr.mxu0 0.0
  %1594 = vmatpush1.msra.mxu0 %v1437
  %1595 = vmatprep.subr.mxu0 0.0
  %1596 = vmatpush1.msra.mxu0 %v1438
  %1597 = vmatprep.subr.mxu0 0.0
  %1598 = vmatpush1.msra.mxu0 %v1439
  %1599 = vmatprep.subr.mxu0 0.0
  %1600 = vmatpush1.msra.mxu0 %v1440
  %1601 = vmatprep.mubr.f32.mxu0 %v1466
  %1602 = vmatmul.mubr.f32.gmra.mrb[0].mxu0 %v1465
  %v1603 = vpop.f32.mrb[0].mxu0
  %v1604 = vadd.f32 %v1534, %v1603
  %v1605 = vpop.f32.mrb[0].mxu0
  %1606 = vdwg.mxu0
  %v1607 = vld [vmem:[%s2] sm:$0xff]
  %v1608 = vld [vmem:[%s2 + $0x8] sm:$0xff]
  %v1609 = vld [vmem:[%s2 + $0x10] sm:$0xff]
  %v1610 = vld [vmem:[%s2 + $0x18] sm:$0xff]
  %v1611 = vld [vmem:[%s2 + $0x20] sm:$0xff]
  %v1612 = vld [vmem:[%s2 + $0x28] sm:$0xff]
  %v1613 = vld [vmem:[%s2 + $0x30] sm:$0xff]
  %v1614 = vld [vmem:[%s2 + $0x38] sm:$0xff]
  %v1615 = vld [vmem:[%s2 + $0x40] sm:$0xff]
  %v1616 = vld [vmem:[%s2 + $0x48] sm:$0xff]
  %v1617 = vld [vmem:[%s2 + $0x50] sm:$0xff]
  %v1618 = vld [vmem:[%s2 + $0x58] sm:$0xff]
  %v1619 = vld [vmem:[%s2 + $0x60] sm:$0xff]
  %v1620 = vld [vmem:[%s2 + $0x68] sm:$0xff]
  %v1621 = vld [vmem:[%s2 + $0x70] sm:$0xff]
  %v1622 = vld [vmem:[%s2 + $0x78] sm:$0xff]
  %v1623 = vld [vmem:[%s2 + $0x80] sm:$0xff]
  %v1624 = vld [vmem:[%s2 + $0x88] sm:$0xff]
  %v1625 = vld [vmem:[%s2 + $0x90] sm:$0xff]
  %v1626 = vld [vmem:[%s2 + $0x98] sm:$0xff]
  %v1627 = vld [vmem:[%s2 + $0xa0] sm:$0xff]
  %v1628 = vld [vmem:[%s2 + $0xa8] sm:$0xff]
  %v1629 = vld [vmem:[%s2 + $0xb0] sm:$0xff]
  %v1630 = vld [vmem:[%s2 + $0xb8] sm:$0xff]
  %v1631 = vld [vmem:[%s2 + $0xc0] sm:$0xff]
  %v1632 = vld [vmem:[%s2 + $0xc8] sm:$0xff]
  %v1633 = vld [vmem:[%s2 + $0xd0] sm:$0xff]
  %v1634 = vld [vmem:[%s2 + $0xd8] sm:$0xff]
  %v1635 = vld [vmem:[%s2 + $0xe0] sm:$0xff]
  %v1636 = vld [vmem:[%s2 + $0xe8] sm:$0xff]
  %v1637 = vld [vmem:[%s2 + $0xf0] sm:$0xff]
  %v1638 = vld [vmem:[%s2 + $0xf8] sm:$0xff]
  %v1640 = vlaneseq
  %v1641 = vshrl.u32 %v1640, 7
  %v1642 = vsub.s32 0, %v1641
  %v1643 = vrot.slane %v746, %v1642
  %v1644 = vlaneseq
  %v1645 = vshrl.u32 %v1644, 7
  %v1646 = vsub.s32 1, %v1645
  %v1647 = vrot.slane %v746, %v1646
  %1650 = vmatprep.subr.mxu0 %v1608
  %1651 = vmatpush1.msra.mxu0 %v1607
  %1652 = vmatprep.subr.mxu0 %v1610
  %1653 = vmatpush1.msra.mxu0 %v1609
  %1654 = vmatprep.subr.mxu0 %v1612
  %1655 = vmatpush1.msra.mxu0 %v1611
  %1656 = vmatprep.subr.mxu0 %v1614
  %1657 = vmatpush1.msra.mxu0 %v1613
  %1658 = vmatprep.subr.mxu0 %v1616
  %1659 = vmatpush1.msra.mxu0 %v1615
  %1660 = vmatprep.subr.mxu0 %v1618
  %1661 = vmatpush1.msra.mxu0 %v1617
  %1662 = vmatprep.subr.mxu0 %v1620
  %1663 = vmatpush1.msra.mxu0 %v1619
  %1664 = vmatprep.subr.mxu0 %v1622
  %1665 = vmatpush1.msra.mxu0 %v1621
  %1666 = vmatprep.subr.mxu0 %v1624
  %1667 = vmatpush1.msra.mxu0 %v1623
  %1668 = vmatprep.subr.mxu0 %v1626
  %1669 = vmatpush1.msra.mxu0 %v1625
  %1670 = vmatprep.subr.mxu0 %v1628
  %1671 = vmatpush1.msra.mxu0 %v1627
  %1672 = vmatprep.subr.mxu0 %v1630
  %1673 = vmatpush1.msra.mxu0 %v1629
  %1674 = vmatprep.subr.mxu0 %v1632
  %1675 = vmatpush1.msra.mxu0 %v1631
  %1676 = vmatprep.subr.mxu0 %v1634
  %1677 = vmatpush1.msra.mxu0 %v1633
  %1678 = vmatprep.subr.mxu0 %v1636
  %1679 = vmatpush1.msra.mxu0 %v1635
  %1680 = vmatprep.subr.mxu0 %v1638
  %1681 = vmatpush1.msra.mxu0 %v1637
  %1682 = vmatprep.subr.mxu0 0.0
  %1683 = vmatpush1.msra.mxu0 0.0
  %1684 = vmatprep.subr.mxu0 0.0
  %1685 = vmatpush1.msra.mxu0 0.0
  %1686 = vmatprep.subr.mxu0 0.0
  %1687 = vmatpush1.msra.mxu0 0.0
  %1688 = vmatprep.subr.mxu0 0.0
  %1689 = vmatpush1.msra.mxu0 0.0
  %1690 = vmatprep.subr.mxu0 0.0
  %1691 = vmatpush1.msra.mxu0 0.0
  %1692 = vmatprep.subr.mxu0 0.0
  %1693 = vmatpush1.msra.mxu0 0.0
  %1694 = vmatprep.subr.mxu0 0.0
  %1695 = vmatpush1.msra.mxu0 0.0
  %1696 = vmatprep.subr.mxu0 0.0
  %1697 = vmatpush1.msra.mxu0 0.0
  %1698 = vmatprep.subr.mxu0 0.0
  %1699 = vmatpush1.msra.mxu0 0.0
  %1700 = vmatprep.subr.mxu0 0.0
  %1701 = vmatpush1.msra.mxu0 0.0
  %1702 = vmatprep.subr.mxu0 0.0
  %1703 = vmatpush1.msra.mxu0 0.0
  %1704 = vmatprep.subr.mxu0 0.0
  %1705 = vmatpush1.msra.mxu0 0.0
  %1706 = vmatprep.subr.mxu0 0.0
  %1707 = vmatpush1.msra.mxu0 0.0
  %1708 = vmatprep.subr.mxu0 0.0
  %1709 = vmatpush1.msra.mxu0 0.0
  %1710 = vmatprep.subr.mxu0 0.0
  %1711 = vmatpush1.msra.mxu0 0.0
  %1712 = vmatprep.subr.mxu0 0.0
  %1713 = vmatpush1.msra.mxu0 0.0
  %1714 = vmatprep.mubr.f32.mxu0 0.0
  %1715 = vmatmul.mubr.f32.gmra.mrb[0].mxu0 %v1604
  %v1716 = vpop.f32.mrb[0].mxu0
  %v1717 = vadd.f32 %v1643, %v1716
  %v1718 = vpop.f32.mrb[0].mxu0
  %v1719 = vadd.f32 %v1647, %v1718
  %1720 = vdwg.mxu0
  %v1721 = vmax.f32 %v1717, 0.0
  %v1722 = vmax.f32 %v1719, 0.0
  %v1723 = vld [vmem:[%s3] sm:$0xff]
  %v1724 = vld [vmem:[%s3 + $0x8] sm:$0xff]
  %v1725 = vld [vmem:[%s3 + $0x10] sm:$0xff]
  %v1726 = vld [vmem:[%s3 + $0x18] sm:$0xff]
  %v1727 = vld [vmem:[%s3 + $0x20] sm:$0xff]
  %v1728 = vld [vmem:[%s3 + $0x28] sm:$0xff]
  %v1729 = vld [vmem:[%s3 + $0x30] sm:$0xff]
  %v1730 = vld [vmem:[%s3 + $0x38] sm:$0xff]
  %v1731 = vld [vmem:[%s3 + $0x40] sm:$0xff]
  %v1732 = vld [vmem:[%s3 + $0x48] sm:$0xff]
  %v1733 = vld [vmem:[%s3 + $0x50] sm:$0xff]
  %v1734 = vld [vmem:[%s3 + $0x58] sm:$0xff]
  %v1735 = vld [vmem:[%s3 + $0x60] sm:$0xff]
  %v1736 = vld [vmem:[%s3 + $0x68] sm:$0xff]
  %v1737 = vld [vmem:[%s3 + $0x70] sm:$0xff]
  %v1738 = vld [vmem:[%s3 + $0x78] sm:$0xff]
  %v1739 = vld [vmem:[%s3 + $0x80] sm:$0xff]
  %v1740 = vld [vmem:[%s3 + $0x88] sm:$0xff]
  %v1741 = vld [vmem:[%s3 + $0x90] sm:$0xff]
  %v1742 = vld [vmem:[%s3 + $0x98] sm:$0xff]
  %v1743 = vld [vmem:[%s3 + $0xa0] sm:$0xff]
  %v1744 = vld [vmem:[%s3 + $0xa8] sm:$0xff]
  %v1745 = vld [vmem:[%s3 + $0xb0] sm:$0xff]
  %v1746 = vld [vmem:[%s3 + $0xb8] sm:$0xff]
  %v1747 = vld [vmem:[%s3 + $0xc0] sm:$0xff]
  %v1748 = vld [vmem:[%s3 + $0xc8] sm:$0xff]
  %v1749 = vld [vmem:[%s3 + $0xd0] sm:$0xff]
  %v1750 = vld [vmem:[%s3 + $0xd8] sm:$0xff]
  %v1751 = vld [vmem:[%s3 + $0xe0] sm:$0xff]
  %v1752 = vld [vmem:[%s3 + $0xe8] sm:$0xff]
  %v1753 = vld [vmem:[%s3 + $0xf0] sm:$0xff]
  %v1754 = vld [vmem:[%s3 + $0xf8] sm:$0xff]
  %1755 = vmatprep.subr.mxu0 0.0
  %1756 = vmatpush1.msra.mxu0 %v1723
  %1757 = vmatprep.subr.mxu0 0.0
  %1758 = vmatpush1.msra.mxu0 %v1724
  %1759 = vmatprep.subr.mxu0 0.0
  %1760 = vmatpush1.msra.mxu0 %v1725
  %1761 = vmatprep.subr.mxu0 0.0
  %1762 = vmatpush1.msra.mxu0 %v1726
  %1763 = vmatprep.subr.mxu0 0.0
  %1764 = vmatpush1.msra.mxu0 %v1727
  %1765 = vmatprep.subr.mxu0 0.0
  %1766 = vmatpush1.msra.mxu0 %v1728
  %1767 = vmatprep.subr.mxu0 0.0
  %1768 = vmatpush1.msra.mxu0 %v1729
  %1769 = vmatprep.subr.mxu0 0.0
  %1770 = vmatpush1.msra.mxu0 %v1730
  %1771 = vmatprep.subr.mxu0 0.0
  %1772 = vmatpush1.msra.mxu0 %v1731
  %1773 = vmatprep.subr.mxu0 0.0
  %1774 = vmatpush1.msra.mxu0 %v1732
  %1775 = vmatprep.subr.mxu0 0.0
  %1776 = vmatpush1.msra.mxu0 %v1733
  %1777 = vmatprep.subr.mxu0 0.0
  %1778 = vmatpush1.msra.mxu0 %v1734
  %1779 = vmatprep.subr.mxu0 0.0
  %1780 = vmatpush1.msra.mxu0 %v1735
  %1781 = vmatprep.subr.mxu0 0.0
  %1782 = vmatpush1.msra.mxu0 %v1736
  %1783 = vmatprep.subr.mxu0 0.0
  %1784 = vmatpush1.msra.mxu0 %v1737
  %1785 = vmatprep.subr.mxu0 0.0
  %1786 = vmatpush1.msra.mxu0 %v1738
  %1787 = vmatprep.subr.mxu0 0.0
  %1788 = vmatpush1.msra.mxu0 %v1739
  %1789 = vmatprep.subr.mxu0 0.0
  %1790 = vmatpush1.msra.mxu0 %v1740
  %1791 = vmatprep.subr.mxu0 0.0
  %1792 = vmatpush1.msra.mxu0 %v1741
  %1793 = vmatprep.subr.mxu0 0.0
  %1794 = vmatpush1.msra.mxu0 %v1742
  %1795 = vmatprep.subr.mxu0 0.0
  %1796 = vmatpush1.msra.mxu0 %v1743
  %1797 = vmatprep.subr.mxu0 0.0
  %1798 = vmatpush1.msra.mxu0 %v1744
  %1799 = vmatprep.subr.mxu0 0.0
  %1800 = vmatpush1.msra.mxu0 %v1745
  %1801 = vmatprep.subr.mxu0 0.0
  %1802 = vmatpush1.msra.mxu0 %v1746
  %1803 = vmatprep.subr.mxu0 0.0
  %1804 = vmatpush1.msra.mxu0 %v1747
  %1805 = vmatprep.subr.mxu0 0.0
  %1806 = vmatpush1.msra.mxu0 %v1748
  %1807 = vmatprep.subr.mxu0 0.0
  %1808 = vmatpush1.msra.mxu0 %v1749
  %1809 = vmatprep.subr.mxu0 0.0
  %1810 = vmatpush1.msra.mxu0 %v1750
  %1811 = vmatprep.subr.mxu0 0.0
  %1812 = vmatpush1.msra.mxu0 %v1751
  %1813 = vmatprep.subr.mxu0 0.0
  %1814 = vmatpush1.msra.mxu0 %v1752
  %1815 = vmatprep.subr.mxu0 0.0
  %1816 = vmatpush1.msra.mxu0 %v1753
  %1817 = vmatprep.subr.mxu0 0.0
  %1818 = vmatpush1.msra.mxu0 %v1754
  %1819 = vmatprep.mubr.f32.mxu0 %v1722
  %1820 = vmatmul.mubr.f32.gmra.mrb[0].mxu0 %v1721
  %v1821 = vpop.f32.mrb[0].mxu0
  %v1822 = vadd.f32 %v747, %v1821
  %v1823 = vpop.f32.mrb[0].mxu0
  %1824 = vdwg.mxu0
  %vm1825 = vcmask 64512
  %v1826 = vsel %vm1825, %v1822, -inf
  %1827 = vmax.xlane.f32.xlu0 %v1826
  %v1828 = vpop.xlane.xlu0 %1827
  %v1829 = vsub.f32 %v1822, %v1828
  %v1830 = vmul.f32 %v1829, 1.442695
  %v1831 = vpow.pop %v1830
  %v1832 = vsel %vm1825, %v1831, 0.0
  %1833 = vadd.xlane.f32.xlu0 %v1832
  %v1834 = vpop.xlane.xlu0 %1833
  %v1835 = vrcp.pop %v1834
  %v1836 = vmul.f32 %v1831, %v1835
  %s1837 = smul.u32 2, 32
  %s1838 = smul.u32 %s1837, 8
  %s1839 = sshll.u32 %s1838, 4
  %1840 = dma.done [#allocation4], %s1839
  %v1841 = vpack.c.bf16 %v1717, %v1717
  %v1842 = vpack.c.bf16 %v1719, %v1719
  %v1843 = vld [vmem:[#allocation2] sm:$0xff]
  %v1844 = vld [vmem:[#allocation2 + $0x8] sm:$0xff]
  %v1845 = vld [vmem:[#allocation2 + $0x10] sm:$0xff]
  %v1846 = vld [vmem:[#allocation2 + $0x18] sm:$0xff]
  %v1847 = vld [vmem:[#allocation2 + $0x20] sm:$0xff]
  %v1848 = vld [vmem:[#allocation2 + $0x28] sm:$0xff]
  %v1849 = vld [vmem:[#allocation2 + $0x30] sm:$0xff]
  %v1850 = vld [vmem:[#allocation2 + $0x38] sm:$0xff]
  %v1851 = vld [vmem:[#allocation2 + $0x40] sm:$0xff]
  %v1852 = vld [vmem:[#allocation2 + $0x48] sm:$0xff]
  %v1853 = vld [vmem:[#allocation2 + $0x50] sm:$0xff]
  %v1854 = vld [vmem:[#allocation2 + $0x58] sm:$0xff]
  %v1855 = vld [vmem:[#allocation2 + $0x60] sm:$0xff]
  %v1856 = vld [vmem:[#allocation2 + $0x68] sm:$0xff]
  %v1857 = vld [vmem:[#allocation2 + $0x70] sm:$0xff]
  %v1858 = vld [vmem:[#allocation2 + $0x78] sm:$0xff]
  %v1859 = vld [vmem:[#allocation2 + $0x80] sm:$0xff]
  %v1860 = vld [vmem:[#allocation2 + $0x88] sm:$0xff]
  %v1861 = vld [vmem:[#allocation2 + $0x90] sm:$0xff]
  %v1862 = vld [vmem:[#allocation2 + $0x98] sm:$0xff]
  %v1863 = vld [vmem:[#allocation2 + $0xa0] sm:$0xff]
  %v1864 = vld [vmem:[#allocation2 + $0xa8] sm:$0xff]
  %v1865 = vld [vmem:[#allocation2 + $0xb0] sm:$0xff]
  %v1866 = vld [vmem:[#allocation2 + $0xb8] sm:$0xff]
  %v1867 = vld [vmem:[#allocation2 + $0xc0] sm:$0xff]
  %v1868 = vld [vmem:[#allocation2 + $0xc8] sm:$0xff]
  %v1869 = vld [vmem:[#allocation2 + $0xd0] sm:$0xff]
  %v1870 = vld [vmem:[#allocation2 + $0xd8] sm:$0xff]
  %v1871 = vld [vmem:[#allocation2 + $0xe0] sm:$0xff]
  %v1872 = vld [vmem:[#allocation2 + $0xe8] sm:$0xff]
  %v1873 = vld [vmem:[#allocation2 + $0xf0] sm:$0xff]
  %v1874 = vld [vmem:[#allocation2 + $0xf8] sm:$0xff]
  %v1875 = vld [vmem:[#allocation2 + $0x100] sm:$0xff]
  %v1876 = vld [vmem:[#allocation2 + $0x108] sm:$0xff]
  %v1877 = vld [vmem:[#allocation2 + $0x110] sm:$0xff]
  %v1878 = vld [vmem:[#allocation2 + $0x118] sm:$0xff]
  %v1879 = vld [vmem:[#allocation2 + $0x120] sm:$0xff]
  %v1880 = vld [vmem:[#allocation2 + $0x128] sm:$0xff]
  %v1881 = vld [vmem:[#allocation2 + $0x130] sm:$0xff]
  %v1882 = vld [vmem:[#allocation2 + $0x138] sm:$0xff]
  %v1883 = vld [vmem:[#allocation2 + $0x140] sm:$0xff]
  %v1884 = vld [vmem:[#allocation2 + $0x148] sm:$0xff]
  %v1885 = vld [vmem:[#allocation2 + $0x150] sm:$0xff]
  %v1886 = vld [vmem:[#allocation2 + $0x158] sm:$0xff]
  %v1887 = vld [vmem:[#allocation2 + $0x160] sm:$0xff]
  %v1888 = vld [vmem:[#allocation2 + $0x168] sm:$0xff]
  %v1889 = vld [vmem:[#allocation2 + $0x170] sm:$0xff]
  %v1890 = vld [vmem:[#allocation2 + $0x178] sm:$0xff]
  %v1891 = vld [vmem:[#allocation2 + $0x180] sm:$0xff]
  %v1892 = vld [vmem:[#allocation2 + $0x188] sm:$0xff]
  %v1893 = vld [vmem:[#allocation2 + $0x190] sm:$0xff]
  %v1894 = vld [vmem:[#allocation2 + $0x198] sm:$0xff]
  %v1895 = vld [vmem:[#allocation2 + $0x1a0] sm:$0xff]
  %v1896 = vld [vmem:[#allocation2 + $0x1a8] sm:$0xff]
  %v1897 = vld [vmem:[#allocation2 + $0x1b0] sm:$0xff]
  %v1898 = vld [vmem:[#allocation2 + $0x1b8] sm:$0xff]
  %v1899 = vld [vmem:[#allocation2 + $0x1c0] sm:$0xff]
  %v1900 = vld [vmem:[#allocation2 + $0x1c8] sm:$0xff]
  %v1901 = vld [vmem:[#allocation2 + $0x1d0] sm:$0xff]
  %v1902 = vld [vmem:[#allocation2 + $0x1d8] sm:$0xff]
  %v1903 = vld [vmem:[#allocation2 + $0x1e0] sm:$0xff]
  %v1904 = vld [vmem:[#allocation2 + $0x1e8] sm:$0xff]
  %v1905 = vld [vmem:[#allocation2 + $0x1f0] sm:$0xff]
  %v1906 = vld [vmem:[#allocation2 + $0x1f8] sm:$0xff]
  %v1907 = vunpack.c.l.s8.bf16 %v1843
  %v1908 = vunpack.c.l.s8.bf16 %v1844
  %v1909 = vunpack.c.l.s8.bf16 %v1845
  %v1910 = vunpack.c.l.s8.bf16 %v1846
  %v1911 = vunpack.c.l.s8.bf16 %v1847
  %v1912 = vunpack.c.l.s8.bf16 %v1848
  %v1913 = vunpack.c.l.s8.bf16 %v1849
  %v1914 = vunpack.c.l.s8.bf16 %v1850
  %v1915 = vunpack.c.h.s8.bf16 %v1843
  %v1916 = vunpack.c.h.s8.bf16 %v1844
  %v1917 = vunpack.c.h.s8.bf16 %v1845
  %v1918 = vunpack.c.h.s8.bf16 %v1846
  %v1919 = vunpack.c.h.s8.bf16 %v1847
  %v1920 = vunpack.c.h.s8.bf16 %v1848
  %v1921 = vunpack.c.h.s8.bf16 %v1849
  %v1922 = vunpack.c.h.s8.bf16 %v1850
  %v1923 = vunpack.c.l.s8.bf16 %v1851
  %v1924 = vunpack.c.l.s8.bf16 %v1852
  %v1925 = vunpack.c.l.s8.bf16 %v1853
  %v1926 = vunpack.c.l.s8.bf16 %v1854
  %v1927 = vunpack.c.l.s8.bf16 %v1855
  %v1928 = vunpack.c.l.s8.bf16 %v1856
  %v1929 = vunpack.c.l.s8.bf16 %v1857
  %v1930 = vunpack.c.l.s8.bf16 %v1858
  %v1931 = vunpack.c.h.s8.bf16 %v1851
  %v1932 = vunpack.c.h.s8.bf16 %v1852
  %v1933 = vunpack.c.h.s8.bf16 %v1853
  %v1934 = vunpack.c.h.s8.bf16 %v1854
  %v1935 = vunpack.c.h.s8.bf16 %v1855
  %v1936 = vunpack.c.h.s8.bf16 %v1856
  %v1937 = vunpack.c.h.s8.bf16 %v1857
  %v1938 = vunpack.c.h.s8.bf16 %v1858
  %v1939 = vunpack.c.l.s8.bf16 %v1859
  %v1940 = vunpack.c.l.s8.bf16 %v1860
  %v1941 = vunpack.c.l.s8.bf16 %v1861
  %v1942 = vunpack.c.l.s8.bf16 %v1862
  %v1943 = vunpack.c.l.s8.bf16 %v1863
  %v1944 = vunpack.c.l.s8.bf16 %v1864
  %v1945 = vunpack.c.l.s8.bf16 %v1865
  %v1946 = vunpack.c.l.s8.bf16 %v1866
  %v1947 = vunpack.c.h.s8.bf16 %v1859
  %v1948 = vunpack.c.h.s8.bf16 %v1860
  %v1949 = vunpack.c.h.s8.bf16 %v1861
  %v1950 = vunpack.c.h.s8.bf16 %v1862
  %v1951 = vunpack.c.h.s8.bf16 %v1863
  %v1952 = vunpack.c.h.s8.bf16 %v1864
  %v1953 = vunpack.c.h.s8.bf16 %v1865
  %v1954 = vunpack.c.h.s8.bf16 %v1866
  %v1955 = vunpack.c.l.s8.bf16 %v1867
  %v1956 = vunpack.c.l.s8.bf16 %v1868
  %v1957 = vunpack.c.l.s8.bf16 %v1869
  %v1958 = vunpack.c.l.s8.bf16 %v1870
  %v1959 = vunpack.c.l.s8.bf16 %v1871
  %v1960 = vunpack.c.l.s8.bf16 %v1872
  %v1961 = vunpack.c.l.s8.bf16 %v1873
  %v1962 = vunpack.c.l.s8.bf16 %v1874
  %v1963 = vunpack.c.h.s8.bf16 %v1867
  %v1964 = vunpack.c.h.s8.bf16 %v1868
  %v1965 = vunpack.c.h.s8.bf16 %v1869
  %v1966 = vunpack.c.h.s8.bf16 %v1870
  %v1967 = vunpack.c.h.s8.bf16 %v1871
  %v1968 = vunpack.c.h.s8.bf16 %v1872
  %v1969 = vunpack.c.h.s8.bf16 %v1873
  %v1970 = vunpack.c.h.s8.bf16 %v1874
  %v1971 = vunpack.c.l.s8.bf16 %v1875
  %v1972 = vunpack.c.l.s8.bf16 %v1876
  %v1973 = vunpack.c.l.s8.bf16 %v1877
  %v1974 = vunpack.c.l.s8.bf16 %v1878
  %v1975 = vunpack.c.l.s8.bf16 %v1879
  %v1976 = vunpack.c.l.s8.bf16 %v1880
  %v1977 = vunpack.c.l.s8.bf16 %v1881
  %v1978 = vunpack.c.l.s8.bf16 %v1882
  %v1979 = vunpack.c.h.s8.bf16 %v1875
  %v1980 = vunpack.c.h.s8.bf16 %v1876
  %v1981 = vunpack.c.h.s8.bf16 %v1877
  %v1982 = vunpack.c.h.s8.bf16 %v1878
  %v1983 = vunpack.c.h.s8.bf16 %v1879
  %v1984 = vunpack.c.h.s8.bf16 %v1880
  %v1985 = vunpack.c.h.s8.bf16 %v1881
  %v1986 = vunpack.c.h.s8.bf16 %v1882
  %v1987 = vunpack.c.l.s8.bf16 %v1883
  %v1988 = vunpack.c.l.s8.bf16 %v1884
  %v1989 = vunpack.c.l.s8.bf16 %v1885
  %v1990 = vunpack.c.l.s8.bf16 %v1886
  %v1991 = vunpack.c.l.s8.bf16 %v1887
  %v1992 = vunpack.c.l.s8.bf16 %v1888
  %v1993 = vunpack.c.l.s8.bf16 %v1889
  %v1994 = vunpack.c.l.s8.bf16 %v1890
  %v1995 = vunpack.c.h.s8.bf16 %v1883
  %v1996 = vunpack.c.h.s8.bf16 %v1884
  %v1997 = vunpack.c.h.s8.bf16 %v1885
  %v1998 = vunpack.c.h.s8.bf16 %v1886
  %v1999 = vunpack.c.h.s8.bf16 %v1887
  %v2000 = vunpack.c.h.s8.bf16 %v1888
  %v2001 = vunpack.c.h.s8.bf16 %v1889
  %v2002 = vunpack.c.h.s8.bf16 %v1890
  %v2003 = vunpack.c.l.s8.bf16 %v1891
  %v2004 = vunpack.c.l.s8.bf16 %v1892
  %v2005 = vunpack.c.l.s8.bf16 %v1893
  %v2006 = vunpack.c.l.s8.bf16 %v1894
  %v2007 = vunpack.c.l.s8.bf16 %v1895
  %v2008 = vunpack.c.l.s8.bf16 %v1896
  %v2009 = vunpack.c.l.s8.bf16 %v1897
  %v2010 = vunpack.c.l.s8.bf16 %v1898
  %v2011 = vunpack.c.h.s8.bf16 %v1891
  %v2012 = vunpack.c.h.s8.bf16 %v1892
  %v2013 = vunpack.c.h.s8.bf16 %v1893
  %v2014 = vunpack.c.h.s8.bf16 %v1894
  %v2015 = vunpack.c.h.s8.bf16 %v1895
  %v2016 = vunpack.c.h.s8.bf16 %v1896
  %v2017 = vunpack.c.h.s8.bf16 %v1897
  %v2018 = vunpack.c.h.s8.bf16 %v1898
  %v2019 = vunpack.c.l.s8.bf16 %v1899
  %v2020 = vunpack.c.l.s8.bf16 %v1900
  %v2021 = vunpack.c.l.s8.bf16 %v1901
  %v2022 = vunpack.c.l.s8.bf16 %v1902
  %v2023 = vunpack.c.l.s8.bf16 %v1903
  %v2024 = vunpack.c.l.s8.bf16 %v1904
  %v2025 = vunpack.c.l.s8.bf16 %v1905
  %v2026 = vunpack.c.l.s8.bf16 %v1906
  %v2027 = vunpack.c.h.s8.bf16 %v1899
  %v2028 = vunpack.c.h.s8.bf16 %v1900
  %v2029 = vunpack.c.h.s8.bf16 %v1901
  %v2030 = vunpack.c.h.s8.bf16 %v1902
  %v2031 = vunpack.c.h.s8.bf16 %v1903
  %v2032 = vunpack.c.h.s8.bf16 %v1904
  %v2033 = vunpack.c.h.s8.bf16 %v1905
  %v2034 = vunpack.c.h.s8.bf16 %v1906
  %2035 = vmatprep.subr.bf16.mxu0 %v1908
  %2036 = vmatpush1.bf16.msra.mxu0 %v1907
  %2037 = vmatprep.subr.bf16.mxu0 %v1916
  %2038 = vmatpush1.bf16.msra.mxu0 %v1915
  %2039 = vmatprep.subr.bf16.mxu0 %v1924
  %2040 = vmatpush1.bf16.msra.mxu0 %v1923
  %2041 = vmatprep.subr.bf16.mxu0 %v1932
  %2042 = vmatpush1.bf16.msra.mxu0 %v1931
  %2043 = vmatprep.subr.bf16.mxu0 %v1940
  %2044 = vmatpush1.bf16.msra.mxu0 %v1939
  %2045 = vmatprep.subr.bf16.mxu0 %v1948
  %2046 = vmatpush1.bf16.msra.mxu0 %v1947
  %2047 = vmatprep.subr.bf16.mxu0 %v1956
  %2048 = vmatpush1.bf16.msra.mxu0 %v1955
  %2049 = vmatprep.subr.bf16.mxu0 %v1964
  %2050 = vmatpush1.bf16.msra.mxu0 %v1963
  %2051 = vmatprep.subr.bf16.mxu0 %v1972
  %2052 = vmatpush1.bf16.msra.mxu0 %v1971
  %2053 = vmatprep.subr.bf16.mxu0 %v1980
  %2054 = vmatpush1.bf16.msra.mxu0 %v1979
  %2055 = vmatprep.subr.bf16.mxu0 %v1988
  %2056 = vmatpush1.bf16.msra.mxu0 %v1987
  %2057 = vmatprep.subr.bf16.mxu0 %v1996
  %2058 = vmatpush1.bf16.msra.mxu0 %v1995
  %2059 = vmatprep.subr.bf16.mxu0 %v2004
  %2060 = vmatpush1.bf16.msra.mxu0 %v2003
  %2061 = vmatprep.subr.bf16.mxu0 %v2012
  %2062 = vmatpush1.bf16.msra.mxu0 %v2011
  %2063 = vmatprep.subr.bf16.mxu0 %v2020
  %2064 = vmatpush1.bf16.msra.mxu0 %v2019
  %2065 = vmatprep.subr.bf16.mxu0 %v2028
  %2066 = vmatpush1.bf16.msra.mxu0 %v2027
  %2067 = vmatprep.mubr.bf16.mxu0 %v1842
  %2068 = vmatmul.mubr.bf16.gmra.mrb[0].mxu0 %v1841
  %v2069 = vpop.f32.mrb[0].mxu0
  %v2070 = vadd.f32 0.0, %v2069
  %v2071 = vpop.f32.mrb[0].mxu0
  %v2072 = vadd.f32 0.0, %v2071
  %v2073 = vpop.f32.mrb[0].mxu0
  %v2074 = vpop.f32.mrb[0].mxu0
  %2075 = vdwg.mxu0
  %2076 = vmatprep.subr.bf16.mxu0 %v1910
  %2077 = vmatpush1.bf16.msra.mxu0 %v1909
  %2078 = vmatprep.subr.bf16.mxu0 %v1918
  %2079 = vmatpush1.bf16.msra.mxu0 %v1917
  %2080 = vmatprep.subr.bf16.mxu0 %v1926
  %2081 = vmatpush1.bf16.msra.mxu0 %v1925
  %2082 = vmatprep.subr.bf16.mxu0 %v1934
  %2083 = vmatpush1.bf16.msra.mxu0 %v1933
  %2084 = vmatprep.subr.bf16.mxu0 %v1942
  %2085 = vmatpush1.bf16.msra.mxu0 %v1941
  %2086 = vmatprep.subr.bf16.mxu0 %v1950
  %2087 = vmatpush1.bf16.msra.mxu0 %v1949
  %2088 = vmatprep.subr.bf16.mxu0 %v1958
  %2089 = vmatpush1.bf16.msra.mxu0 %v1957
  %2090 = vmatprep.subr.bf16.mxu0 %v1966
  %2091 = vmatpush1.bf16.msra.mxu0 %v1965
  %2092 = vmatprep.subr.bf16.mxu0 %v1974
  %2093 = vmatpush1.bf16.msra.mxu0 %v1973
  %2094 = vmatprep.subr.bf16.mxu0 %v1982
  %2095 = vmatpush1.bf16.msra.mxu0 %v1981
  %2096 = vmatprep.subr.bf16.mxu0 %v1990
  %2097 = vmatpush1.bf16.msra.mxu0 %v1989
  %2098 = vmatprep.subr.bf16.mxu0 %v1998
  %2099 = vmatpush1.bf16.msra.mxu0 %v1997
  %2100 = vmatprep.subr.bf16.mxu0 %v2006
  %2101 = vmatpush1.bf16.msra.mxu0 %v2005
  %2102 = vmatprep.subr.bf16.mxu0 %v2014
  %2103 = vmatpush1.bf16.msra.mxu0 %v2013
  %2104 = vmatprep.subr.bf16.mxu0 %v2022
  %2105 = vmatpush1.bf16.msra.mxu0 %v2021
  %2106 = vmatprep.subr.bf16.mxu0 %v2030
  %2107 = vmatpush1.bf16.msra.mxu0 %v2029
  %2108 = vmatprep.mubr.bf16.mxu0 %v1842
  %2109 = vmatmul.mubr.bf16.gmra.mrb[0].mxu0 %v1841
  %v2110 = vpop.f32.mrb[0].mxu0
  %v2111 = vadd.f32 0.0, %v2110
  %v2112 = vpop.f32.mrb[0].mxu0
  %v2113 = vadd.f32 0.0, %v2112
  %v2114 = vpop.f32.mrb[0].mxu0
  %v2115 = vpop.f32.mrb[0].mxu0
  %2116 = vdwg.mxu0
  %2117 = vmatprep.subr.bf16.mxu0 %v1912
  %2118 = vmatpush1.bf16.msra.mxu0 %v1911
  %2119 = vmatprep.subr.bf16.mxu0 %v1920
  %2120 = vmatpush1.bf16.msra.mxu0 %v1919
  %2121 = vmatprep.subr.bf16.mxu0 %v1928
  %2122 = vmatpush1.bf16.msra.mxu0 %v1927
  %2123 = vmatprep.subr.bf16.mxu0 %v1936
  %2124 = vmatpush1.bf16.msra.mxu0 %v1935
  %2125 = vmatprep.subr.bf16.mxu0 %v1944
  %2126 = vmatpush1.bf16.msra.mxu0 %v1943
  %2127 = vmatprep.subr.bf16.mxu0 %v1952
  %2128 = vmatpush1.bf16.msra.mxu0 %v1951
  %2129 = vmatprep.subr.bf16.mxu0 %v1960
  %2130 = vmatpush1.bf16.msra.mxu0 %v1959
  %2131 = vmatprep.subr.bf16.mxu0 %v1968
  %2132 = vmatpush1.bf16.msra.mxu0 %v1967
  %2133 = vmatprep.subr.bf16.mxu0 %v1976
  %2134 = vmatpush1.bf16.msra.mxu0 %v1975
  %2135 = vmatprep.subr.bf16.mxu0 %v1984
  %2136 = vmatpush1.bf16.msra.mxu0 %v1983
  %2137 = vmatprep.subr.bf16.mxu0 %v1992
  %2138 = vmatpush1.bf16.msra.mxu0 %v1991
  %2139 = vmatprep.subr.bf16.mxu0 %v2000
  %2140 = vmatpush1.bf16.msra.mxu0 %v1999
  %2141 = vmatprep.subr.bf16.mxu0 %v2008
  %2142 = vmatpush1.bf16.msra.mxu0 %v2007
  %2143 = vmatprep.subr.bf16.mxu0 %v2016
  %2144 = vmatpush1.bf16.msra.mxu0 %v2015
  %2145 = vmatprep.subr.bf16.mxu0 %v2024
  %2146 = vmatpush1.bf16.msra.mxu0 %v2023
  %2147 = vmatprep.subr.bf16.mxu0 %v2032
  %2148 = vmatpush1.bf16.msra.mxu0 %v2031
  %2149 = vmatprep.mubr.bf16.mxu0 %v1842
  %2150 = vmatmul.mubr.bf16.gmra.mrb[0].mxu0 %v1841
  %v2151 = vpop.f32.mrb[0].mxu0
  %v2152 = vadd.f32 0.0, %v2151
  %v2153 = vpop.f32.mrb[0].mxu0
  %v2154 = vadd.f32 0.0, %v2153
  %v2155 = vpop.f32.mrb[0].mxu0
  %v2156 = vpop.f32.mrb[0].mxu0
  %2157 = vdwg.mxu0
  %2158 = vmatprep.subr.bf16.mxu0 %v1914
  %2159 = vmatpush1.bf16.msra.mxu0 %v1913
  %2160 = vmatprep.subr.bf16.mxu0 %v1922
  %2161 = vmatpush1.bf16.msra.mxu0 %v1921
  %2162 = vmatprep.subr.bf16.mxu0 %v1930
  %2163 = vmatpush1.bf16.msra.mxu0 %v1929
  %2164 = vmatprep.subr.bf16.mxu0 %v1938
  %2165 = vmatpush1.bf16.msra.mxu0 %v1937
  %2166 = vmatprep.subr.bf16.mxu0 %v1946
  %2167 = vmatpush1.bf16.msra.mxu0 %v1945
  %2168 = vmatprep.subr.bf16.mxu0 %v1954
  %2169 = vmatpush1.bf16.msra.mxu0 %v1953
  %2170 = vmatprep.subr.bf16.mxu0 %v1962
  %2171 = vmatpush1.bf16.msra.mxu0 %v1961
  %2172 = vmatprep.subr.bf16.mxu0 %v1970
  %2173 = vmatpush1.bf16.msra.mxu0 %v1969
  %2174 = vmatprep.subr.bf16.mxu0 %v1978
  %2175 = vmatpush1.bf16.msra.mxu0 %v1977
  %2176 = vmatprep.subr.bf16.mxu0 %v1986
  %2177 = vmatpush1.bf16.msra.mxu0 %v1985
  %2178 = vmatprep.subr.bf16.mxu0 %v1994
  %2179 = vmatpush1.bf16.msra.mxu0 %v1993
  %2180 = vmatprep.subr.bf16.mxu0 %v2002
  %2181 = vmatpush1.bf16.msra.mxu0 %v2001
  %2182 = vmatprep.subr.bf16.mxu0 %v2010
  %2183 = vmatpush1.bf16.msra.mxu0 %v2009
  %2184 = vmatprep.subr.bf16.mxu0 %v2018
  %2185 = vmatpush1.bf16.msra.mxu0 %v2017
  %2186 = vmatprep.subr.bf16.mxu0 %v2026
  %2187 = vmatpush1.bf16.msra.mxu0 %v2025
  %2188 = vmatprep.subr.bf16.mxu0 %v2034
  %2189 = vmatpush1.bf16.msra.mxu0 %v2033
  %2190 = vmatprep.mubr.bf16.mxu0 %v1842
  %2191 = vmatmul.mubr.bf16.gmra.mrb[0].mxu0 %v1841
  %v2192 = vpop.f32.mrb[0].mxu0
  %v2193 = vadd.f32 0.0, %v2192
  %v2194 = vpop.f32.mrb[0].mxu0
  %v2195 = vadd.f32 0.0, %v2194
  %v2196 = vpop.f32.mrb[0].mxu0
  %v2197 = vpop.f32.mrb[0].mxu0
  %2198 = vdwg.mxu0
  %v2200 = vlaneseq
  %v2201 = vshrl.u32 %v2200, 7
  %v2202 = vsub.s32 0, %v2201
  %v2203 = vrot.slane %v763, %v2202
  %v2204 = vlaneseq
  %v2205 = vshrl.u32 %v2204, 7
  %v2206 = vsub.s32 1, %v2205
  %v2207 = vrot.slane %v763, %v2206
  %v2208 = vlaneseq
  %v2209 = vshrl.u32 %v2208, 7
  %v2210 = vsub.s32 2, %v2209
  %v2211 = vrot.slane %v763, %v2210
  %v2212 = vlaneseq
  %v2213 = vshrl.u32 %v2212, 7
  %v2214 = vsub.s32 3, %v2213
  %v2215 = vrot.slane %v763, %v2214
  %v2216 = vlaneseq
  %v2217 = vshrl.u32 %v2216, 7
  %v2218 = vsub.s32 4, %v2217
  %v2219 = vrot.slane %v763, %v2218
  %v2220 = vlaneseq
  %v2221 = vshrl.u32 %v2220, 7
  %v2222 = vsub.s32 5, %v2221
  %v2223 = vrot.slane %v763, %v2222
  %v2224 = vlaneseq
  %v2225 = vshrl.u32 %v2224, 7
  %v2226 = vsub.s32 6, %v2225
  %v2227 = vrot.slane %v763, %v2226
  %v2228 = vlaneseq
  %v2229 = vshrl.u32 %v2228, 7
  %v2230 = vsub.s32 7, %v2229
  %v2231 = vrot.slane %v763, %v2230
  %v2240 = vmul.f32 %v2070, %v2203
  %v2241 = vmul.f32 %v2072, %v2207
  %v2242 = vmul.f32 %v2111, %v2211
  %v2243 = vmul.f32 %v2113, %v2215
  %v2244 = vmul.f32 %v2152, %v2219
  %v2245 = vmul.f32 %v2154, %v2223
  %v2246 = vmul.f32 %v2193, %v2227
  %v2247 = vmul.f32 %v2195, %v2231
  %v2249 = vlaneseq
  %v2250 = vshrl.u32 %v2249, 7
  %v2251 = vsub.s32 0, %v2250
  %v2252 = vrot.slane %v751, %v2251
  %v2253 = vlaneseq
  %v2254 = vshrl.u32 %v2253, 7
  %v2255 = vsub.s32 1, %v2254
  %v2256 = vrot.slane %v751, %v2255
  %v2257 = vlaneseq
  %v2258 = vshrl.u32 %v2257, 7
  %v2259 = vsub.s32 2, %v2258
  %v2260 = vrot.slane %v751, %v2259
  %v2261 = vlaneseq
  %v2262 = vshrl.u32 %v2261, 7
  %v2263 = vsub.s32 3, %v2262
  %v2264 = vrot.slane %v751, %v2263
  %v2265 = vlaneseq
  %v2266 = vshrl.u32 %v2265, 7
  %v2267 = vsub.s32 4, %v2266
  %v2268 = vrot.slane %v751, %v2267
  %v2269 = vlaneseq
  %v2270 = vshrl.u32 %v2269, 7
  %v2271 = vsub.s32 5, %v2270
  %v2272 = vrot.slane %v751, %v2271
  %v2273 = vlaneseq
  %v2274 = vshrl.u32 %v2273, 7
  %v2275 = vsub.s32 6, %v2274
  %v2276 = vrot.slane %v751, %v2275
  %v2277 = vlaneseq
  %v2278 = vshrl.u32 %v2277, 7
  %v2279 = vsub.s32 7, %v2278
  %v2280 = vrot.slane %v751, %v2279
  %v2289 = vadd.f32 %v2240, %v2252
  %v2290 = vadd.f32 %v2241, %v2256
  %v2291 = vadd.f32 %v2242, %v2260
  %v2292 = vadd.f32 %v2243, %v2264
  %v2293 = vadd.f32 %v2244, %v2268
  %v2294 = vadd.f32 %v2245, %v2272
  %v2295 = vadd.f32 %v2246, %v2276
  %v2296 = vadd.f32 %v2247, %v2280
  %v2297 = vmax.f32 %v2289, 0.0
  %v2298 = vmax.f32 %v2290, 0.0
  %v2299 = vmax.f32 %v2291, 0.0
  %v2300 = vmax.f32 %v2292, 0.0
  %v2301 = vmax.f32 %v2293, 0.0
  %v2302 = vmax.f32 %v2294, 0.0
  %v2303 = vmax.f32 %v2295, 0.0
  %v2304 = vmax.f32 %v2296, 0.0
  %s2305 = smul.u32 2, 128
  %s2306 = smul.u32 %s2305, 8
  %s2307 = sshll.u32 %s2306, 4
  %2308 = dma.done %s191, %s2307
  %v2309 = vpack.c.bf16 %v2297, %v2297
  %v2310 = vpack.c.bf16 %v2298, %v2298
  %v2311 = vpack.c.bf16 %v2299, %v2299
  %v2312 = vpack.c.bf16 %v2300, %v2300
  %v2313 = vpack.c.bf16 %v2301, %v2301
  %v2314 = vpack.c.bf16 %v2302, %v2302
  %v2315 = vpack.c.bf16 %v2303, %v2303
  %v2316 = vpack.c.bf16 %v2304, %v2304
  %v2317 = vld [vmem:[#allocation3] sm:$0xff]
  %v2318 = vld [vmem:[#allocation3 + $0x8] sm:$0xff]
  %v2319 = vld [vmem:[#allocation3 + $0x10] sm:$0xff]
  %v2320 = vld [vmem:[#allocation3 + $0x18] sm:$0xff]
  %v2321 = vld [vmem:[#allocation3 + $0x20] sm:$0xff]
  %v2322 = vld [vmem:[#allocation3 + $0x28] sm:$0xff]
  %v2323 = vld [vmem:[#allocation3 + $0x30] sm:$0xff]
  %v2324 = vld [vmem:[#allocation3 + $0x38] sm:$0xff]
  %v2325 = vld [vmem:[#allocation3 + $0x40] sm:$0xff]
  %v2326 = vld [vmem:[#allocation3 + $0x48] sm:$0xff]
  %v2327 = vld [vmem:[#allocation3 + $0x50] sm:$0xff]
  %v2328 = vld [vmem:[#allocation3 + $0x58] sm:$0xff]
  %v2329 = vld [vmem:[#allocation3 + $0x60] sm:$0xff]
  %v2330 = vld [vmem:[#allocation3 + $0x68] sm:$0xff]
  %v2331 = vld [vmem:[#allocation3 + $0x70] sm:$0xff]
  %v2332 = vld [vmem:[#allocation3 + $0x78] sm:$0xff]
  %v2333 = vld [vmem:[#allocation3 + $0x80] sm:$0xff]
  %v2334 = vld [vmem:[#allocation3 + $0x88] sm:$0xff]
  %v2335 = vld [vmem:[#allocation3 + $0x90] sm:$0xff]
  %v2336 = vld [vmem:[#allocation3 + $0x98] sm:$0xff]
  %v2337 = vld [vmem:[#allocation3 + $0xa0] sm:$0xff]
  %v2338 = vld [vmem:[#allocation3 + $0xa8] sm:$0xff]
  %v2339 = vld [vmem:[#allocation3 + $0xb0] sm:$0xff]
  %v2340 = vld [vmem:[#allocation3 + $0xb8] sm:$0xff]
  %v2341 = vld [vmem:[#allocation3 + $0xc0] sm:$0xff]
  %v2342 = vld [vmem:[#allocation3 + $0xc8] sm:$0xff]
  %v2343 = vld [vmem:[#allocation3 + $0xd0] sm:$0xff]
  %v2344 = vld [vmem:[#allocation3 + $0xd8] sm:$0xff]
  %v2345 = vld [vmem:[#allocation3 + $0xe0] sm:$0xff]
  %v2346 = vld [vmem:[#allocation3 + $0xe8] sm:$0xff]
  %v2347 = vld [vmem:[#allocation3 + $0xf0] sm:$0xff]
  %v2348 = vld [vmem:[#allocation3 + $0xf8] sm:$0xff]
  %v2349 = vld [vmem:[#allocation3 + $0x100] sm:$0xff]
  %v2350 = vld [vmem:[#allocation3 + $0x108] sm:$0xff]
  %v2351 = vld [vmem:[#allocation3 + $0x110] sm:$0xff]
  %v2352 = vld [vmem:[#allocation3 + $0x118] sm:$0xff]
  %v2353 = vld [vmem:[#allocation3 + $0x120] sm:$0xff]
  %v2354 = vld [vmem:[#allocation3 + $0x128] sm:$0xff]
  %v2355 = vld [vmem:[#allocation3 + $0x130] sm:$0xff]
  %v2356 = vld [vmem:[#allocation3 + $0x138] sm:$0xff]
  %v2357 = vld [vmem:[#allocation3 + $0x140] sm:$0xff]
  %v2358 = vld [vmem:[#allocation3 + $0x148] sm:$0xff]
  %v2359 = vld [vmem:[#allocation3 + $0x150] sm:$0xff]
  %v2360 = vld [vmem:[#allocation3 + $0x158] sm:$0xff]
  %v2361 = vld [vmem:[#allocation3 + $0x160] sm:$0xff]
  %v2362 = vld [vmem:[#allocation3 + $0x168] sm:$0xff]
  %v2363 = vld [vmem:[#allocation3 + $0x170] sm:$0xff]
  %v2364 = vld [vmem:[#allocation3 + $0x178] sm:$0xff]
  %v2365 = vld [vmem:[#allocation3 + $0x180] sm:$0xff]
  %v2366 = vld [vmem:[#allocation3 + $0x188] sm:$0xff]
  %v2367 = vld [vmem:[#allocation3 + $0x190] sm:$0xff]
  %v2368 = vld [vmem:[#allocation3 + $0x198] sm:$0xff]
  %v2369 = vld [vmem:[#allocation3 + $0x1a0] sm:$0xff]
  %v2370 = vld [vmem:[#allocation3 + $0x1a8] sm:$0xff]
  %v2371 = vld [vmem:[#allocation3 + $0x1b0] sm:$0xff]
  %v2372 = vld [vmem:[#allocation3 + $0x1b8] sm:$0xff]
  %v2373 = vld [vmem:[#allocation3 + $0x1c0] sm:$0xff]
  %v2374 = vld [vmem:[#allocation3 + $0x1c8] sm:$0xff]
  %v2375 = vld [vmem:[#allocation3 + $0x1d0] sm:$0xff]
  %v2376 = vld [vmem:[#allocation3 + $0x1d8] sm:$0xff]
  %v2377 = vld [vmem:[#allocation3 + $0x1e0] sm:$0xff]
  %v2378 = vld [vmem:[#allocation3 + $0x1e8] sm:$0xff]
  %v2379 = vld [vmem:[#allocation3 + $0x1f0] sm:$0xff]
  %v2380 = vld [vmem:[#allocation3 + $0x1f8] sm:$0xff]
  %v2381 = vld [vmem:[#allocation3 + $0x200] sm:$0xff]
  %v2382 = vld [vmem:[#allocation3 + $0x208] sm:$0xff]
  %v2383 = vld [vmem:[#allocation3 + $0x210] sm:$0xff]
  %v2384 = vld [vmem:[#allocation3 + $0x218] sm:$0xff]
  %v2385 = vld [vmem:[#allocation3 + $0x220] sm:$0xff]
  %v2386 = vld [vmem:[#allocation3 + $0x228] sm:$0xff]
  %v2387 = vld [vmem:[#allocation3 + $0x230] sm:$0xff]
  %v2388 = vld [vmem:[#allocation3 + $0x238] sm:$0xff]
  %v2389 = vld [vmem:[#allocation3 + $0x240] sm:$0xff]
  %v2390 = vld [vmem:[#allocation3 + $0x248] sm:$0xff]
  %v2391 = vld [vmem:[#allocation3 + $0x250] sm:$0xff]
  %v2392 = vld [vmem:[#allocation3 + $0x258] sm:$0xff]
  %v2393 = vld [vmem:[#allocation3 + $0x260] sm:$0xff]
  %v2394 = vld [vmem:[#allocation3 + $0x268] sm:$0xff]
  %v2395 = vld [vmem:[#allocation3 + $0x270] sm:$0xff]
  %v2396 = vld [vmem:[#allocation3 + $0x278] sm:$0xff]
  %v2397 = vld [vmem:[#allocation3 + $0x280] sm:$0xff]
  %v2398 = vld [vmem:[#allocation3 + $0x288] sm:$0xff]
  %v2399 = vld [vmem:[#allocation3 + $0x290] sm:$0xff]
  %v2400 = vld [vmem:[#allocation3 + $0x298] sm:$0xff]
  %v2401 = vld [vmem:[#allocation3 + $0x2a0] sm:$0xff]
  %v2402 = vld [vmem:[#allocation3 + $0x2a8] sm:$0xff]
  %v2403 = vld [vmem:[#allocation3 + $0x2b0] sm:$0xff]
  %v2404 = vld [vmem:[#allocation3 + $0x2b8] sm:$0xff]
  %v2405 = vld [vmem:[#allocation3 + $0x2c0] sm:$0xff]
  %v2406 = vld [vmem:[#allocation3 + $0x2c8] sm:$0xff]
  %v2407 = vld [vmem:[#allocation3 + $0x2d0] sm:$0xff]
  %v2408 = vld [vmem:[#allocation3 + $0x2d8] sm:$0xff]
  %v2409 = vld [vmem:[#allocation3 + $0x2e0] sm:$0xff]
  %v2410 = vld [vmem:[#allocation3 + $0x2e8] sm:$0xff]
  %v2411 = vld [vmem:[#allocation3 + $0x2f0] sm:$0xff]
  %v2412 = vld [vmem:[#allocation3 + $0x2f8] sm:$0xff]
  %v2413 = vld [vmem:[#allocation3 + $0x300] sm:$0xff]
  %v2414 = vld [vmem:[#allocation3 + $0x308] sm:$0xff]
  %v2415 = vld [vmem:[#allocation3 + $0x310] sm:$0xff]
  %v2416 = vld [vmem:[#allocation3 + $0x318] sm:$0xff]
  %v2417 = vld [vmem:[#allocation3 + $0x320] sm:$0xff]
  %v2418 = vld [vmem:[#allocation3 + $0x328] sm:$0xff]
  %v2419 = vld [vmem:[#allocation3 + $0x330] sm:$0xff]
  %v2420 = vld [vmem:[#allocation3 + $0x338] sm:$0xff]
  %v2421 = vld [vmem:[#allocation3 + $0x340] sm:$0xff]
  %v2422 = vld [vmem:[#allocation3 + $0x348] sm:$0xff]
  %v2423 = vld [vmem:[#allocation3 + $0x350] sm:$0xff]
  %v2424 = vld [vmem:[#allocation3 + $0x358] sm:$0xff]
  %v2425 = vld [vmem:[#allocation3 + $0x360] sm:$0xff]
  %v2426 = vld [vmem:[#allocation3 + $0x368] sm:$0xff]
  %v2427 = vld [vmem:[#allocation3 + $0x370] sm:$0xff]
  %v2428 = vld [vmem:[#allocation3 + $0x378] sm:$0xff]
  %v2429 = vld [vmem:[#allocation3 + $0x380] sm:$0xff]
  %v2430 = vld [vmem:[#allocation3 + $0x388] sm:$0xff]
  %v2431 = vld [vmem:[#allocation3 + $0x390] sm:$0xff]
  %v2432 = vld [vmem:[#allocation3 + $0x398] sm:$0xff]
  %v2433 = vld [vmem:[#allocation3 + $0x3a0] sm:$0xff]
  %v2434 = vld [vmem:[#allocation3 + $0x3a8] sm:$0xff]
  %v2435 = vld [vmem:[#allocation3 + $0x3b0] sm:$0xff]
  %v2436 = vld [vmem:[#allocation3 + $0x3b8] sm:$0xff]
  %v2437 = vld [vmem:[#allocation3 + $0x3c0] sm:$0xff]
  %v2438 = vld [vmem:[#allocation3 + $0x3c8] sm:$0xff]
  %v2439 = vld [vmem:[#allocation3 + $0x3d0] sm:$0xff]
  %v2440 = vld [vmem:[#allocation3 + $0x3d8] sm:$0xff]
  %v2441 = vld [vmem:[#allocation3 + $0x3e0] sm:$0xff]
  %v2442 = vld [vmem:[#allocation3 + $0x3e8] sm:$0xff]
  %v2443 = vld [vmem:[#allocation3 + $0x3f0] sm:$0xff]
  %v2444 = vld [vmem:[#allocation3 + $0x3f8] sm:$0xff]
  %v2445 = vld [vmem:[#allocation3 + $0x400] sm:$0xff]
  %v2446 = vld [vmem:[#allocation3 + $0x408] sm:$0xff]
  %v2447 = vld [vmem:[#allocation3 + $0x410] sm:$0xff]
  %v2448 = vld [vmem:[#allocation3 + $0x418] sm:$0xff]
  %v2449 = vld [vmem:[#allocation3 + $0x420] sm:$0xff]
  %v2450 = vld [vmem:[#allocation3 + $0x428] sm:$0xff]
  %v2451 = vld [vmem:[#allocation3 + $0x430] sm:$0xff]
  %v2452 = vld [vmem:[#allocation3 + $0x438] sm:$0xff]
  %v2453 = vld [vmem:[#allocation3 + $0x440] sm:$0xff]
  %v2454 = vld [vmem:[#allocation3 + $0x448] sm:$0xff]
  %v2455 = vld [vmem:[#allocation3 + $0x450] sm:$0xff]
  %v2456 = vld [vmem:[#allocation3 + $0x458] sm:$0xff]
  %v2457 = vld [vmem:[#allocation3 + $0x460] sm:$0xff]
  %v2458 = vld [vmem:[#allocation3 + $0x468] sm:$0xff]
  %v2459 = vld [vmem:[#allocation3 + $0x470] sm:$0xff]
  %v2460 = vld [vmem:[#allocation3 + $0x478] sm:$0xff]
  %v2461 = vld [vmem:[#allocation3 + $0x480] sm:$0xff]
  %v2462 = vld [vmem:[#allocation3 + $0x488] sm:$0xff]
  %v2463 = vld [vmem:[#allocation3 + $0x490] sm:$0xff]
  %v2464 = vld [vmem:[#allocation3 + $0x498] sm:$0xff]
  %v2465 = vld [vmem:[#allocation3 + $0x4a0] sm:$0xff]
  %v2466 = vld [vmem:[#allocation3 + $0x4a8] sm:$0xff]
  %v2467 = vld [vmem:[#allocation3 + $0x4b0] sm:$0xff]
  %v2468 = vld [vmem:[#allocation3 + $0x4b8] sm:$0xff]
  %v2469 = vld [vmem:[#allocation3 + $0x4c0] sm:$0xff]
  %v2470 = vld [vmem:[#allocation3 + $0x4c8] sm:$0xff]
  %v2471 = vld [vmem:[#allocation3 + $0x4d0] sm:$0xff]
  %v2472 = vld [vmem:[#allocation3 + $0x4d8] sm:$0xff]
  %v2473 = vld [vmem:[#allocation3 + $0x4e0] sm:$0xff]
  %v2474 = vld [vmem:[#allocation3 + $0x4e8] sm:$0xff]
  %v2475 = vld [vmem:[#allocation3 + $0x4f0] sm:$0xff]
  %v2476 = vld [vmem:[#allocation3 + $0x4f8] sm:$0xff]
  %v2477 = vld [vmem:[#allocation3 + $0x500] sm:$0xff]
  %v2478 = vld [vmem:[#allocation3 + $0x508] sm:$0xff]
  %v2479 = vld [vmem:[#allocation3 + $0x510] sm:$0xff]
  %v2480 = vld [vmem:[#allocation3 + $0x518] sm:$0xff]
  %v2481 = vld [vmem:[#allocation3 + $0x520] sm:$0xff]
  %v2482 = vld [vmem:[#allocation3 + $0x528] sm:$0xff]
  %v2483 = vld [vmem:[#allocation3 + $0x530] sm:$0xff]
  %v2484 = vld [vmem:[#allocation3 + $0x538] sm:$0xff]
  %v2485 = vld [vmem:[#allocation3 + $0x540] sm:$0xff]
  %v2486 = vld [vmem:[#allocation3 + $0x548] sm:$0xff]
  %v2487 = vld [vmem:[#allocation3 + $0x550] sm:$0xff]
  %v2488 = vld [vmem:[#allocation3 + $0x558] sm:$0xff]
  %v2489 = vld [vmem:[#allocation3 + $0x560] sm:$0xff]
  %v2490 = vld [vmem:[#allocation3 + $0x568] sm:$0xff]
  %v2491 = vld [vmem:[#allocation3 + $0x570] sm:$0xff]
  %v2492 = vld [vmem:[#allocation3 + $0x578] sm:$0xff]
  %v2493 = vld [vmem:[#allocation3 + $0x580] sm:$0xff]
  %v2494 = vld [vmem:[#allocation3 + $0x588] sm:$0xff]
  %v2495 = vld [vmem:[#allocation3 + $0x590] sm:$0xff]
  %v2496 = vld [vmem:[#allocation3 + $0x598] sm:$0xff]
  %v2497 = vld [vmem:[#allocation3 + $0x5a0] sm:$0xff]
  %v2498 = vld [vmem:[#allocation3 + $0x5a8] sm:$0xff]
  %v2499 = vld [vmem:[#allocation3 + $0x5b0] sm:$0xff]
  %v2500 = vld [vmem:[#allocation3 + $0x5b8] sm:$0xff]
  %v2501 = vld [vmem:[#allocation3 + $0x5c0] sm:$0xff]
  %v2502 = vld [vmem:[#allocation3 + $0x5c8] sm:$0xff]
  %v2503 = vld [vmem:[#allocation3 + $0x5d0] sm:$0xff]
  %v2504 = vld [vmem:[#allocation3 + $0x5d8] sm:$0xff]
  %v2505 = vld [vmem:[#allocation3 + $0x5e0] sm:$0xff]
  %v2506 = vld [vmem:[#allocation3 + $0x5e8] sm:$0xff]
  %v2507 = vld [vmem:[#allocation3 + $0x5f0] sm:$0xff]
  %v2508 = vld [vmem:[#allocation3 + $0x5f8] sm:$0xff]
  %v2509 = vld [vmem:[#allocation3 + $0x600] sm:$0xff]
  %v2510 = vld [vmem:[#allocation3 + $0x608] sm:$0xff]
  %v2511 = vld [vmem:[#allocation3 + $0x610] sm:$0xff]
  %v2512 = vld [vmem:[#allocation3 + $0x618] sm:$0xff]
  %v2513 = vld [vmem:[#allocation3 + $0x620] sm:$0xff]
  %v2514 = vld [vmem:[#allocation3 + $0x628] sm:$0xff]
  %v2515 = vld [vmem:[#allocation3 + $0x630] sm:$0xff]
  %v2516 = vld [vmem:[#allocation3 + $0x638] sm:$0xff]
  %v2517 = vld [vmem:[#allocation3 + $0x640] sm:$0xff]
  %v2518 = vld [vmem:[#allocation3 + $0x648] sm:$0xff]
  %v2519 = vld [vmem:[#allocation3 + $0x650] sm:$0xff]
  %v2520 = vld [vmem:[#allocation3 + $0x658] sm:$0xff]
  %v2521 = vld [vmem:[#allocation3 + $0x660] sm:$0xff]
  %v2522 = vld [vmem:[#allocation3 + $0x668] sm:$0xff]
  %v2523 = vld [vmem:[#allocation3 + $0x670] sm:$0xff]
  %v2524 = vld [vmem:[#allocation3 + $0x678] sm:$0xff]
  %v2525 = vld [vmem:[#allocation3 + $0x680] sm:$0xff]
  %v2526 = vld [vmem:[#allocation3 + $0x688] sm:$0xff]
  %v2527 = vld [vmem:[#allocation3 + $0x690] sm:$0xff]
  %v2528 = vld [vmem:[#allocation3 + $0x698] sm:$0xff]
  %v2529 = vld [vmem:[#allocation3 + $0x6a0] sm:$0xff]
  %v2530 = vld [vmem:[#allocation3 + $0x6a8] sm:$0xff]
  %v2531 = vld [vmem:[#allocation3 + $0x6b0] sm:$0xff]
  %v2532 = vld [vmem:[#allocation3 + $0x6b8] sm:$0xff]
  %v2533 = vld [vmem:[#allocation3 + $0x6c0] sm:$0xff]
  %v2534 = vld [vmem:[#allocation3 + $0x6c8] sm:$0xff]
  %v2535 = vld [vmem:[#allocation3 + $0x6d0] sm:$0xff]
  %v2536 = vld [vmem:[#allocation3 + $0x6d8] sm:$0xff]
  %v2537 = vld [vmem:[#allocation3 + $0x6e0] sm:$0xff]
  %v2538 = vld [vmem:[#allocation3 + $0x6e8] sm:$0xff]
  %v2539 = vld [vmem:[#allocation3 + $0x6f0] sm:$0xff]
  %v2540 = vld [vmem:[#allocation3 + $0x6f8] sm:$0xff]
  %v2541 = vld [vmem:[#allocation3 + $0x700] sm:$0xff]
  %v2542 = vld [vmem:[#allocation3 + $0x708] sm:$0xff]
  %v2543 = vld [vmem:[#allocation3 + $0x710] sm:$0xff]
  %v2544 = vld [vmem:[#allocation3 + $0x718] sm:$0xff]
  %v2545 = vld [vmem:[#allocation3 + $0x720] sm:$0xff]
  %v2546 = vld [vmem:[#allocation3 + $0x728] sm:$0xff]
  %v2547 = vld [vmem:[#allocation3 + $0x730] sm:$0xff]
  %v2548 = vld [vmem:[#allocation3 + $0x738] sm:$0xff]
  %v2549 = vld [vmem:[#allocation3 + $0x740] sm:$0xff]
  %v2550 = vld [vmem:[#allocation3 + $0x748] sm:$0xff]
  %v2551 = vld [vmem:[#allocation3 + $0x750] sm:$0xff]
  %v2552 = vld [vmem:[#allocation3 + $0x758] sm:$0xff]
  %v2553 = vld [vmem:[#allocation3 + $0x760] sm:$0xff]
  %v2554 = vld [vmem:[#allocation3 + $0x768] sm:$0xff]
  %v2555 = vld [vmem:[#allocation3 + $0x770] sm:$0xff]
  %v2556 = vld [vmem:[#allocation3 + $0x778] sm:$0xff]
  %v2557 = vld [vmem:[#allocation3 + $0x780] sm:$0xff]
  %v2558 = vld [vmem:[#allocation3 + $0x788] sm:$0xff]
  %v2559 = vld [vmem:[#allocation3 + $0x790] sm:$0xff]
  %v2560 = vld [vmem:[#allocation3 + $0x798] sm:$0xff]
  %v2561 = vld [vmem:[#allocation3 + $0x7a0] sm:$0xff]
  %v2562 = vld [vmem:[#allocation3 + $0x7a8] sm:$0xff]
  %v2563 = vld [vmem:[#allocation3 + $0x7b0] sm:$0xff]
  %v2564 = vld [vmem:[#allocation3 + $0x7b8] sm:$0xff]
  %v2565 = vld [vmem:[#allocation3 + $0x7c0] sm:$0xff]
  %v2566 = vld [vmem:[#allocation3 + $0x7c8] sm:$0xff]
  %v2567 = vld [vmem:[#allocation3 + $0x7d0] sm:$0xff]
  %v2568 = vld [vmem:[#allocation3 + $0x7d8] sm:$0xff]
  %v2569 = vld [vmem:[#allocation3 + $0x7e0] sm:$0xff]
  %v2570 = vld [vmem:[#allocation3 + $0x7e8] sm:$0xff]
  %v2571 = vld [vmem:[#allocation3 + $0x7f0] sm:$0xff]
  %v2572 = vld [vmem:[#allocation3 + $0x7f8] sm:$0xff]
  %v2573 = vunpack.c.l.s8.bf16 %v2317
  %v2574 = vunpack.c.l.s8.bf16 %v2318
  %v2575 = vunpack.c.l.s8.bf16 %v2319
  %v2576 = vunpack.c.l.s8.bf16 %v2320
  %v2577 = vunpack.c.l.s8.bf16 %v2321
  %v2578 = vunpack.c.l.s8.bf16 %v2322
  %v2579 = vunpack.c.l.s8.bf16 %v2323
  %v2580 = vunpack.c.l.s8.bf16 %v2324
  %v2581 = vunpack.c.h.s8.bf16 %v2317
  %v2582 = vunpack.c.h.s8.bf16 %v2318
  %v2583 = vunpack.c.h.s8.bf16 %v2319
  %v2584 = vunpack.c.h.s8.bf16 %v2320
  %v2585 = vunpack.c.h.s8.bf16 %v2321
  %v2586 = vunpack.c.h.s8.bf16 %v2322
  %v2587 = vunpack.c.h.s8.bf16 %v2323
  %v2588 = vunpack.c.h.s8.bf16 %v2324
  %v2589 = vunpack.c.l.s8.bf16 %v2325
  %v2590 = vunpack.c.l.s8.bf16 %v2326
  %v2591 = vunpack.c.l.s8.bf16 %v2327
  %v2592 = vunpack.c.l.s8.bf16 %v2328
  %v2593 = vunpack.c.l.s8.bf16 %v2329
  %v2594 = vunpack.c.l.s8.bf16 %v2330
  %v2595 = vunpack.c.l.s8.bf16 %v2331
  %v2596 = vunpack.c.l.s8.bf16 %v2332
  %v2597 = vunpack.c.h.s8.bf16 %v2325
  %v2598 = vunpack.c.h.s8.bf16 %v2326
  %v2599 = vunpack.c.h.s8.bf16 %v2327
  %v2600 = vunpack.c.h.s8.bf16 %v2328
  %v2601 = vunpack.c.h.s8.bf16 %v2329
  %v2602 = vunpack.c.h.s8.bf16 %v2330
  %v2603 = vunpack.c.h.s8.bf16 %v2331
  %v2604 = vunpack.c.h.s8.bf16 %v2332
  %v2605 = vunpack.c.l.s8.bf16 %v2333
  %v2606 = vunpack.c.l.s8.bf16 %v2334
  %v2607 = vunpack.c.l.s8.bf16 %v2335
  %v2608 = vunpack.c.l.s8.bf16 %v2336
  %v2609 = vunpack.c.l.s8.bf16 %v2337
  %v2610 = vunpack.c.l.s8.bf16 %v2338
  %v2611 = vunpack.c.l.s8.bf16 %v2339
  %v2612 = vunpack.c.l.s8.bf16 %v2340
  %v2613 = vunpack.c.h.s8.bf16 %v2333
  %v2614 = vunpack.c.h.s8.bf16 %v2334
  %v2615 = vunpack.c.h.s8.bf16 %v2335
  %v2616 = vunpack.c.h.s8.bf16 %v2336
  %v2617 = vunpack.c.h.s8.bf16 %v2337
  %v2618 = vunpack.c.h.s8.bf16 %v2338
  %v2619 = vunpack.c.h.s8.bf16 %v2339
  %v2620 = vunpack.c.h.s8.bf16 %v2340
  %v2621 = vunpack.c.l.s8.bf16 %v2341
  %v2622 = vunpack.c.l.s8.bf16 %v2342
  %v2623 = vunpack.c.l.s8.bf16 %v2343
  %v2624 = vunpack.c.l.s8.bf16 %v2344
  %v2625 = vunpack.c.l.s8.bf16 %v2345
  %v2626 = vunpack.c.l.s8.bf16 %v2346
  %v2627 = vunpack.c.l.s8.bf16 %v2347
  %v2628 = vunpack.c.l.s8.bf16 %v2348
  %v2629 = vunpack.c.h.s8.bf16 %v2341
  %v2630 = vunpack.c.h.s8.bf16 %v2342
  %v2631 = vunpack.c.h.s8.bf16 %v2343
  %v2632 = vunpack.c.h.s8.bf16 %v2344
  %v2633 = vunpack.c.h.s8.bf16 %v2345
  %v2634 = vunpack.c.h.s8.bf16 %v2346
  %v2635 = vunpack.c.h.s8.bf16 %v2347
  %v2636 = vunpack.c.h.s8.bf16 %v2348
  %v2637 = vunpack.c.l.s8.bf16 %v2349
  %v2638 = vunpack.c.l.s8.bf16 %v2350
  %v2639 = vunpack.c.l.s8.bf16 %v2351
  %v2640 = vunpack.c.l.s8.bf16 %v2352
  %v2641 = vunpack.c.l.s8.bf16 %v2353
  %v2642 = vunpack.c.l.s8.bf16 %v2354
  %v2643 = vunpack.c.l.s8.bf16 %v2355
  %v2644 = vunpack.c.l.s8.bf16 %v2356
  %v2645 = vunpack.c.h.s8.bf16 %v2349
  %v2646 = vunpack.c.h.s8.bf16 %v2350
  %v2647 = vunpack.c.h.s8.bf16 %v2351
  %v2648 = vunpack.c.h.s8.bf16 %v2352
  %v2649 = vunpack.c.h.s8.bf16 %v2353
  %v2650 = vunpack.c.h.s8.bf16 %v2354
  %v2651 = vunpack.c.h.s8.bf16 %v2355
  %v2652 = vunpack.c.h.s8.bf16 %v2356
  %v2653 = vunpack.c.l.s8.bf16 %v2357
  %v2654 = vunpack.c.l.s8.bf16 %v2358
  %v2655 = vunpack.c.l.s8.bf16 %v2359
  %v2656 = vunpack.c.l.s8.bf16 %v2360
  %v2657 = vunpack.c.l.s8.bf16 %v2361
  %v2658 = vunpack.c.l.s8.bf16 %v2362
  %v2659 = vunpack.c.l.s8.bf16 %v2363
  %v2660 = vunpack.c.l.s8.bf16 %v2364
  %v2661 = vunpack.c.h.s8.bf16 %v2357
  %v2662 = vunpack.c.h.s8.bf16 %v2358
  %v2663 = vunpack.c.h.s8.bf16 %v2359
  %v2664 = vunpack.c.h.s8.bf16 %v2360
  %v2665 = vunpack.c.h.s8.bf16 %v2361
  %v2666 = vunpack.c.h.s8.bf16 %v2362
  %v2667 = vunpack.c.h.s8.bf16 %v2363
  %v2668 = vunpack.c.h.s8.bf16 %v2364
  %v2669 = vunpack.c.l.s8.bf16 %v2365
  %v2670 = vunpack.c.l.s8.bf16 %v2366
  %v2671 = vunpack.c.l.s8.bf16 %v2367
  %v2672 = vunpack.c.l.s8.bf16 %v2368
  %v2673 = vunpack.c.l.s8.bf16 %v2369
  %v2674 = vunpack.c.l.s8.bf16 %v2370
  %v2675 = vunpack.c.l.s8.bf16 %v2371
  %v2676 = vunpack.c.l.s8.bf16 %v2372
  %v2677 = vunpack.c.h.s8.bf16 %v2365
  %v2678 = vunpack.c.h.s8.bf16 %v2366
  %v2679 = vunpack.c.h.s8.bf16 %v2367
  %v2680 = vunpack.c.h.s8.bf16 %v2368
  %v2681 = vunpack.c.h.s8.bf16 %v2369
  %v2682 = vunpack.c.h.s8.bf16 %v2370
  %v2683 = vunpack.c.h.s8.bf16 %v2371
  %v2684 = vunpack.c.h.s8.bf16 %v2372
  %v2685 = vunpack.c.l.s8.bf16 %v2373
  %v2686 = vunpack.c.l.s8.bf16 %v2374
  %v2687 = vunpack.c.l.s8.bf16 %v2375
  %v2688 = vunpack.c.l.s8.bf16 %v2376
  %v2689 = vunpack.c.l.s8.bf16 %v2377
  %v2690 = vunpack.c.l.s8.bf16 %v2378
  %v2691 = vunpack.c.l.s8.bf16 %v2379
  %v2692 = vunpack.c.l.s8.bf16 %v2380
  %v2693 = vunpack.c.h.s8.bf16 %v2373
  %v2694 = vunpack.c.h.s8.bf16 %v2374
  %v2695 = vunpack.c.h.s8.bf16 %v2375
  %v2696 = vunpack.c.h.s8.bf16 %v2376
  %v2697 = vunpack.c.h.s8.bf16 %v2377
  %v2698 = vunpack.c.h.s8.bf16 %v2378
  %v2699 = vunpack.c.h.s8.bf16 %v2379
  %v2700 = vunpack.c.h.s8.bf16 %v2380
  %v2701 = vunpack.c.l.s8.bf16 %v2381
  %v2702 = vunpack.c.l.s8.bf16 %v2382
  %v2703 = vunpack.c.l.s8.bf16 %v2383
  %v2704 = vunpack.c.l.s8.bf16 %v2384
  %v2705 = vunpack.c.l.s8.bf16 %v2385
  %v2706 = vunpack.c.l.s8.bf16 %v2386
  %v2707 = vunpack.c.l.s8.bf16 %v2387
  %v2708 = vunpack.c.l.s8.bf16 %v2388
  %v2709 = vunpack.c.h.s8.bf16 %v2381
  %v2710 = vunpack.c.h.s8.bf16 %v2382
  %v2711 = vunpack.c.h.s8.bf16 %v2383
  %v2712 = vunpack.c.h.s8.bf16 %v2384
  %v2713 = vunpack.c.h.s8.bf16 %v2385
  %v2714 = vunpack.c.h.s8.bf16 %v2386
  %v2715 = vunpack.c.h.s8.bf16 %v2387
  %v2716 = vunpack.c.h.s8.bf16 %v2388
  %v2717 = vunpack.c.l.s8.bf16 %v2389
  %v2718 = vunpack.c.l.s8.bf16 %v2390
  %v2719 = vunpack.c.l.s8.bf16 %v2391
  %v2720 = vunpack.c.l.s8.bf16 %v2392
  %v2721 = vunpack.c.l.s8.bf16 %v2393
  %v2722 = vunpack.c.l.s8.bf16 %v2394
  %v2723 = vunpack.c.l.s8.bf16 %v2395
  %v2724 = vunpack.c.l.s8.bf16 %v2396
  %v2725 = vunpack.c.h.s8.bf16 %v2389
  %v2726 = vunpack.c.h.s8.bf16 %v2390
  %v2727 = vunpack.c.h.s8.bf16 %v2391
  %v2728 = vunpack.c.h.s8.bf16 %v2392
  %v2729 = vunpack.c.h.s8.bf16 %v2393
  %v2730 = vunpack.c.h.s8.bf16 %v2394
  %v2731 = vunpack.c.h.s8.bf16 %v2395
  %v2732 = vunpack.c.h.s8.bf16 %v2396
  %v2733 = vunpack.c.l.s8.bf16 %v2397
  %v2734 = vunpack.c.l.s8.bf16 %v2398
  %v2735 = vunpack.c.l.s8.bf16 %v2399
  %v2736 = vunpack.c.l.s8.bf16 %v2400
  %v2737 = vunpack.c.l.s8.bf16 %v2401
  %v2738 = vunpack.c.l.s8.bf16 %v2402
  %v2739 = vunpack.c.l.s8.bf16 %v2403
  %v2740 = vunpack.c.l.s8.bf16 %v2404
  %v2741 = vunpack.c.h.s8.bf16 %v2397
  %v2742 = vunpack.c.h.s8.bf16 %v2398
  %v2743 = vunpack.c.h.s8.bf16 %v2399
  %v2744 = vunpack.c.h.s8.bf16 %v2400
  %v2745 = vunpack.c.h.s8.bf16 %v2401
  %v2746 = vunpack.c.h.s8.bf16 %v2402
  %v2747 = vunpack.c.h.s8.bf16 %v2403
  %v2748 = vunpack.c.h.s8.bf16 %v2404
  %v2749 = vunpack.c.l.s8.bf16 %v2405
  %v2750 = vunpack.c.l.s8.bf16 %v2406
  %v2751 = vunpack.c.l.s8.bf16 %v2407
  %v2752 = vunpack.c.l.s8.bf16 %v2408
  %v2753 = vunpack.c.l.s8.bf16 %v2409
  %v2754 = vunpack.c.l.s8.bf16 %v2410
  %v2755 = vunpack.c.l.s8.bf16 %v2411
  %v2756 = vunpack.c.l.s8.bf16 %v2412
  %v2757 = vunpack.c.h.s8.bf16 %v2405
  %v2758 = vunpack.c.h.s8.bf16 %v2406
  %v2759 = vunpack.c.h.s8.bf16 %v2407
  %v2760 = vunpack.c.h.s8.bf16 %v2408
  %v2761 = vunpack.c.h.s8.bf16 %v2409
  %v2762 = vunpack.c.h.s8.bf16 %v2410
  %v2763 = vunpack.c.h.s8.bf16 %v2411
  %v2764 = vunpack.c.h.s8.bf16 %v2412
  %v2765 = vunpack.c.l.s8.bf16 %v2413
  %v2766 = vunpack.c.l.s8.bf16 %v2414
  %v2767 = vunpack.c.l.s8.bf16 %v2415
  %v2768 = vunpack.c.l.s8.bf16 %v2416
  %v2769 = vunpack.c.l.s8.bf16 %v2417
  %v2770 = vunpack.c.l.s8.bf16 %v2418
  %v2771 = vunpack.c.l.s8.bf16 %v2419
  %v2772 = vunpack.c.l.s8.bf16 %v2420
  %v2773 = vunpack.c.h.s8.bf16 %v2413
  %v2774 = vunpack.c.h.s8.bf16 %v2414
  %v2775 = vunpack.c.h.s8.bf16 %v2415
  %v2776 = vunpack.c.h.s8.bf16 %v2416
  %v2777 = vunpack.c.h.s8.bf16 %v2417
  %v2778 = vunpack.c.h.s8.bf16 %v2418
  %v2779 = vunpack.c.h.s8.bf16 %v2419
  %v2780 = vunpack.c.h.s8.bf16 %v2420
  %v2781 = vunpack.c.l.s8.bf16 %v2421
  %v2782 = vunpack.c.l.s8.bf16 %v2422
  %v2783 = vunpack.c.l.s8.bf16 %v2423
  %v2784 = vunpack.c.l.s8.bf16 %v2424
  %v2785 = vunpack.c.l.s8.bf16 %v2425
  %v2786 = vunpack.c.l.s8.bf16 %v2426
  %v2787 = vunpack.c.l.s8.bf16 %v2427
  %v2788 = vunpack.c.l.s8.bf16 %v2428
  %v2789 = vunpack.c.h.s8.bf16 %v2421
  %v2790 = vunpack.c.h.s8.bf16 %v2422
  %v2791 = vunpack.c.h.s8.bf16 %v2423
  %v2792 = vunpack.c.h.s8.bf16 %v2424
  %v2793 = vunpack.c.h.s8.bf16 %v2425
  %v2794 = vunpack.c.h.s8.bf16 %v2426
  %v2795 = vunpack.c.h.s8.bf16 %v2427
  %v2796 = vunpack.c.h.s8.bf16 %v2428
  %v2797 = vunpack.c.l.s8.bf16 %v2429
  %v2798 = vunpack.c.l.s8.bf16 %v2430
  %v2799 = vunpack.c.l.s8.bf16 %v2431
  %v2800 = vunpack.c.l.s8.bf16 %v2432
  %v2801 = vunpack.c.l.s8.bf16 %v2433
  %v2802 = vunpack.c.l.s8.bf16 %v2434
  %v2803 = vunpack.c.l.s8.bf16 %v2435
  %v2804 = vunpack.c.l.s8.bf16 %v2436
  %v2805 = vunpack.c.h.s8.bf16 %v2429
  %v2806 = vunpack.c.h.s8.bf16 %v2430
  %v2807 = vunpack.c.h.s8.bf16 %v2431
  %v2808 = vunpack.c.h.s8.bf16 %v2432
  %v2809 = vunpack.c.h.s8.bf16 %v2433
  %v2810 = vunpack.c.h.s8.bf16 %v2434
  %v2811 = vunpack.c.h.s8.bf16 %v2435
  %v2812 = vunpack.c.h.s8.bf16 %v2436
  %v2813 = vunpack.c.l.s8.bf16 %v2437
  %v2814 = vunpack.c.l.s8.bf16 %v2438
  %v2815 = vunpack.c.l.s8.bf16 %v2439
  %v2816 = vunpack.c.l.s8.bf16 %v2440
  %v2817 = vunpack.c.l.s8.bf16 %v2441
  %v2818 = vunpack.c.l.s8.bf16 %v2442
  %v2819 = vunpack.c.l.s8.bf16 %v2443
  %v2820 = vunpack.c.l.s8.bf16 %v2444
  %v2821 = vunpack.c.h.s8.bf16 %v2437
  %v2822 = vunpack.c.h.s8.bf16 %v2438
  %v2823 = vunpack.c.h.s8.bf16 %v2439
  %v2824 = vunpack.c.h.s8.bf16 %v2440
  %v2825 = vunpack.c.h.s8.bf16 %v2441
  %v2826 = vunpack.c.h.s8.bf16 %v2442
  %v2827 = vunpack.c.h.s8.bf16 %v2443
  %v2828 = vunpack.c.h.s8.bf16 %v2444
  %v2829 = vunpack.c.l.s8.bf16 %v2445
  %v2830 = vunpack.c.l.s8.bf16 %v2446
  %v2831 = vunpack.c.l.s8.bf16 %v2447
  %v2832 = vunpack.c.l.s8.bf16 %v2448
  %v2833 = vunpack.c.l.s8.bf16 %v2449
  %v2834 = vunpack.c.l.s8.bf16 %v2450
  %v2835 = vunpack.c.l.s8.bf16 %v2451
  %v2836 = vunpack.c.l.s8.bf16 %v2452
  %v2837 = vunpack.c.h.s8.bf16 %v2445
  %v2838 = vunpack.c.h.s8.bf16 %v2446
  %v2839 = vunpack.c.h.s8.bf16 %v2447
  %v2840 = vunpack.c.h.s8.bf16 %v2448
  %v2841 = vunpack.c.h.s8.bf16 %v2449
  %v2842 = vunpack.c.h.s8.bf16 %v2450
  %v2843 = vunpack.c.h.s8.bf16 %v2451
  %v2844 = vunpack.c.h.s8.bf16 %v2452
  %v2845 = vunpack.c.l.s8.bf16 %v2453
  %v2846 = vunpack.c.l.s8.bf16 %v2454
  %v2847 = vunpack.c.l.s8.bf16 %v2455
  %v2848 = vunpack.c.l.s8.bf16 %v2456
  %v2849 = vunpack.c.l.s8.bf16 %v2457
  %v2850 = vunpack.c.l.s8.bf16 %v2458
  %v2851 = vunpack.c.l.s8.bf16 %v2459
  %v2852 = vunpack.c.l.s8.bf16 %v2460
  %v2853 = vunpack.c.h.s8.bf16 %v2453
  %v2854 = vunpack.c.h.s8.bf16 %v2454
  %v2855 = vunpack.c.h.s8.bf16 %v2455
  %v2856 = vunpack.c.h.s8.bf16 %v2456
  %v2857 = vunpack.c.h.s8.bf16 %v2457
  %v2858 = vunpack.c.h.s8.bf16 %v2458
  %v2859 = vunpack.c.h.s8.bf16 %v2459
  %v2860 = vunpack.c.h.s8.bf16 %v2460
  %v2861 = vunpack.c.l.s8.bf16 %v2461
  %v2862 = vunpack.c.l.s8.bf16 %v2462
  %v2863 = vunpack.c.l.s8.bf16 %v2463
  %v2864 = vunpack.c.l.s8.bf16 %v2464
  %v2865 = vunpack.c.l.s8.bf16 %v2465
  %v2866 = vunpack.c.l.s8.bf16 %v2466
  %v2867 = vunpack.c.l.s8.bf16 %v2467
  %v2868 = vunpack.c.l.s8.bf16 %v2468
  %v2869 = vunpack.c.h.s8.bf16 %v2461
  %v2870 = vunpack.c.h.s8.bf16 %v2462
  %v2871 = vunpack.c.h.s8.bf16 %v2463
  %v2872 = vunpack.c.h.s8.bf16 %v2464
  %v2873 = vunpack.c.h.s8.bf16 %v2465
  %v2874 = vunpack.c.h.s8.bf16 %v2466
  %v2875 = vunpack.c.h.s8.bf16 %v2467
  %v2876 = vunpack.c.h.s8.bf16 %v2468
  %v2877 = vunpack.c.l.s8.bf16 %v2469
  %v2878 = vunpack.c.l.s8.bf16 %v2470
  %v2879 = vunpack.c.l.s8.bf16 %v2471
  %v2880 = vunpack.c.l.s8.bf16 %v2472
  %v2881 = vunpack.c.l.s8.bf16 %v2473
  %v2882 = vunpack.c.l.s8.bf16 %v2474
  %v2883 = vunpack.c.l.s8.bf16 %v2475
  %v2884 = vunpack.c.l.s8.bf16 %v2476
  %v2885 = vunpack.c.h.s8.bf16 %v2469
  %v2886 = vunpack.c.h.s8.bf16 %v2470
  %v2887 = vunpack.c.h.s8.bf16 %v2471
  %v2888 = vunpack.c.h.s8.bf16 %v2472
  %v2889 = vunpack.c.h.s8.bf16 %v2473
  %v2890 = vunpack.c.h.s8.bf16 %v2474
  %v2891 = vunpack.c.h.s8.bf16 %v2475
  %v2892 = vunpack.c.h.s8.bf16 %v2476
  %v2893 = vunpack.c.l.s8.bf16 %v2477
  %v2894 = vunpack.c.l.s8.bf16 %v2478
  %v2895 = vunpack.c.l.s8.bf16 %v2479
  %v2896 = vunpack.c.l.s8.bf16 %v2480
  %v2897 = vunpack.c.l.s8.bf16 %v2481
  %v2898 = vunpack.c.l.s8.bf16 %v2482
  %v2899 = vunpack.c.l.s8.bf16 %v2483
  %v2900 = vunpack.c.l.s8.bf16 %v2484
  %v2901 = vunpack.c.h.s8.bf16 %v2477
  %v2902 = vunpack.c.h.s8.bf16 %v2478
  %v2903 = vunpack.c.h.s8.bf16 %v2479
  %v2904 = vunpack.c.h.s8.bf16 %v2480
  %v2905 = vunpack.c.h.s8.bf16 %v2481
  %v2906 = vunpack.c.h.s8.bf16 %v2482
  %v2907 = vunpack.c.h.s8.bf16 %v2483
  %v2908 = vunpack.c.h.s8.bf16 %v2484
  %v2909 = vunpack.c.l.s8.bf16 %v2485
  %v2910 = vunpack.c.l.s8.bf16 %v2486
  %v2911 = vunpack.c.l.s8.bf16 %v2487
  %v2912 = vunpack.c.l.s8.bf16 %v2488
  %v2913 = vunpack.c.l.s8.bf16 %v2489
  %v2914 = vunpack.c.l.s8.bf16 %v2490
  %v2915 = vunpack.c.l.s8.bf16 %v2491
  %v2916 = vunpack.c.l.s8.bf16 %v2492
  %v2917 = vunpack.c.h.s8.bf16 %v2485
  %v2918 = vunpack.c.h.s8.bf16 %v2486
  %v2919 = vunpack.c.h.s8.bf16 %v2487
  %v2920 = vunpack.c.h.s8.bf16 %v2488
  %v2921 = vunpack.c.h.s8.bf16 %v2489
  %v2922 = vunpack.c.h.s8.bf16 %v2490
  %v2923 = vunpack.c.h.s8.bf16 %v2491
  %v2924 = vunpack.c.h.s8.bf16 %v2492
  %v2925 = vunpack.c.l.s8.bf16 %v2493
  %v2926 = vunpack.c.l.s8.bf16 %v2494
  %v2927 = vunpack.c.l.s8.bf16 %v2495
  %v2928 = vunpack.c.l.s8.bf16 %v2496
  %v2929 = vunpack.c.l.s8.bf16 %v2497
  %v2930 = vunpack.c.l.s8.bf16 %v2498
  %v2931 = vunpack.c.l.s8.bf16 %v2499
  %v2932 = vunpack.c.l.s8.bf16 %v2500
  %v2933 = vunpack.c.h.s8.bf16 %v2493
  %v2934 = vunpack.c.h.s8.bf16 %v2494
  %v2935 = vunpack.c.h.s8.bf16 %v2495
  %v2936 = vunpack.c.h.s8.bf16 %v2496
  %v2937 = vunpack.c.h.s8.bf16 %v2497
  %v2938 = vunpack.c.h.s8.bf16 %v2498
  %v2939 = vunpack.c.h.s8.bf16 %v2499
  %v2940 = vunpack.c.h.s8.bf16 %v2500
  %v2941 = vunpack.c.l.s8.bf16 %v2501
  %v2942 = vunpack.c.l.s8.bf16 %v2502
  %v2943 = vunpack.c.l.s8.bf16 %v2503
  %v2944 = vunpack.c.l.s8.bf16 %v2504
  %v2945 = vunpack.c.l.s8.bf16 %v2505
  %v2946 = vunpack.c.l.s8.bf16 %v2506
  %v2947 = vunpack.c.l.s8.bf16 %v2507
  %v2948 = vunpack.c.l.s8.bf16 %v2508
  %v2949 = vunpack.c.h.s8.bf16 %v2501
  %v2950 = vunpack.c.h.s8.bf16 %v2502
  %v2951 = vunpack.c.h.s8.bf16 %v2503
  %v2952 = vunpack.c.h.s8.bf16 %v2504
  %v2953 = vunpack.c.h.s8.bf16 %v2505
  %v2954 = vunpack.c.h.s8.bf16 %v2506
  %v2955 = vunpack.c.h.s8.bf16 %v2507
  %v2956 = vunpack.c.h.s8.bf16 %v2508
  %v2957 = vunpack.c.l.s8.bf16 %v2509
  %v2958 = vunpack.c.l.s8.bf16 %v2510
  %v2959 = vunpack.c.l.s8.bf16 %v2511
  %v2960 = vunpack.c.l.s8.bf16 %v2512
  %v2961 = vunpack.c.l.s8.bf16 %v2513
  %v2962 = vunpack.c.l.s8.bf16 %v2514
  %v2963 = vunpack.c.l.s8.bf16 %v2515
  %v2964 = vunpack.c.l.s8.bf16 %v2516
  %v2965 = vunpack.c.h.s8.bf16 %v2509
  %v2966 = vunpack.c.h.s8.bf16 %v2510
  %v2967 = vunpack.c.h.s8.bf16 %v2511
  %v2968 = vunpack.c.h.s8.bf16 %v2512
  %v2969 = vunpack.c.h.s8.bf16 %v2513
  %v2970 = vunpack.c.h.s8.bf16 %v2514
  %v2971 = vunpack.c.h.s8.bf16 %v2515
  %v2972 = vunpack.c.h.s8.bf16 %v2516
  %v2973 = vunpack.c.l.s8.bf16 %v2517
  %v2974 = vunpack.c.l.s8.bf16 %v2518
  %v2975 = vunpack.c.l.s8.bf16 %v2519
  %v2976 = vunpack.c.l.s8.bf16 %v2520
  %v2977 = vunpack.c.l.s8.bf16 %v2521
  %v2978 = vunpack.c.l.s8.bf16 %v2522
  %v2979 = vunpack.c.l.s8.bf16 %v2523
  %v2980 = vunpack.c.l.s8.bf16 %v2524
  %v2981 = vunpack.c.h.s8.bf16 %v2517
  %v2982 = vunpack.c.h.s8.bf16 %v2518
  %v2983 = vunpack.c.h.s8.bf16 %v2519
  %v2984 = vunpack.c.h.s8.bf16 %v2520
  %v2985 = vunpack.c.h.s8.bf16 %v2521
  %v2986 = vunpack.c.h.s8.bf16 %v2522
  %v2987 = vunpack.c.h.s8.bf16 %v2523
  %v2988 = vunpack.c.h.s8.bf16 %v2524
  %v2989 = vunpack.c.l.s8.bf16 %v2525
  %v2990 = vunpack.c.l.s8.bf16 %v2526
  %v2991 = vunpack.c.l.s8.bf16 %v2527
  %v2992 = vunpack.c.l.s8.bf16 %v2528
  %v2993 = vunpack.c.l.s8.bf16 %v2529
  %v2994 = vunpack.c.l.s8.bf16 %v2530
  %v2995 = vunpack.c.l.s8.bf16 %v2531
  %v2996 = vunpack.c.l.s8.bf16 %v2532
  %v2997 = vunpack.c.h.s8.bf16 %v2525
  %v2998 = vunpack.c.h.s8.bf16 %v2526
  %v2999 = vunpack.c.h.s8.bf16 %v2527
  %v3000 = vunpack.c.h.s8.bf16 %v2528
  %v3001 = vunpack.c.h.s8.bf16 %v2529
  %v3002 = vunpack.c.h.s8.bf16 %v2530
  %v3003 = vunpack.c.h.s8.bf16 %v2531
  %v3004 = vunpack.c.h.s8.bf16 %v2532
  %v3005 = vunpack.c.l.s8.bf16 %v2533
  %v3006 = vunpack.c.l.s8.bf16 %v2534
  %v3007 = vunpack.c.l.s8.bf16 %v2535
  %v3008 = vunpack.c.l.s8.bf16 %v2536
  %v3009 = vunpack.c.l.s8.bf16 %v2537
  %v3010 = vunpack.c.l.s8.bf16 %v2538
  %v3011 = vunpack.c.l.s8.bf16 %v2539
  %v3012 = vunpack.c.l.s8.bf16 %v2540
  %v3013 = vunpack.c.h.s8.bf16 %v2533
  %v3014 = vunpack.c.h.s8.bf16 %v2534
  %v3015 = vunpack.c.h.s8.bf16 %v2535
  %v3016 = vunpack.c.h.s8.bf16 %v2536
  %v3017 = vunpack.c.h.s8.bf16 %v2537
  %v3018 = vunpack.c.h.s8.bf16 %v2538
  %v3019 = vunpack.c.h.s8.bf16 %v2539
  %v3020 = vunpack.c.h.s8.bf16 %v2540
  %v3021 = vunpack.c.l.s8.bf16 %v2541
  %v3022 = vunpack.c.l.s8.bf16 %v2542
  %v3023 = vunpack.c.l.s8.bf16 %v2543
  %v3024 = vunpack.c.l.s8.bf16 %v2544
  %v3025 = vunpack.c.l.s8.bf16 %v2545
  %v3026 = vunpack.c.l.s8.bf16 %v2546
  %v3027 = vunpack.c.l.s8.bf16 %v2547
  %v3028 = vunpack.c.l.s8.bf16 %v2548
  %v3029 = vunpack.c.h.s8.bf16 %v2541
  %v3030 = vunpack.c.h.s8.bf16 %v2542
  %v3031 = vunpack.c.h.s8.bf16 %v2543
  %v3032 = vunpack.c.h.s8.bf16 %v2544
  %v3033 = vunpack.c.h.s8.bf16 %v2545
  %v3034 = vunpack.c.h.s8.bf16 %v2546
  %v3035 = vunpack.c.h.s8.bf16 %v2547
  %v3036 = vunpack.c.h.s8.bf16 %v2548
  %v3037 = vunpack.c.l.s8.bf16 %v2549
  %v3038 = vunpack.c.l.s8.bf16 %v2550
  %v3039 = vunpack.c.l.s8.bf16 %v2551
  %v3040 = vunpack.c.l.s8.bf16 %v2552
  %v3041 = vunpack.c.l.s8.bf16 %v2553
  %v3042 = vunpack.c.l.s8.bf16 %v2554
  %v3043 = vunpack.c.l.s8.bf16 %v2555
  %v3044 = vunpack.c.l.s8.bf16 %v2556
  %v3045 = vunpack.c.h.s8.bf16 %v2549
  %v3046 = vunpack.c.h.s8.bf16 %v2550
  %v3047 = vunpack.c.h.s8.bf16 %v2551
  %v3048 = vunpack.c.h.s8.bf16 %v2552
  %v3049 = vunpack.c.h.s8.bf16 %v2553
  %v3050 = vunpack.c.h.s8.bf16 %v2554
  %v3051 = vunpack.c.h.s8.bf16 %v2555
  %v3052 = vunpack.c.h.s8.bf16 %v2556
  %v3053 = vunpack.c.l.s8.bf16 %v2557
  %v3054 = vunpack.c.l.s8.bf16 %v2558
  %v3055 = vunpack.c.l.s8.bf16 %v2559
  %v3056 = vunpack.c.l.s8.bf16 %v2560
  %v3057 = vunpack.c.l.s8.bf16 %v2561
  %v3058 = vunpack.c.l.s8.bf16 %v2562
  %v3059 = vunpack.c.l.s8.bf16 %v2563
  %v3060 = vunpack.c.l.s8.bf16 %v2564
  %v3061 = vunpack.c.h.s8.bf16 %v2557
  %v3062 = vunpack.c.h.s8.bf16 %v2558
  %v3063 = vunpack.c.h.s8.bf16 %v2559
  %v3064 = vunpack.c.h.s8.bf16 %v2560
  %v3065 = vunpack.c.h.s8.bf16 %v2561
  %v3066 = vunpack.c.h.s8.bf16 %v2562
  %v3067 = vunpack.c.h.s8.bf16 %v2563
  %v3068 = vunpack.c.h.s8.bf16 %v2564
  %v3069 = vunpack.c.l.s8.bf16 %v2565
  %v3070 = vunpack.c.l.s8.bf16 %v2566
  %v3071 = vunpack.c.l.s8.bf16 %v2567
  %v3072 = vunpack.c.l.s8.bf16 %v2568
  %v3073 = vunpack.c.l.s8.bf16 %v2569
  %v3074 = vunpack.c.l.s8.bf16 %v2570
  %v3075 = vunpack.c.l.s8.bf16 %v2571
  %v3076 = vunpack.c.l.s8.bf16 %v2572
  %v3077 = vunpack.c.h.s8.bf16 %v2565
  %v3078 = vunpack.c.h.s8.bf16 %v2566
  %v3079 = vunpack.c.h.s8.bf16 %v2567
  %v3080 = vunpack.c.h.s8.bf16 %v2568
  %v3081 = vunpack.c.h.s8.bf16 %v2569
  %v3082 = vunpack.c.h.s8.bf16 %v2570
  %v3083 = vunpack.c.h.s8.bf16 %v2571
  %v3084 = vunpack.c.h.s8.bf16 %v2572
  %3085 = vmatprep.subr.bf16.mxu0 %v2574
  %3086 = vmatpush1.bf16.msra.mxu0 %v2573
  %3087 = vmatprep.subr.bf16.mxu0 %v2582
  %3088 = vmatpush1.bf16.msra.mxu0 %v2581
  %3089 = vmatprep.subr.bf16.mxu0 %v2590
  %3090 = vmatpush1.bf16.msra.mxu0 %v2589
  %3091 = vmatprep.subr.bf16.mxu0 %v2598
  %3092 = vmatpush1.bf16.msra.mxu0 %v2597
  %3093 = vmatprep.subr.bf16.mxu0 %v2606
  %3094 = vmatpush1.bf16.msra.mxu0 %v2605
  %3095 = vmatprep.subr.bf16.mxu0 %v2614
  %3096 = vmatpush1.bf16.msra.mxu0 %v2613
  %3097 = vmatprep.subr.bf16.mxu0 %v2622
  %3098 = vmatpush1.bf16.msra.mxu0 %v2621
  %3099 = vmatprep.subr.bf16.mxu0 %v2630
  %3100 = vmatpush1.bf16.msra.mxu0 %v2629
  %3101 = vmatprep.subr.bf16.mxu0 %v2638
  %3102 = vmatpush1.bf16.msra.mxu0 %v2637
  %3103 = vmatprep.subr.bf16.mxu0 %v2646
  %3104 = vmatpush1.bf16.msra.mxu0 %v2645
  %3105 = vmatprep.subr.bf16.mxu0 %v2654
  %3106 = vmatpush1.bf16.msra.mxu0 %v2653
  %3107 = vmatprep.subr.bf16.mxu0 %v2662
  %3108 = vmatpush1.bf16.msra.mxu0 %v2661
  %3109 = vmatprep.subr.bf16.mxu0 %v2670
  %3110 = vmatpush1.bf16.msra.mxu0 %v2669
  %3111 = vmatprep.subr.bf16.mxu0 %v2678
  %3112 = vmatpush1.bf16.msra.mxu0 %v2677
  %3113 = vmatprep.subr.bf16.mxu0 %v2686
  %3114 = vmatpush1.bf16.msra.mxu0 %v2685
  %3115 = vmatprep.subr.bf16.mxu0 %v2694
  %3116 = vmatpush1.bf16.msra.mxu0 %v2693
  %3117 = vmatprep.mubr.bf16.mxu0 %v2310
  %3118 = vmatmul.mubr.bf16.gmra.mrb[0].mxu0 %v2309
  %v3119 = vpop.f32.mrb[0].mxu0
  %v3120 = vadd.f32 0.0, %v3119
  %v3121 = vpop.f32.mrb[0].mxu0
  %v3122 = vadd.f32 0.0, %v3121
  %v3123 = vpop.f32.mrb[0].mxu0
  %v3124 = vpop.f32.mrb[0].mxu0
  %3125 = vdwg.mxu0
  %3126 = vmatprep.subr.bf16.mxu0 %v2702
  %3127 = vmatpush1.bf16.msra.mxu0 %v2701
  %3128 = vmatprep.subr.bf16.mxu0 %v2710
  %3129 = vmatpush1.bf16.msra.mxu0 %v2709
  %3130 = vmatprep.subr.bf16.mxu0 %v2718
  %3131 = vmatpush1.bf16.msra.mxu0 %v2717
  %3132 = vmatprep.subr.bf16.mxu0 %v2726
  %3133 = vmatpush1.bf16.msra.mxu0 %v2725
  %3134 = vmatprep.subr.bf16.mxu0 %v2734
  %3135 = vmatpush1.bf16.msra.mxu0 %v2733
  %3136 = vmatprep.subr.bf16.mxu0 %v2742
  %3137 = vmatpush1.bf16.msra.mxu0 %v2741
  %3138 = vmatprep.subr.bf16.mxu0 %v2750
  %3139 = vmatpush1.bf16.msra.mxu0 %v2749
  %3140 = vmatprep.subr.bf16.mxu0 %v2758
  %3141 = vmatpush1.bf16.msra.mxu0 %v2757
  %3142 = vmatprep.subr.bf16.mxu0 %v2766
  %3143 = vmatpush1.bf16.msra.mxu0 %v2765
  %3144 = vmatprep.subr.bf16.mxu0 %v2774
  %3145 = vmatpush1.bf16.msra.mxu0 %v2773
  %3146 = vmatprep.subr.bf16.mxu0 %v2782
  %3147 = vmatpush1.bf16.msra.mxu0 %v2781
  %3148 = vmatprep.subr.bf16.mxu0 %v2790
  %3149 = vmatpush1.bf16.msra.mxu0 %v2789
  %3150 = vmatprep.subr.bf16.mxu0 %v2798
  %3151 = vmatpush1.bf16.msra.mxu0 %v2797
  %3152 = vmatprep.subr.bf16.mxu0 %v2806
  %3153 = vmatpush1.bf16.msra.mxu0 %v2805
  %3154 = vmatprep.subr.bf16.mxu0 %v2814
  %3155 = vmatpush1.bf16.msra.mxu0 %v2813
  %3156 = vmatprep.subr.bf16.mxu0 %v2822
  %3157 = vmatpush1.bf16.msra.mxu0 %v2821
  %3158 = vmatprep.mubr.bf16.mxu0 %v2312
  %3159 = vmatmul.mubr.bf16.gmra.mrb[0].mxu0 %v2311
  %v3160 = vpop.f32.mrb[0].mxu0
  %v3161 = vadd.f32 %v3120, %v3160
  %v3162 = vpop.f32.mrb[0].mxu0
  %v3163 = vadd.f32 %v3122, %v3162
  %v3164 = vpop.f32.mrb[0].mxu0
  %v3165 = vpop.f32.mrb[0].mxu0
  %3166 = vdwg.mxu0
  %3167 = vmatprep.subr.bf16.mxu0 %v2830
  %3168 = vmatpush1.bf16.msra.mxu0 %v2829
  %3169 = vmatprep.subr.bf16.mxu0 %v2838
  %3170 = vmatpush1.bf16.msra.mxu0 %v2837
  %3171 = vmatprep.subr.bf16.mxu0 %v2846
  %3172 = vmatpush1.bf16.msra.mxu0 %v2845
  %3173 = vmatprep.subr.bf16.mxu0 %v2854
  %3174 = vmatpush1.bf16.msra.mxu0 %v2853
  %3175 = vmatprep.subr.bf16.mxu0 %v2862
  %3176 = vmatpush1.bf16.msra.mxu0 %v2861
  %3177 = vmatprep.subr.bf16.mxu0 %v2870
  %3178 = vmatpush1.bf16.msra.mxu0 %v2869
  %3179 = vmatprep.subr.bf16.mxu0 %v2878
  %3180 = vmatpush1.bf16.msra.mxu0 %v2877
  %3181 = vmatprep.subr.bf16.mxu0 %v2886
  %3182 = vmatpush1.bf16.msra.mxu0 %v2885
  %3183 = vmatprep.subr.bf16.mxu0 %v2894
  %3184 = vmatpush1.bf16.msra.mxu0 %v2893
  %3185 = vmatprep.subr.bf16.mxu0 %v2902
  %3186 = vmatpush1.bf16.msra.mxu0 %v2901
  %3187 = vmatprep.subr.bf16.mxu0 %v2910
  %3188 = vmatpush1.bf16.msra.mxu0 %v2909
  %3189 = vmatprep.subr.bf16.mxu0 %v2918
  %3190 = vmatpush1.bf16.msra.mxu0 %v2917
  %3191 = vmatprep.subr.bf16.mxu0 %v2926
  %3192 = vmatpush1.bf16.msra.mxu0 %v2925
  %3193 = vmatprep.subr.bf16.mxu0 %v2934
  %3194 = vmatpush1.bf16.msra.mxu0 %v2933
  %3195 = vmatprep.subr.bf16.mxu0 %v2942
  %3196 = vmatpush1.bf16.msra.mxu0 %v2941
  %3197 = vmatprep.subr.bf16.mxu0 %v2950
  %3198 = vmatpush1.bf16.msra.mxu0 %v2949
  %3199 = vmatprep.mubr.bf16.mxu0 %v2314
  %3200 = vmatmul.mubr.bf16.gmra.mrb[0].mxu0 %v2313
  %v3201 = vpop.f32.mrb[0].mxu0
  %v3202 = vadd.f32 %v3161, %v3201
  %v3203 = vpop.f32.mrb[0].mxu0
  %v3204 = vadd.f32 %v3163, %v3203
  %v3205 = vpop.f32.mrb[0].mxu0
  %v3206 = vpop.f32.mrb[0].mxu0
  %3207 = vdwg.mxu0
  %3208 = vmatprep.subr.bf16.mxu0 %v2958
  %3209 = vmatpush1.bf16.msra.mxu0 %v2957
  %3210 = vmatprep.subr.bf16.mxu0 %v2966
  %3211 = vmatpush1.bf16.msra.mxu0 %v2965
  %3212 = vmatprep.subr.bf16.mxu0 %v2974
  %3213 = vmatpush1.bf16.msra.mxu0 %v2973
  %3214 = vmatprep.subr.bf16.mxu0 %v2982
  %3215 = vmatpush1.bf16.msra.mxu0 %v2981
  %3216 = vmatprep.subr.bf16.mxu0 %v2990
  %3217 = vmatpush1.bf16.msra.mxu0 %v2989
  %3218 = vmatprep.subr.bf16.mxu0 %v2998
  %3219 = vmatpush1.bf16.msra.mxu0 %v2997
  %3220 = vmatprep.subr.bf16.mxu0 %v3006
  %3221 = vmatpush1.bf16.msra.mxu0 %v3005
  %3222 = vmatprep.subr.bf16.mxu0 %v3014
  %3223 = vmatpush1.bf16.msra.mxu0 %v3013
  %3224 = vmatprep.subr.bf16.mxu0 %v3022
  %3225 = vmatpush1.bf16.msra.mxu0 %v3021
  %3226 = vmatprep.subr.bf16.mxu0 %v3030
  %3227 = vmatpush1.bf16.msra.mxu0 %v3029
  %3228 = vmatprep.subr.bf16.mxu0 %v3038
  %3229 = vmatpush1.bf16.msra.mxu0 %v3037
  %3230 = vmatprep.subr.bf16.mxu0 %v3046
  %3231 = vmatpush1.bf16.msra.mxu0 %v3045
  %3232 = vmatprep.subr.bf16.mxu0 %v3054
  %3233 = vmatpush1.bf16.msra.mxu0 %v3053
  %3234 = vmatprep.subr.bf16.mxu0 %v3062
  %3235 = vmatpush1.bf16.msra.mxu0 %v3061
  %3236 = vmatprep.subr.bf16.mxu0 %v3070
  %3237 = vmatpush1.bf16.msra.mxu0 %v3069
  %3238 = vmatprep.subr.bf16.mxu0 %v3078
  %3239 = vmatpush1.bf16.msra.mxu0 %v3077
  %3240 = vmatprep.mubr.bf16.mxu0 %v2316
  %3241 = vmatmul.mubr.bf16.gmra.mrb[0].mxu0 %v2315
  %v3242 = vpop.f32.mrb[0].mxu0
  %v3243 = vadd.f32 %v3202, %v3242
  %v3244 = vpop.f32.mrb[0].mxu0
  %v3245 = vadd.f32 %v3204, %v3244
  %v3246 = vpop.f32.mrb[0].mxu0
  %v3247 = vpop.f32.mrb[0].mxu0
  %3248 = vdwg.mxu0
  %3249 = vmatprep.subr.bf16.mxu0 %v2576
  %3250 = vmatpush1.bf16.msra.mxu0 %v2575
  %3251 = vmatprep.subr.bf16.mxu0 %v2584
  %3252 = vmatpush1.bf16.msra.mxu0 %v2583
  %3253 = vmatprep.subr.bf16.mxu0 %v2592
  %3254 = vmatpush1.bf16.msra.mxu0 %v2591
  %3255 = vmatprep.subr.bf16.mxu0 %v2600
  %3256 = vmatpush1.bf16.msra.mxu0 %v2599
  %3257 = vmatprep.subr.bf16.mxu0 %v2608
  %3258 = vmatpush1.bf16.msra.mxu0 %v2607
  %3259 = vmatprep.subr.bf16.mxu0 %v2616
  %3260 = vmatpush1.bf16.msra.mxu0 %v2615
  %3261 = vmatprep.subr.bf16.mxu0 %v2624
  %3262 = vmatpush1.bf16.msra.mxu0 %v2623
  %3263 = vmatprep.subr.bf16.mxu0 %v2632
  %3264 = vmatpush1.bf16.msra.mxu0 %v2631
  %3265 = vmatprep.subr.bf16.mxu0 %v2640
  %3266 = vmatpush1.bf16.msra.mxu0 %v2639
  %3267 = vmatprep.subr.bf16.mxu0 %v2648
  %3268 = vmatpush1.bf16.msra.mxu0 %v2647
  %3269 = vmatprep.subr.bf16.mxu0 %v2656
  %3270 = vmatpush1.bf16.msra.mxu0 %v2655
  %3271 = vmatprep.subr.bf16.mxu0 %v2664
  %3272 = vmatpush1.bf16.msra.mxu0 %v2663
  %3273 = vmatprep.subr.bf16.mxu0 %v2672
  %3274 = vmatpush1.bf16.msra.mxu0 %v2671
  %3275 = vmatprep.subr.bf16.mxu0 %v2680
  %3276 = vmatpush1.bf16.msra.mxu0 %v2679
  %3277 = vmatprep.subr.bf16.mxu0 %v2688
  %3278 = vmatpush1.bf16.msra.mxu0 %v2687
  %3279 = vmatprep.subr.bf16.mxu0 %v2696
  %3280 = vmatpush1.bf16.msra.mxu0 %v2695
  %3281 = vmatprep.mubr.bf16.mxu0 %v2310
  %3282 = vmatmul.mubr.bf16.gmra.mrb[0].mxu0 %v2309
  %v3283 = vpop.f32.mrb[0].mxu0
  %v3284 = vadd.f32 0.0, %v3283
  %v3285 = vpop.f32.mrb[0].mxu0
  %v3286 = vadd.f32 0.0, %v3285
  %v3287 = vpop.f32.mrb[0].mxu0
  %v3288 = vpop.f32.mrb[0].mxu0
  %3289 = vdwg.mxu0
  %3290 = vmatprep.subr.bf16.mxu0 %v2704
  %3291 = vmatpush1.bf16.msra.mxu0 %v2703
  %3292 = vmatprep.subr.bf16.mxu0 %v2712
  %3293 = vmatpush1.bf16.msra.mxu0 %v2711
  %3294 = vmatprep.subr.bf16.mxu0 %v2720
  %3295 = vmatpush1.bf16.msra.mxu0 %v2719
  %3296 = vmatprep.subr.bf16.mxu0 %v2728
  %3297 = vmatpush1.bf16.msra.mxu0 %v2727
  %3298 = vmatprep.subr.bf16.mxu0 %v2736
  %3299 = vmatpush1.bf16.msra.mxu0 %v2735
  %3300 = vmatprep.subr.bf16.mxu0 %v2744
  %3301 = vmatpush1.bf16.msra.mxu0 %v2743
  %3302 = vmatprep.subr.bf16.mxu0 %v2752
  %3303 = vmatpush1.bf16.msra.mxu0 %v2751
  %3304 = vmatprep.subr.bf16.mxu0 %v2760
  %3305 = vmatpush1.bf16.msra.mxu0 %v2759
  %3306 = vmatprep.subr.bf16.mxu0 %v2768
  %3307 = vmatpush1.bf16.msra.mxu0 %v2767
  %3308 = vmatprep.subr.bf16.mxu0 %v2776
  %3309 = vmatpush1.bf16.msra.mxu0 %v2775
  %3310 = vmatprep.subr.bf16.mxu0 %v2784
  %3311 = vmatpush1.bf16.msra.mxu0 %v2783
  %3312 = vmatprep.subr.bf16.mxu0 %v2792
  %3313 = vmatpush1.bf16.msra.mxu0 %v2791
  %3314 = vmatprep.subr.bf16.mxu0 %v2800
  %3315 = vmatpush1.bf16.msra.mxu0 %v2799
  %3316 = vmatprep.subr.bf16.mxu0 %v2808
  %3317 = vmatpush1.bf16.msra.mxu0 %v2807
  %3318 = vmatprep.subr.bf16.mxu0 %v2816
  %3319 = vmatpush1.bf16.msra.mxu0 %v2815
  %3320 = vmatprep.subr.bf16.mxu0 %v2824
  %3321 = vmatpush1.bf16.msra.mxu0 %v2823
  %3322 = vmatprep.mubr.bf16.mxu0 %v2312
  %3323 = vmatmul.mubr.bf16.gmra.mrb[0].mxu0 %v2311
  %v3324 = vpop.f32.mrb[0].mxu0
  %v3325 = vadd.f32 %v3284, %v3324
  %v3326 = vpop.f32.mrb[0].mxu0
  %v3327 = vadd.f32 %v3286, %v3326
  %v3328 = vpop.f32.mrb[0].mxu0
  %v3329 = vpop.f32.mrb[0].mxu0
  %3330 = vdwg.mxu0
  %3331 = vmatprep.subr.bf16.mxu0 %v2832
  %3332 = vmatpush1.bf16.msra.mxu0 %v2831
  %3333 = vmatprep.subr.bf16.mxu0 %v2840
  %3334 = vmatpush1.bf16.msra.mxu0 %v2839
  %3335 = vmatprep.subr.bf16.mxu0 %v2848
  %3336 = vmatpush1.bf16.msra.mxu0 %v2847
  %3337 = vmatprep.subr.bf16.mxu0 %v2856
  %3338 = vmatpush1.bf16.msra.mxu0 %v2855
  %3339 = vmatprep.subr.bf16.mxu0 %v2864
  %3340 = vmatpush1.bf16.msra.mxu0 %v2863
  %3341 = vmatprep.subr.bf16.mxu0 %v2872
  %3342 = vmatpush1.bf16.msra.mxu0 %v2871
  %3343 = vmatprep.subr.bf16.mxu0 %v2880
  %3344 = vmatpush1.bf16.msra.mxu0 %v2879
  %3345 = vmatprep.subr.bf16.mxu0 %v2888
  %3346 = vmatpush1.bf16.msra.mxu0 %v2887
  %3347 = vmatprep.subr.bf16.mxu0 %v2896
  %3348 = vmatpush1.bf16.msra.mxu0 %v2895
  %3349 = vmatprep.subr.bf16.mxu0 %v2904
  %3350 = vmatpush1.bf16.msra.mxu0 %v2903
  %3351 = vmatprep.subr.bf16.mxu0 %v2912
  %3352 = vmatpush1.bf16.msra.mxu0 %v2911
  %3353 = vmatprep.subr.bf16.mxu0 %v2920
  %3354 = vmatpush1.bf16.msra.mxu0 %v2919
  %3355 = vmatprep.subr.bf16.mxu0 %v2928
  %3356 = vmatpush1.bf16.msra.mxu0 %v2927
  %3357 = vmatprep.subr.bf16.mxu0 %v2936
  %3358 = vmatpush1.bf16.msra.mxu0 %v2935
  %3359 = vmatprep.subr.bf16.mxu0 %v2944
  %3360 = vmatpush1.bf16.msra.mxu0 %v2943
  %3361 = vmatprep.subr.bf16.mxu0 %v2952
  %3362 = vmatpush1.bf16.msra.mxu0 %v2951
  %3363 = vmatprep.mubr.bf16.mxu0 %v2314
  %3364 = vmatmul.mubr.bf16.gmra.mrb[0].mxu0 %v2313
  %v3365 = vpop.f32.mrb[0].mxu0
  %v3366 = vadd.f32 %v3325, %v3365
  %v3367 = vpop.f32.mrb[0].mxu0
  %v3368 = vadd.f32 %v3327, %v3367
  %v3369 = vpop.f32.mrb[0].mxu0
  %v3370 = vpop.f32.mrb[0].mxu0
  %3371 = vdwg.mxu0
  %3372 = vmatprep.subr.bf16.mxu0 %v2960
  %3373 = vmatpush1.bf16.msra.mxu0 %v2959
  %3374 = vmatprep.subr.bf16.mxu0 %v2968
  %3375 = vmatpush1.bf16.msra.mxu0 %v2967
  %3376 = vmatprep.subr.bf16.mxu0 %v2976
  %3377 = vmatpush1.bf16.msra.mxu0 %v2975
  %3378 = vmatprep.subr.bf16.mxu0 %v2984
  %3379 = vmatpush1.bf16.msra.mxu0 %v2983
  %3380 = vmatprep.subr.bf16.mxu0 %v2992
  %3381 = vmatpush1.bf16.msra.mxu0 %v2991
  %3382 = vmatprep.subr.bf16.mxu0 %v3000
  %3383 = vmatpush1.bf16.msra.mxu0 %v2999
  %3384 = vmatprep.subr.bf16.mxu0 %v3008
  %3385 = vmatpush1.bf16.msra.mxu0 %v3007
  %3386 = vmatprep.subr.bf16.mxu0 %v3016
  %3387 = vmatpush1.bf16.msra.mxu0 %v3015
  %3388 = vmatprep.subr.bf16.mxu0 %v3024
  %3389 = vmatpush1.bf16.msra.mxu0 %v3023
  %3390 = vmatprep.subr.bf16.mxu0 %v3032
  %3391 = vmatpush1.bf16.msra.mxu0 %v3031
  %3392 = vmatprep.subr.bf16.mxu0 %v3040
  %3393 = vmatpush1.bf16.msra.mxu0 %v3039
  %3394 = vmatprep.subr.bf16.mxu0 %v3048
  %3395 = vmatpush1.bf16.msra.mxu0 %v3047
  %3396 = vmatprep.subr.bf16.mxu0 %v3056
  %3397 = vmatpush1.bf16.msra.mxu0 %v3055
  %3398 = vmatprep.subr.bf16.mxu0 %v3064
  %3399 = vmatpush1.bf16.msra.mxu0 %v3063
  %3400 = vmatprep.subr.bf16.mxu0 %v3072
  %3401 = vmatpush1.bf16.msra.mxu0 %v3071
  %3402 = vmatprep.subr.bf16.mxu0 %v3080
  %3403 = vmatpush1.bf16.msra.mxu0 %v3079
  %3404 = vmatprep.mubr.bf16.mxu0 %v2316
  %3405 = vmatmul.mubr.bf16.gmra.mrb[0].mxu0 %v2315
  %v3406 = vpop.f32.mrb[0].mxu0
  %v3407 = vadd.f32 %v3366, %v3406
  %v3408 = vpop.f32.mrb[0].mxu0
  %v3409 = vadd.f32 %v3368, %v3408
  %v3410 = vpop.f32.mrb[0].mxu0
  %v3411 = vpop.f32.mrb[0].mxu0
  %3412 = vdwg.mxu0
  %3413 = vmatprep.subr.bf16.mxu0 %v2578
  %3414 = vmatpush1.bf16.msra.mxu0 %v2577
  %3415 = vmatprep.subr.bf16.mxu0 %v2586
  %3416 = vmatpush1.bf16.msra.mxu0 %v2585
  %3417 = vmatprep.subr.bf16.mxu0 %v2594
  %3418 = vmatpush1.bf16.msra.mxu0 %v2593
  %3419 = vmatprep.subr.bf16.mxu0 %v2602
  %3420 = vmatpush1.bf16.msra.mxu0 %v2601
  %3421 = vmatprep.subr.bf16.mxu0 %v2610
  %3422 = vmatpush1.bf16.msra.mxu0 %v2609
  %3423 = vmatprep.subr.bf16.mxu0 %v2618
  %3424 = vmatpush1.bf16.msra.mxu0 %v2617
  %3425 = vmatprep.subr.bf16.mxu0 %v2626
  %3426 = vmatpush1.bf16.msra.mxu0 %v2625
  %3427 = vmatprep.subr.bf16.mxu0 %v2634
  %3428 = vmatpush1.bf16.msra.mxu0 %v2633
  %3429 = vmatprep.subr.bf16.mxu0 %v2642
  %3430 = vmatpush1.bf16.msra.mxu0 %v2641
  %3431 = vmatprep.subr.bf16.mxu0 %v2650
  %3432 = vmatpush1.bf16.msra.mxu0 %v2649
  %3433 = vmatprep.subr.bf16.mxu0 %v2658
  %3434 = vmatpush1.bf16.msra.mxu0 %v2657
  %3435 = vmatprep.subr.bf16.mxu0 %v2666
  %3436 = vmatpush1.bf16.msra.mxu0 %v2665
  %3437 = vmatprep.subr.bf16.mxu0 %v2674
  %3438 = vmatpush1.bf16.msra.mxu0 %v2673
  %3439 = vmatprep.subr.bf16.mxu0 %v2682
  %3440 = vmatpush1.bf16.msra.mxu0 %v2681
  %3441 = vmatprep.subr.bf16.mxu0 %v2690
  %3442 = vmatpush1.bf16.msra.mxu0 %v2689
  %3443 = vmatprep.subr.bf16.mxu0 %v2698
  %3444 = vmatpush1.bf16.msra.mxu0 %v2697
  %3445 = vmatprep.mubr.bf16.mxu0 %v2310
  %3446 = vmatmul.mubr.bf16.gmra.mrb[0].mxu0 %v2309
  %v3447 = vpop.f32.mrb[0].mxu0
  %v3448 = vadd.f32 0.0, %v3447
  %v3449 = vpop.f32.mrb[0].mxu0
  %v3450 = vadd.f32 0.0, %v3449
  %v3451 = vpop.f32.mrb[0].mxu0
  %v3452 = vpop.f32.mrb[0].mxu0
  %3453 = vdwg.mxu0
  %3454 = vmatprep.subr.bf16.mxu0 %v2706
  %3455 = vmatpush1.bf16.msra.mxu0 %v2705
  %3456 = vmatprep.subr.bf16.mxu0 %v2714
  %3457 = vmatpush1.bf16.msra.mxu0 %v2713
  %3458 = vmatprep.subr.bf16.mxu0 %v2722
  %3459 = vmatpush1.bf16.msra.mxu0 %v2721
  %3460 = vmatprep.subr.bf16.mxu0 %v2730
  %3461 = vmatpush1.bf16.msra.mxu0 %v2729
  %3462 = vmatprep.subr.bf16.mxu0 %v2738
  %3463 = vmatpush1.bf16.msra.mxu0 %v2737
  %3464 = vmatprep.subr.bf16.mxu0 %v2746
  %3465 = vmatpush1.bf16.msra.mxu0 %v2745
  %3466 = vmatprep.subr.bf16.mxu0 %v2754
  %3467 = vmatpush1.bf16.msra.mxu0 %v2753
  %3468 = vmatprep.subr.bf16.mxu0 %v2762
  %3469 = vmatpush1.bf16.msra.mxu0 %v2761
  %3470 = vmatprep.subr.bf16.mxu0 %v2770
  %3471 = vmatpush1.bf16.msra.mxu0 %v2769
  %3472 = vmatprep.subr.bf16.mxu0 %v2778
  %3473 = vmatpush1.bf16.msra.mxu0 %v2777
  %3474 = vmatprep.subr.bf16.mxu0 %v2786
  %3475 = vmatpush1.bf16.msra.mxu0 %v2785
  %3476 = vmatprep.subr.bf16.mxu0 %v2794
  %3477 = vmatpush1.bf16.msra.mxu0 %v2793
  %3478 = vmatprep.subr.bf16.mxu0 %v2802
  %3479 = vmatpush1.bf16.msra.mxu0 %v2801
  %3480 = vmatprep.subr.bf16.mxu0 %v2810
  %3481 = vmatpush1.bf16.msra.mxu0 %v2809
  %3482 = vmatprep.subr.bf16.mxu0 %v2818
  %3483 = vmatpush1.bf16.msra.mxu0 %v2817
  %3484 = vmatprep.subr.bf16.mxu0 %v2826
  %3485 = vmatpush1.bf16.msra.mxu0 %v2825
  %3486 = vmatprep.mubr.bf16.mxu0 %v2312
  %3487 = vmatmul.mubr.bf16.gmra.mrb[0].mxu0 %v2311
  %v3488 = vpop.f32.mrb[0].mxu0
  %v3489 = vadd.f32 %v3448, %v3488
  %v3490 = vpop.f32.mrb[0].mxu0
  %v3491 = vadd.f32 %v3450, %v3490
  %v3492 = vpop.f32.mrb[0].mxu0
  %v3493 = vpop.f32.mrb[0].mxu0
  %3494 = vdwg.mxu0
  %3495 = vmatprep.subr.bf16.mxu0 %v2834
  %3496 = vmatpush1.bf16.msra.mxu0 %v2833
  %3497 = vmatprep.subr.bf16.mxu0 %v2842
  %3498 = vmatpush1.bf16.msra.mxu0 %v2841
  %3499 = vmatprep.subr.bf16.mxu0 %v2850
  %3500 = vmatpush1.bf16.msra.mxu0 %v2849
  %3501 = vmatprep.subr.bf16.mxu0 %v2858
  %3502 = vmatpush1.bf16.msra.mxu0 %v2857
  %3503 = vmatprep.subr.bf16.mxu0 %v2866
  %3504 = vmatpush1.bf16.msra.mxu0 %v2865
  %3505 = vmatprep.subr.bf16.mxu0 %v2874
  %3506 = vmatpush1.bf16.msra.mxu0 %v2873
  %3507 = vmatprep.subr.bf16.mxu0 %v2882
  %3508 = vmatpush1.bf16.msra.mxu0 %v2881
  %3509 = vmatprep.subr.bf16.mxu0 %v2890
  %3510 = vmatpush1.bf16.msra.mxu0 %v2889
  %3511 = vmatprep.subr.bf16.mxu0 %v2898
  %3512 = vmatpush1.bf16.msra.mxu0 %v2897
  %3513 = vmatprep.subr.bf16.mxu0 %v2906
  %3514 = vmatpush1.bf16.msra.mxu0 %v2905
  %3515 = vmatprep.subr.bf16.mxu0 %v2914
  %3516 = vmatpush1.bf16.msra.mxu0 %v2913
  %3517 = vmatprep.subr.bf16.mxu0 %v2922
  %3518 = vmatpush1.bf16.msra.mxu0 %v2921
  %3519 = vmatprep.subr.bf16.mxu0 %v2930
  %3520 = vmatpush1.bf16.msra.mxu0 %v2929
  %3521 = vmatprep.subr.bf16.mxu0 %v2938
  %3522 = vmatpush1.bf16.msra.mxu0 %v2937
  %3523 = vmatprep.subr.bf16.mxu0 %v2946
  %3524 = vmatpush1.bf16.msra.mxu0 %v2945
  %3525 = vmatprep.subr.bf16.mxu0 %v2954
  %3526 = vmatpush1.bf16.msra.mxu0 %v2953
  %3527 = vmatprep.mubr.bf16.mxu0 %v2314
  %3528 = vmatmul.mubr.bf16.gmra.mrb[0].mxu0 %v2313
  %v3529 = vpop.f32.mrb[0].mxu0
  %v3530 = vadd.f32 %v3489, %v3529
  %v3531 = vpop.f32.mrb[0].mxu0
  %v3532 = vadd.f32 %v3491, %v3531
  %v3533 = vpop.f32.mrb[0].mxu0
  %v3534 = vpop.f32.mrb[0].mxu0
  %3535 = vdwg.mxu0
  %3536 = vmatprep.subr.bf16.mxu0 %v2962
  %3537 = vmatpush1.bf16.msra.mxu0 %v2961
  %3538 = vmatprep.subr.bf16.mxu0 %v2970
  %3539 = vmatpush1.bf16.msra.mxu0 %v2969
  %3540 = vmatprep.subr.bf16.mxu0 %v2978
  %3541 = vmatpush1.bf16.msra.mxu0 %v2977
  %3542 = vmatprep.subr.bf16.mxu0 %v2986
  %3543 = vmatpush1.bf16.msra.mxu0 %v2985
  %3544 = vmatprep.subr.bf16.mxu0 %v2994
  %3545 = vmatpush1.bf16.msra.mxu0 %v2993
  %3546 = vmatprep.subr.bf16.mxu0 %v3002
  %3547 = vmatpush1.bf16.msra.mxu0 %v3001
  %3548 = vmatprep.subr.bf16.mxu0 %v3010
  %3549 = vmatpush1.bf16.msra.mxu0 %v3009
  %3550 = vmatprep.subr.bf16.mxu0 %v3018
  %3551 = vmatpush1.bf16.msra.mxu0 %v3017
  %3552 = vmatprep.subr.bf16.mxu0 %v3026
  %3553 = vmatpush1.bf16.msra.mxu0 %v3025
  %3554 = vmatprep.subr.bf16.mxu0 %v3034
  %3555 = vmatpush1.bf16.msra.mxu0 %v3033
  %3556 = vmatprep.subr.bf16.mxu0 %v3042
  %3557 = vmatpush1.bf16.msra.mxu0 %v3041
  %3558 = vmatprep.subr.bf16.mxu0 %v3050
  %3559 = vmatpush1.bf16.msra.mxu0 %v3049
  %3560 = vmatprep.subr.bf16.mxu0 %v3058
  %3561 = vmatpush1.bf16.msra.mxu0 %v3057
  %3562 = vmatprep.subr.bf16.mxu0 %v3066
  %3563 = vmatpush1.bf16.msra.mxu0 %v3065
  %3564 = vmatprep.subr.bf16.mxu0 %v3074
  %3565 = vmatpush1.bf16.msra.mxu0 %v3073
  %3566 = vmatprep.subr.bf16.mxu0 %v3082
  %3567 = vmatpush1.bf16.msra.mxu0 %v3081
  %3568 = vmatprep.mubr.bf16.mxu0 %v2316
  %3569 = vmatmul.mubr.bf16.gmra.mrb[0].mxu0 %v2315
  %v3570 = vpop.f32.mrb[0].mxu0
  %v3571 = vadd.f32 %v3530, %v3570
  %v3572 = vpop.f32.mrb[0].mxu0
  %v3573 = vadd.f32 %v3532, %v3572
  %v3574 = vpop.f32.mrb[0].mxu0
  %v3575 = vpop.f32.mrb[0].mxu0
  %3576 = vdwg.mxu0
  %3577 = vmatprep.subr.bf16.mxu0 %v2580
  %3578 = vmatpush1.bf16.msra.mxu0 %v2579
  %3579 = vmatprep.subr.bf16.mxu0 %v2588
  %3580 = vmatpush1.bf16.msra.mxu0 %v2587
  %3581 = vmatprep.subr.bf16.mxu0 %v2596
  %3582 = vmatpush1.bf16.msra.mxu0 %v2595
  %3583 = vmatprep.subr.bf16.mxu0 %v2604
  %3584 = vmatpush1.bf16.msra.mxu0 %v2603
  %3585 = vmatprep.subr.bf16.mxu0 %v2612
  %3586 = vmatpush1.bf16.msra.mxu0 %v2611
  %3587 = vmatprep.subr.bf16.mxu0 %v2620
  %3588 = vmatpush1.bf16.msra.mxu0 %v2619
  %3589 = vmatprep.subr.bf16.mxu0 %v2628
  %3590 = vmatpush1.bf16.msra.mxu0 %v2627
  %3591 = vmatprep.subr.bf16.mxu0 %v2636
  %3592 = vmatpush1.bf16.msra.mxu0 %v2635
  %3593 = vmatprep.subr.bf16.mxu0 %v2644
  %3594 = vmatpush1.bf16.msra.mxu0 %v2643
  %3595 = vmatprep.subr.bf16.mxu0 %v2652
  %3596 = vmatpush1.bf16.msra.mxu0 %v2651
  %3597 = vmatprep.subr.bf16.mxu0 %v2660
  %3598 = vmatpush1.bf16.msra.mxu0 %v2659
  %3599 = vmatprep.subr.bf16.mxu0 %v2668
  %3600 = vmatpush1.bf16.msra.mxu0 %v2667
  %3601 = vmatprep.subr.bf16.mxu0 %v2676
  %3602 = vmatpush1.bf16.msra.mxu0 %v2675
  %3603 = vmatprep.subr.bf16.mxu0 %v2684
  %3604 = vmatpush1.bf16.msra.mxu0 %v2683
  %3605 = vmatprep.subr.bf16.mxu0 %v2692
  %3606 = vmatpush1.bf16.msra.mxu0 %v2691
  %3607 = vmatprep.subr.bf16.mxu0 %v2700
  %3608 = vmatpush1.bf16.msra.mxu0 %v2699
  %3609 = vmatprep.mubr.bf16.mxu0 %v2310
  %3610 = vmatmul.mubr.bf16.gmra.mrb[0].mxu0 %v2309
  %v3611 = vpop.f32.mrb[0].mxu0
  %v3612 = vadd.f32 0.0, %v3611
  %v3613 = vpop.f32.mrb[0].mxu0
  %v3614 = vadd.f32 0.0, %v3613
  %v3615 = vpop.f32.mrb[0].mxu0
  %v3616 = vpop.f32.mrb[0].mxu0
  %3617 = vdwg.mxu0
  %3618 = vmatprep.subr.bf16.mxu0 %v2708
  %3619 = vmatpush1.bf16.msra.mxu0 %v2707
  %3620 = vmatprep.subr.bf16.mxu0 %v2716
  %3621 = vmatpush1.bf16.msra.mxu0 %v2715
  %3622 = vmatprep.subr.bf16.mxu0 %v2724
  %3623 = vmatpush1.bf16.msra.mxu0 %v2723
  %3624 = vmatprep.subr.bf16.mxu0 %v2732
  %3625 = vmatpush1.bf16.msra.mxu0 %v2731
  %3626 = vmatprep.subr.bf16.mxu0 %v2740
  %3627 = vmatpush1.bf16.msra.mxu0 %v2739
  %3628 = vmatprep.subr.bf16.mxu0 %v2748
  %3629 = vmatpush1.bf16.msra.mxu0 %v2747
  %3630 = vmatprep.subr.bf16.mxu0 %v2756
  %3631 = vmatpush1.bf16.msra.mxu0 %v2755
  %3632 = vmatprep.subr.bf16.mxu0 %v2764
  %3633 = vmatpush1.bf16.msra.mxu0 %v2763
  %3634 = vmatprep.subr.bf16.mxu0 %v2772
  %3635 = vmatpush1.bf16.msra.mxu0 %v2771
  %3636 = vmatprep.subr.bf16.mxu0 %v2780
  %3637 = vmatpush1.bf16.msra.mxu0 %v2779
  %3638 = vmatprep.subr.bf16.mxu0 %v2788
  %3639 = vmatpush1.bf16.msra.mxu0 %v2787
  %3640 = vmatprep.subr.bf16.mxu0 %v2796
  %3641 = vmatpush1.bf16.msra.mxu0 %v2795
  %3642 = vmatprep.subr.bf16.mxu0 %v2804
  %3643 = vmatpush1.bf16.msra.mxu0 %v2803
  %3644 = vmatprep.subr.bf16.mxu0 %v2812
  %3645 = vmatpush1.bf16.msra.mxu0 %v2811
  %3646 = vmatprep.subr.bf16.mxu0 %v2820
  %3647 = vmatpush1.bf16.msra.mxu0 %v2819
  %3648 = vmatprep.subr.bf16.mxu0 %v2828
  %3649 = vmatpush1.bf16.msra.mxu0 %v2827
  %3650 = vmatprep.mubr.bf16.mxu0 %v2312
  %3651 = vmatmul.mubr.bf16.gmra.mrb[0].mxu0 %v2311
  %v3652 = vpop.f32.mrb[0].mxu0
  %v3653 = vadd.f32 %v3612, %v3652
  %v3654 = vpop.f32.mrb[0].mxu0
  %v3655 = vadd.f32 %v3614, %v3654
  %v3656 = vpop.f32.mrb[0].mxu0
  %v3657 = vpop.f32.mrb[0].mxu0
  %3658 = vdwg.mxu0
  %3659 = vmatprep.subr.bf16.mxu0 %v2836
  %3660 = vmatpush1.bf16.msra.mxu0 %v2835
  %3661 = vmatprep.subr.bf16.mxu0 %v2844
  %3662 = vmatpush1.bf16.msra.mxu0 %v2843
  %3663 = vmatprep.subr.bf16.mxu0 %v2852
  %3664 = vmatpush1.bf16.msra.mxu0 %v2851
  %3665 = vmatprep.subr.bf16.mxu0 %v2860
  %3666 = vmatpush1.bf16.msra.mxu0 %v2859
  %3667 = vmatprep.subr.bf16.mxu0 %v2868
  %3668 = vmatpush1.bf16.msra.mxu0 %v2867
  %3669 = vmatprep.subr.bf16.mxu0 %v2876
  %3670 = vmatpush1.bf16.msra.mxu0 %v2875
  %3671 = vmatprep.subr.bf16.mxu0 %v2884
  %3672 = vmatpush1.bf16.msra.mxu0 %v2883
  %3673 = vmatprep.subr.bf16.mxu0 %v2892
  %3674 = vmatpush1.bf16.msra.mxu0 %v2891
  %3675 = vmatprep.subr.bf16.mxu0 %v2900
  %3676 = vmatpush1.bf16.msra.mxu0 %v2899
  %3677 = vmatprep.subr.bf16.mxu0 %v2908
  %3678 = vmatpush1.bf16.msra.mxu0 %v2907
  %3679 = vmatprep.subr.bf16.mxu0 %v2916
  %3680 = vmatpush1.bf16.msra.mxu0 %v2915
  %3681 = vmatprep.subr.bf16.mxu0 %v2924
  %3682 = vmatpush1.bf16.msra.mxu0 %v2923
  %3683 = vmatprep.subr.bf16.mxu0 %v2932
  %3684 = vmatpush1.bf16.msra.mxu0 %v2931
  %3685 = vmatprep.subr.bf16.mxu0 %v2940
  %3686 = vmatpush1.bf16.msra.mxu0 %v2939
  %3687 = vmatprep.subr.bf16.mxu0 %v2948
  %3688 = vmatpush1.bf16.msra.mxu0 %v2947
  %3689 = vmatprep.subr.bf16.mxu0 %v2956
  %3690 = vmatpush1.bf16.msra.mxu0 %v2955
  %3691 = vmatprep.mubr.bf16.mxu0 %v2314
  %3692 = vmatmul.mubr.bf16.gmra.mrb[0].mxu0 %v2313
  %v3693 = vpop.f32.mrb[0].mxu0
  %v3694 = vadd.f32 %v3653, %v3693
  %v3695 = vpop.f32.mrb[0].mxu0
  %v3696 = vadd.f32 %v3655, %v3695
  %v3697 = vpop.f32.mrb[0].mxu0
  %v3698 = vpop.f32.mrb[0].mxu0
  %3699 = vdwg.mxu0
  %3700 = vmatprep.subr.bf16.mxu0 %v2964
  %3701 = vmatpush1.bf16.msra.mxu0 %v2963
  %3702 = vmatprep.subr.bf16.mxu0 %v2972
  %3703 = vmatpush1.bf16.msra.mxu0 %v2971
  %3704 = vmatprep.subr.bf16.mxu0 %v2980
  %3705 = vmatpush1.bf16.msra.mxu0 %v2979
  %3706 = vmatprep.subr.bf16.mxu0 %v2988
  %3707 = vmatpush1.bf16.msra.mxu0 %v2987
  %3708 = vmatprep.subr.bf16.mxu0 %v2996
  %3709 = vmatpush1.bf16.msra.mxu0 %v2995
  %3710 = vmatprep.subr.bf16.mxu0 %v3004
  %3711 = vmatpush1.bf16.msra.mxu0 %v3003
  %3712 = vmatprep.subr.bf16.mxu0 %v3012
  %3713 = vmatpush1.bf16.msra.mxu0 %v3011
  %3714 = vmatprep.subr.bf16.mxu0 %v3020
  %3715 = vmatpush1.bf16.msra.mxu0 %v3019
  %3716 = vmatprep.subr.bf16.mxu0 %v3028
  %3717 = vmatpush1.bf16.msra.mxu0 %v3027
  %3718 = vmatprep.subr.bf16.mxu0 %v3036
  %3719 = vmatpush1.bf16.msra.mxu0 %v3035
  %3720 = vmatprep.subr.bf16.mxu0 %v3044
  %3721 = vmatpush1.bf16.msra.mxu0 %v3043
  %3722 = vmatprep.subr.bf16.mxu0 %v3052
  %3723 = vmatpush1.bf16.msra.mxu0 %v3051
  %3724 = vmatprep.subr.bf16.mxu0 %v3060
  %3725 = vmatpush1.bf16.msra.mxu0 %v3059
  %3726 = vmatprep.subr.bf16.mxu0 %v3068
  %3727 = vmatpush1.bf16.msra.mxu0 %v3067
  %3728 = vmatprep.subr.bf16.mxu0 %v3076
  %3729 = vmatpush1.bf16.msra.mxu0 %v3075
  %3730 = vmatprep.subr.bf16.mxu0 %v3084
  %3731 = vmatpush1.bf16.msra.mxu0 %v3083
  %3732 = vmatprep.mubr.bf16.mxu0 %v2316
  %3733 = vmatmul.mubr.bf16.gmra.mrb[0].mxu0 %v2315
  %v3734 = vpop.f32.mrb[0].mxu0
  %v3735 = vadd.f32 %v3694, %v3734
  %v3736 = vpop.f32.mrb[0].mxu0
  %v3737 = vadd.f32 %v3696, %v3736
  %v3738 = vpop.f32.mrb[0].mxu0
  %v3739 = vpop.f32.mrb[0].mxu0
  %3740 = vdwg.mxu0
  %v3742 = vlaneseq
  %v3743 = vshrl.u32 %v3742, 7
  %v3744 = vsub.s32 0, %v3743
  %v3745 = vrot.slane %v767, %v3744
  %v3746 = vlaneseq
  %v3747 = vshrl.u32 %v3746, 7
  %v3748 = vsub.s32 1, %v3747
  %v3749 = vrot.slane %v767, %v3748
  %v3750 = vlaneseq
  %v3751 = vshrl.u32 %v3750, 7
  %v3752 = vsub.s32 2, %v3751
  %v3753 = vrot.slane %v767, %v3752
  %v3754 = vlaneseq
  %v3755 = vshrl.u32 %v3754, 7
  %v3756 = vsub.s32 3, %v3755
  %v3757 = vrot.slane %v767, %v3756
  %v3758 = vlaneseq
  %v3759 = vshrl.u32 %v3758, 7
  %v3760 = vsub.s32 4, %v3759
  %v3761 = vrot.slane %v767, %v3760
  %v3762 = vlaneseq
  %v3763 = vshrl.u32 %v3762, 7
  %v3764 = vsub.s32 5, %v3763
  %v3765 = vrot.slane %v767, %v3764
  %v3766 = vlaneseq
  %v3767 = vshrl.u32 %v3766, 7
  %v3768 = vsub.s32 6, %v3767
  %v3769 = vrot.slane %v767, %v3768
  %v3770 = vlaneseq
  %v3771 = vshrl.u32 %v3770, 7
  %v3772 = vsub.s32 7, %v3771
  %v3773 = vrot.slane %v767, %v3772
  %v3782 = vmul.f32 %v3243, %v3745
  %v3783 = vmul.f32 %v3245, %v3749
  %v3784 = vmul.f32 %v3407, %v3753
  %v3785 = vmul.f32 %v3409, %v3757
  %v3786 = vmul.f32 %v3571, %v3761
  %v3787 = vmul.f32 %v3573, %v3765
  %v3788 = vmul.f32 %v3735, %v3769
  %v3789 = vmul.f32 %v3737, %v3773
  %v3791 = vlaneseq
  %v3792 = vshrl.u32 %v3791, 7
  %v3793 = vsub.s32 0, %v3792
  %v3794 = vrot.slane %v755, %v3793
  %v3795 = vlaneseq
  %v3796 = vshrl.u32 %v3795, 7
  %v3797 = vsub.s32 1, %v3796
  %v3798 = vrot.slane %v755, %v3797
  %v3799 = vlaneseq
  %v3800 = vshrl.u32 %v3799, 7
  %v3801 = vsub.s32 2, %v3800
  %v3802 = vrot.slane %v755, %v3801
  %v3803 = vlaneseq
  %v3804 = vshrl.u32 %v3803, 7
  %v3805 = vsub.s32 3, %v3804
  %v3806 = vrot.slane %v755, %v3805
  %v3807 = vlaneseq
  %v3808 = vshrl.u32 %v3807, 7
  %v3809 = vsub.s32 4, %v3808
  %v3810 = vrot.slane %v755, %v3809
  %v3811 = vlaneseq
  %v3812 = vshrl.u32 %v3811, 7
  %v3813 = vsub.s32 5, %v3812
  %v3814 = vrot.slane %v755, %v3813
  %v3815 = vlaneseq
  %v3816 = vshrl.u32 %v3815, 7
  %v3817 = vsub.s32 6, %v3816
  %v3818 = vrot.slane %v755, %v3817
  %v3819 = vlaneseq
  %v3820 = vshrl.u32 %v3819, 7
  %v3821 = vsub.s32 7, %v3820
  %v3822 = vrot.slane %v755, %v3821
  %v3831 = vadd.f32 %v3782, %v3794
  %v3832 = vadd.f32 %v3783, %v3798
  %v3833 = vadd.f32 %v3784, %v3802
  %v3834 = vadd.f32 %v3785, %v3806
  %v3835 = vadd.f32 %v3786, %v3810
  %v3836 = vadd.f32 %v3787, %v3814
  %v3837 = vadd.f32 %v3788, %v3818
  %v3838 = vadd.f32 %v3789, %v3822
  %v3839 = vmax.f32 %v3831, 0.0
  %v3840 = vmax.f32 %v3832, 0.0
  %v3841 = vmax.f32 %v3833, 0.0
  %v3842 = vmax.f32 %v3834, 0.0
  %v3843 = vmax.f32 %v3835, 0.0
  %v3844 = vmax.f32 %v3836, 0.0
  %v3845 = vmax.f32 %v3837, 0.0
  %v3846 = vmax.f32 %v3838, 0.0
  %v3848 = vlaneseq
  %v3849 = vshrl.u32 %v3848, 7
  %v3850 = vsub.s32 0, %v3849
  %v3851 = vrot.slane %v759, %v3850
  %v3852 = vlaneseq
  %v3853 = vshrl.u32 %v3852, 7
  %v3854 = vsub.s32 1, %v3853
  %v3855 = vrot.slane %v759, %v3854
  %v3856 = vlaneseq
  %v3857 = vshrl.u32 %v3856, 7
  %v3858 = vsub.s32 2, %v3857
  %v3859 = vrot.slane %v759, %v3858
  %v3860 = vlaneseq
  %v3861 = vshrl.u32 %v3860, 7
  %v3862 = vsub.s32 3, %v3861
  %v3863 = vrot.slane %v759, %v3862
  %v3864 = vlaneseq
  %v3865 = vshrl.u32 %v3864, 7
  %v3866 = vsub.s32 4, %v3865
  %v3867 = vrot.slane %v759, %v3866
  %v3868 = vlaneseq
  %v3869 = vshrl.u32 %v3868, 7
  %v3870 = vsub.s32 5, %v3869
  %v3871 = vrot.slane %v759, %v3870
  %v3872 = vlaneseq
  %v3873 = vshrl.u32 %v3872, 7
  %v3874 = vsub.s32 6, %v3873
  %v3875 = vrot.slane %v759, %v3874
  %v3876 = vlaneseq
  %v3877 = vshrl.u32 %v3876, 7
  %v3878 = vsub.s32 7, %v3877
  %v3879 = vrot.slane %v759, %v3878
  %v3888 = vmul.f32 %v3839, %v3851
  %v3889 = vmul.f32 %v3840, %v3855
  %v3890 = vmul.f32 %v3841, %v3859
  %v3891 = vmul.f32 %v3842, %v3863
  %v3892 = vmul.f32 %v3843, %v3867
  %v3893 = vmul.f32 %v3844, %v3871
  %v3894 = vmul.f32 %v3845, %v3875
  %v3895 = vmul.f32 %v3846, %v3879
  %v3896 = vadd.f32 %v3888, %v3889
  %v3897 = vadd.f32 %v3896, %v3890
  %v3898 = vadd.f32 %v3897, %v3891
  %v3899 = vadd.f32 %v3898, %v3892
  %v3900 = vadd.f32 %v3899, %v3893
  %v3901 = vadd.f32 %v3900, %v3894
  %v3902 = vadd.f32 %v3901, %v3895
  %3903 = vadd.xlane.f32.xlu0 %v3902
  %v3904 = vpop.xlane.xlu0 %3903
  %v3905 = vadd.f32 %v3904, %v747
  %v3906 = vsub.f32 0.0, %v3905
  %v3907 = vmul.f32 %v3906, 1.442695
  %v3908 = vpow.pop %v3907
  %v3909 = vadd.f32 %v3908, 1.0
  %v3910 = vrcp.pop %v3909
  %3911 = vst [vmem:[%s7] sm:$0xff] 0.0
  %3912 = vst.msk [vmem:[%s7] sm:$0xff] %vm1825, %v1822
  %3914 = vrot.lane.b32.xlu0 %v1836, 8
  %v3915 = vpop.permute.xlu0 %3914
  %vm3917 = vcmask 130112
  %3918 = vst.msk [vmem:[%s7] sm:$0xff] %vm3917, %v3915
  %3920 = vrot.lane.b32.xlu0 %v3910, 8
  %v3921 = vpop.permute.xlu0 %3920
  %vm3923 = vcmask 138368
  %3924 = vst.msk [vmem:[%s7] sm:$0xff] %vm3923, %v3921
  // Predicated region
  $region90: #{totalnet_forward.1} parent=0 // pred_check
    _
  $region91: #{totalnet_forward.1} parent=0 // pred_check_branch
    %3926 = sbr.rel (0) target = $region93
  $region92: #{totalnet_forward.1} parent=0 // pred_region
    _
  $region93: #{totalnet_forward.1} parent=0 // pred_fallthru
    _
  // Predicated region
  $region94: #{totalnet_forward.1} parent=0 // pred_check
    _
  $region95: #{totalnet_forward.1} parent=0 // pred_check_branch
    %3928 = sbr.rel (0) target = $region97
  $region96: #{totalnet_forward.1} parent=0 // pred_region
    _
  $region97: #{totalnet_forward.1} parent=0 // pred_fallthru
    _
  %3929 = vsyncmov [#allocation4]
  %s3930 = vpop.sfrf %3929
  %p3931 = scmp.eq.s32.totalorder %s3930, 0
  %p3932 = pneg %p3931
  %3934 = shalt.err (%p3932)
  %s3935 = scalar_lea.sflag [#allocation4], 1
  %3936 = vsyncmov %s3935
  %s3937 = vpop.sfrf %3936
  %p3938 = scmp.eq.s32.totalorder %s3937, 0
  %p3939 = pneg %p3938
  %3941 = shalt.err (%p3939)

</llo_original>
